<compile_context>
chip_gen: v7x
topology: tpu7x:2x2x1
jax: 0.10.0
libtpu: 0.0.40
codegen_flags: <defaults>
</compile_context>

<pallas_src>
import functools

import jax
import jax.numpy as jnp
from jax.experimental import pallas as pl
from jax.experimental.pallas import tpu as pltpu

MATMUL_DTYPE = jnp.float32   # small-K FFN matmuls: keep f32 (not MXU-bound), exact parity.
AGGR_DTYPE = jnp.float32     # one-hot gather/scatter matmuls; set to jnp.bfloat16 for ~2x
                             # MXU on v6e/v7x (the 0/1 mask is exact in bf16; perturbs
                             # exact fp32 parity with the torch reference).
VMEM_LIMIT = 32 * 1024 * 1024   # half of v7x's 64 MiB physical VMEM; safe on v5e/v6e too.
LN_EPS = 1e-5                   # torch.nn.LayerNorm default

_ROW_PARAMS = pltpu.CompilerParams(dimension_semantics=("parallel",),
                                   vmem_limit_bytes=VMEM_LIMIT)
_RED_PARAMS = pltpu.CompilerParams(dimension_semantics=("arbitrary",),
                                   vmem_limit_bytes=VMEM_LIMIT)


# ----------------------------------------------------------------------------
# Shared in-kernel helpers
# ----------------------------------------------------------------------------
def _mm(x, w):
    return jnp.dot(x.astype(MATMUL_DTYPE), w.astype(MATMUL_DTYPE),
                   preferred_element_type=jnp.float32)


def _agg_mm(a, b):
    return jnp.dot(a.astype(AGGR_DTYPE), b.astype(AGGR_DTYPE),
                   preferred_element_type=jnp.float32)


def _layernorm(x, gamma, beta, eps=LN_EPS):
    mu = jnp.mean(x, axis=-1, keepdims=True)
    xc = x - mu
    var = jnp.mean(xc * xc, axis=-1, keepdims=True)
    return xc * jax.lax.rsqrt(var + eps) * gamma + beta


def _poly_cutoff(r, p):
    # nequip polynomial cutoff evaluated on r = x / r_max.
    pf = float(p)
    rp = r ** int(p)
    rp1 = rp * r
    rp2 = rp1 * r
    ud = (1.0 - ((pf + 1.0) * (pf + 2.0) / 2.0) * rp
          + pf * (pf + 2.0) * rp1
          - (pf * (pf + 1.0) / 2.0) * rp2)
    return jnp.where(r < 1.0, ud, 0.0)


def _ce(flops, bytes_accessed, transcendentals=0):
    return pl.CostEstimate(flops=int(flops), transcendentals=int(transcendentals),
                           bytes_accessed=int(bytes_accessed))


def _const(r, c):
    return pl.BlockSpec((r, c), lambda i: (0, 0))


def _row(tile, lanes):
    return pl.BlockSpec((tile, lanes), lambda i: (i, 0))


# ----------------------------------------------------------------------------
# Pallas kernels
# ----------------------------------------------------------------------------
def _node_radial_dual_kernel(attr_ref, len_ref, bw_ref,
                             rw1a_ref, rw1b_ref, rb1_ref, rw2_ref, rb2_ref,
                             g_ref, beta_ref,
                             sw1a_ref, sw1b_ref, sb1_ref, sw2_ref, sb2_ref,
                             rad_ref, sqrt_ref, *, rc, p):
    # Fused: bessel/cutoff -> (mlp_radial FFN -> LayerNorm) & (mlp_sqrt FFN) -> *ud.
    x = len_ref[...]                                       # (T, 1)
    r = x * (1.0 / rc)
    ud = _poly_cutoff(r, p)
    # TODO(synk): zero-length real edges divide by zero here, matching the torch
    # reference (pad rows use length 1.0).  nequip BesselBasis prefactor is 2/r_max.
    bes = ud * ((2.0 / rc) * jnp.sin(bw_ref[...] * r) / x)  # (T, nb)
    attr = attr_ref[...]
    h_r = jnp.tanh(_mm(attr, rw1a_ref[...]) + _mm(bes, rw1b_ref[...]) + rb1_ref[...])
    rad = _layernorm(_mm(h_r, rw2_ref[...]) + rb2_ref[...], g_ref[...], beta_ref[...])
    rad_ref[...] = rad * ud
    h_s = jnp.tanh(_mm(attr, sw1a_ref[...]) + _mm(bes, sw1b_ref[...]) + sb1_ref[...])
    sqrt_ref[...] = (_mm(h_s, sw2_ref[...]) + sb2_ref[...]) * ud


def _se2_aggr_kernel(idx_ref, sr_ref, vec_ref, len_ref, g_ref, b_ref, o_ref,
                     sx_ref, sy_ref, sz_ref, cnt_ref, *, n_nodes, s, a, rc, p):
    # Fused: message outer product (ud*vec)(x)sqrt_radial, tiled segment-mean over
    # edges, per-node Gram product, LayerNorm.
    e = pl.program_id(0)

    @pl.when(e == 0)
    def _():
        sx_ref[...] = jnp.zeros_like(sx_ref)
        sy_ref[...] = jnp.zeros_like(sy_ref)
        sz_ref[...] = jnp.zeros_like(sz_ref)
        cnt_ref[...] = jnp.zeros_like(cnt_ref)

    idx = idx_ref[...]                                        # (1, TE) int32, -1 = pad
    node_col = jax.lax.broadcasted_iota(jnp.int32, (n_nodes, 1), 0)
    mask = (node_col == idx).astype(jnp.float32)              # (N, TE) scatter one-hot

    ud = _poly_cutoff(len_ref[...] * (1.0 / rc), p)           # (TE, 1)
    sr = sr_ref[...]                                          # (TE, s)
    direct = vec_ref[...] * ud                                # (TE, 3) = ud * env_vectors

    sx_ref[...] += _agg_mm(mask, direct[:, 0:1] * sr)
    sy_ref[...] += _agg_mm(mask, direct[:, 1:2] * sr)
    sz_ref[...] += _agg_mm(mask, direct[:, 2:3] * sr)
    cnt_ref[...] += jnp.sum(mask, axis=-1, keepdims=True)

    @pl.when(e == pl.num_programs(0) - 1)
    def _():
        inv = 1.0 / jnp.maximum(cnt_ref[...], 1.0)
        mx = sx_ref[...] * inv
        my = sy_ref[...] * inv
        mz = sz_ref[...] * inv
        # Gram: gram[n, si*a+aj] = sum_c m_c[n,si] * m_c[n,aj].  Runs once per call on a
        # tiny (N, s) block, so the slice/concat loop is negligible.
        cols = []
        for si in range(s):
            cols.append(mx[:, si:si + 1] * mx[:, :a]
                        + my[:, si:si + 1] * my[:, :a]
                        + mz[:, si:si + 1] * mz[:, :a])
        gram = jnp.concatenate(cols, axis=-1)                 # (N, s*a)
        o_ref[...] = _layernorm(gram, g_ref[...], b_ref[...])


def _node_hidden_kernel(rad_ref, dst_ref, src_ref, emb_ref, w_ref, b_ref, o_ref,
                        *, n_nodes):
    # Fused: hidden = (radial @ W_emb + b) * 0.5*(node_emb[dst] + node_emb[src]),
    # with both gathers as a single one-hot matmul.
    lane = jax.lax.broadcasted_iota(jnp.int32, (1, n_nodes), 1)
    pair = ((lane == dst_ref[...]).astype(jnp.float32)
            + (lane == src_ref[...]).astype(jnp.float32))     # (TT, N)
    gathered = 0.5 * _agg_mm(pair, emb_ref[...])              # 0.5*(emb[dst]+emb[src])
    o_ref[...] = (_mm(rad_ref[...], w_ref[...]) + b_ref[...]) * gathered


def _layer_aggr_kernel(idxr_ref, idxc_ref, rad_ref, emb_ref, w_ref, b_ref,
                       g_ref, beta_ref, o_ref, sum_ref, cnt_ref, *, n_nodes):
    # Fused: msg = (env_radial @ W_emb + b) * node_emb[env_index[1]] (gather in-kernel),
    # tiled segment-mean at env_index[1], LayerNorm, residual node_emb update.
    e = pl.program_id(0)

    @pl.when(e == 0)
    def _():
        sum_ref[...] = jnp.zeros_like(sum_ref)
        cnt_ref[...] = jnp.zeros_like(cnt_ref)

    lane = jax.lax.broadcasted_iota(jnp.int32, (1, n_nodes), 1)
    maskT = (lane == idxc_ref[...]).astype(jnp.float32)       # (TE, N) gather one-hot
    gathered = _agg_mm(maskT, emb_ref[...])                   # node_emb[env_index[1]]
    msg = (_mm(rad_ref[...], w_ref[...]) + b_ref[...]) * gathered

    node_col = jax.lax.broadcasted_iota(jnp.int32, (n_nodes, 1), 0)
    mask = (node_col == idxr_ref[...]).astype(jnp.float32)    # (N, TE) scatter one-hot
    sum_ref[...] += _agg_mm(mask, msg)
    cnt_ref[...] += jnp.sum(mask, axis=-1, keepdims=True)

    @pl.when(e == pl.num_programs(0) - 1)
    def _():
        mean = sum_ref[...] / jnp.maximum(cnt_ref[...], 1.0)
        o_ref[...] = (0.89442719 * emb_ref[...]
                      + 0.4472 * _layernorm(mean, g_ref[...], beta_ref[...]))


def _hid_ffn_kernel(src_ref, emb_ref, hid_ref, w1a_ref, w1b_ref, b1_ref,
                    w2_ref, b2_ref, o_ref, *, n_nodes):
    # Fused: FFN(cat(node_emb[src], hidden)) with the gather as a one-hot matmul.
    lane = jax.lax.broadcasted_iota(jnp.int32, (1, n_nodes), 1)
    maskT = (lane == src_ref[...]).astype(jnp.float32)
    gathered = _agg_mm(maskT, emb_ref[...])
    h = jnp.tanh(_mm(gathered, w1a_ref[...]) + _mm(hid_ref[...], w1b_ref[...]) + b1_ref[...])
    o_ref[...] = _mm(h, w2_ref[...]) + b2_ref[...]


def _layer_radial_kernel(rad_ref, hid_ref, len_ref, w1a_ref, w1b_ref, b1_ref,
                         w2_ref, b2_ref, g_ref, beta_ref, o_ref, *, rc, p):
    # Fused: FFN(cat(radial, hidden)) -> LayerNorm -> 0.894*radial + 0.4472*ud*(.)
    rad = rad_ref[...]
    ud = _poly_cutoff(len_ref[...] * (1.0 / rc), p)
    h = jnp.tanh(_mm(rad, w1a_ref[...]) + _mm(hid_ref[...], w1b_ref[...]) + b1_ref[...])
    y = _layernorm(_mm(h, w2_ref[...]) + b2_ref[...], g_ref[...], beta_ref[...])
    o_ref[...] = 0.89442719 * rad + 0.4472 * ud * y


# ----------------------------------------------------------------------------
# Padding / tiling helpers (pad once at the top of the forward)
# ----------------------------------------------------------------------------
def _pad_count(n):
    n = max(int(n), 1)
    if n > 256:
        return ((n + 127) // 128) * 128
    return ((n + 7) // 8) * 8


def _row_tile(mp):
    # mp is already padded.  Below 256 rows: single grid step (minimal launches).
    # At >=256 rows: >=2 tiles so the "parallel" axis shards across v7x's 2 TCs.
    if mp < 256:
        return mp
    for t in (256, 128, 64, 32, 16, 8):
        if mp % t == 0 and mp // t >= 2:
            return t
    return mp


def _e_tile(ep, n_nodes):
    # Bound the (n_nodes x TE) one-hot mask (and its transpose) to ~2 MiB each.
    if ep <= 512:
        return ep
    te = 512
    while te > 128 and n_nodes * te * 4 > 2 * 1024 * 1024:
        te //= 2
    while ep % te != 0:      # ep is a multiple of 128 in this branch
        te //= 2
    return te


def _pad_rows(x, mp, value=0.0):
    pad = mp - x.shape[0]
    if pad:
        x = jnp.pad(x, ((0, pad),) + ((0, 0),) * (x.ndim - 1), constant_values=value)
    return x


def _pad_idx_row(idx, ep):
    idx = idx.astype(jnp.int32).reshape(1, -1)
    pad = ep - idx.shape[1]
    if pad:
        idx = jnp.pad(idx, ((0, 0), (0, pad)), constant_values=-1)
    return idx


def _pad_idx_col(idx, ep):
    idx = idx.astype(jnp.int32).reshape(-1, 1)
    pad = ep - idx.shape[0]
    if pad:
        idx = jnp.pad(idx, ((0, pad), (0, 0)), constant_values=-1)
    return idx


# ----------------------------------------------------------------------------
# Wrappers (inputs are already row-padded; no per-call pad / slice)
# ----------------------------------------------------------------------------
def node_radial_dual(attr, lengths, bessel_w, mlp_radial, edge_ln, mlp_sqrt, *, rc, p):
    w1r, b1r = mlp_radial["lin1"]
    w2r, b2r = mlp_radial["lin2"]
    w1s, b1s = mlp_sqrt["lin1"]
    w2s, b2s = mlp_sqrt["lin2"]
    gamma, beta = edge_ln
    t, na = attr.shape
    nb = bessel_w.shape[0]
    rh = w1r.shape[1]
    nr = w2r.shape[1]
    s = w2s.shape[1]
    tile = _row_tile(t)
    rw1a, rw1b = w1r[:na], w1r[na:]
    sw1a, sw1b = w1s[:na], w1s[na:]
    flops = 2 * t * ((na + nb) * rh * 2 + rh * (nr + s))
    bytes_acc = 4 * (t * (na + 1 + nr + s) + 2 * (na + nb + 1) * rh + rh * (nr + s))
    return pl.pallas_call(
        functools.partial(_node_radial_dual_kernel, rc=float(rc), p=int(p)),
        out_shape=(jax.ShapeDtypeStruct((t, nr), jnp.float32),
                   jax.ShapeDtypeStruct((t, s), jnp.float32)),
        grid=(t // tile,),
        in_specs=[_row(tile, na), _row(tile, 1), _const(1, nb),
                  _const(na, rh), _const(nb, rh), _const(1, rh), _const(rh, nr), _const(1, nr),
                  _const(1, nr), _const(1, nr),
                  _const(na, rh), _const(nb, rh), _const(1, rh), _const(rh, s), _const(1, s)],
        out_specs=(pl.BlockSpec((tile, nr), lambda i: (i, 0)),
                   pl.BlockSpec((tile, s), lambda i: (i, 0))),
        compiler_params=_ROW_PARAMS,
        cost_estimate=_ce(flops, bytes_acc, t * (nb + 2 * rh)),
    )(attr, lengths, bessel_w.reshape(1, -1),
      rw1a, rw1b, b1r.reshape(1, -1), w2r, b2r.reshape(1, -1),
      gamma.reshape(1, -1), beta.reshape(1, -1),
      sw1a, sw1b, b1s.reshape(1, -1), w2s, b2s.reshape(1, -1))


def se2_aggregate(idx_row, sqrt_cat, env_vec, len_cat, n_nodes, s, a, ln, ep, *, rc, p):
    gamma, beta = ln
    te = _e_tile(ep, n_nodes)
    d_out = s * a
    flops = 2 * ep * n_nodes * (3 * s + 1)
    bytes_acc = 4 * (ep * (s + 3 + 1 + 1) + n_nodes * d_out)
    return pl.pallas_call(
        functools.partial(_se2_aggr_kernel, n_nodes=n_nodes, s=s, a=a,
                          rc=float(rc), p=int(p)),
        out_shape=jax.ShapeDtypeStruct((n_nodes, d_out), jnp.float32),
        grid=(ep // te,),
        in_specs=[pl.BlockSpec((1, te), lambda i: (0, i)),
                  _row(te, s), _row(te, 3), _row(te, 1),
                  _const(1, d_out), _const(1, d_out)],
        out_specs=pl.BlockSpec((n_nodes, d_out), lambda i: (0, 0)),
        scratch_shapes=[pltpu.VMEM((n_nodes, s), jnp.float32),
                        pltpu.VMEM((n_nodes, s), jnp.float32),
                        pltpu.VMEM((n_nodes, s), jnp.float32),
                        pltpu.VMEM((n_nodes, 1), jnp.float32)],
        compiler_params=_RED_PARAMS,
        cost_estimate=_ce(flops, bytes_acc),
    )(idx_row, sqrt_cat, env_vec, len_cat, gamma.reshape(1, -1), beta.reshape(1, -1))


def node_hidden(radial_cat, dst_col, src_col, node_emb, w, b):
    t, nr = radial_cat.shape
    n_nodes, h = node_emb.shape
    tile = _row_tile(t)
    flops = 2 * t * (n_nodes * h + nr * h)
    bytes_acc = 4 * (t * (nr + 2 + h) + n_nodes * h + nr * h)
    return pl.pallas_call(
        functools.partial(_node_hidden_kernel, n_nodes=n_nodes),
        out_shape=jax.ShapeDtypeStruct((t, h), jnp.float32),
        grid=(t // tile,),
        in_specs=[_row(tile, nr), _row(tile, 1), _row(tile, 1),
                  _const(n_nodes, h), _const(nr, h), _const(1, h)],
        out_specs=pl.BlockSpec((tile, h), lambda i: (i, 0)),
        compiler_params=_ROW_PARAMS,
        cost_estimate=_ce(flops, bytes_acc),
    )(radial_cat, dst_col, src_col, node_emb, w, b.reshape(1, -1))


def layer_aggregate(idx_row, idx_col, radial_cat, node_emb, mlp_emb, ln, ep):
    w, b = mlp_emb
    gamma, beta = ln
    n_nodes, h = node_emb.shape
    nr = radial_cat.shape[1]
    te = _e_tile(ep, n_nodes)
    flops = 2 * ep * (2 * n_nodes * h + nr * h)
    bytes_acc = 4 * (ep * (nr + 2) + 2 * n_nodes * h + nr * h)
    return pl.pallas_call(
        functools.partial(_layer_aggr_kernel, n_nodes=n_nodes),
        out_shape=jax.ShapeDtypeStruct((n_nodes, h), jnp.float32),
        grid=(ep // te,),
        in_specs=[pl.BlockSpec((1, te), lambda i: (0, i)),
                  _row(te, 1), _row(te, nr),
                  _const(n_nodes, h), _const(nr, h), _const(1, h),
                  _const(1, h), _const(1, h)],
        out_specs=pl.BlockSpec((n_nodes, h), lambda i: (0, 0)),
        scratch_shapes=[pltpu.VMEM((n_nodes, h), jnp.float32),
                        pltpu.VMEM((n_nodes, 1), jnp.float32)],
        compiler_params=_RED_PARAMS,
        cost_estimate=_ce(flops, bytes_acc),
    )(idx_row, idx_col, radial_cat, node_emb, w, b.reshape(1, -1),
      gamma.reshape(1, -1), beta.reshape(1, -1))


def hid_ffn(src_col, node_emb, hidden_cat, mlp):
    # TODO(synk): exact dptb FFN/ResNet internals (activation choice, residual wiring)
    # are not in the provided source; modeled as Linear->tanh->Linear.
    w1, b1 = mlp["lin1"]
    w2, b2 = mlp["lin2"]
    t, h = hidden_cat.shape
    n_nodes = node_emb.shape[0]
    hh = w1.shape[1]
    fout = w2.shape[1]
    tile = _row_tile(t)
    w1a, w1b = w1[:h], w1[h:]
    flops = 2 * t * (n_nodes * h + 2 * h * hh + hh * fout)
    bytes_acc = 4 * (t * (1 + h + fout) + n_nodes * h + 2 * h * hh + hh * fout)
    return pl.pallas_call(
        functools.partial(_hid_ffn_kernel, n_nodes=n_nodes),
        out_shape=jax.ShapeDtypeStruct((t, fout), jnp.float32),
        grid=(t // tile,),
        in_specs=[_row(tile, 1), _const(n_nodes, h), _row(tile, h),
                  _const(h, hh), _const(h, hh), _const(1, hh),
                  _const(hh, fout), _const(1, fout)],
        out_specs=pl.BlockSpec((tile, fout), lambda i: (i, 0)),
        compiler_params=_ROW_PARAMS,
        cost_estimate=_ce(flops, bytes_acc, t * hh),
    )(src_col, node_emb, hidden_cat, w1a, w1b, b1.reshape(1, -1), w2, b2.reshape(1, -1))


def layer_radial(radial_cat, hidden_cat, len_cat, mlp, ln, *, rc, p):
    w1, b1 = mlp["lin1"]
    w2, b2 = mlp["lin2"]
    gamma, beta = ln
    t, nr = radial_cat.shape
    nh = hidden_cat.shape[1]
    rh = w1.shape[1]
    tile = _row_tile(t)
    w1a, w1b = w1[:nr], w1[nr:]
    flops = 2 * t * ((nr + nh) * rh + rh * nr)
    bytes_acc = 4 * (t * (2 * nr + nh + 1) + (nr + nh + 1) * rh + rh * nr)
    return pl.pallas_call(
        functools.partial(_layer_radial_kernel, rc=float(rc), p=int(p)),
        out_shape=jax.ShapeDtypeStruct((t, nr), jnp.float32),
        grid=(t // tile,),
        in_specs=[_row(tile, nr), _row(tile, nh), _row(tile, 1),
                  _const(nr, rh), _const(nh, rh), _const(1, rh),
                  _const(rh, nr), _const(1, nr), _const(1, nr), _const(1, nr)],
        out_specs=pl.BlockSpec((tile, nr), lambda i: (i, 0)),
        compiler_params=_ROW_PARAMS,
        cost_estimate=_ce(flops, bytes_acc, t * rh),
    )(radial_cat, hidden_cat, len_cat, w1a, w1b, b1.reshape(1, -1),
      w2, b2.reshape(1, -1), gamma.reshape(1, -1), beta.reshape(1, -1))


# ----------------------------------------------------------------------------
# Parameters (deterministic synthetic init, torch.nn.Linear-style uniform)
# ----------------------------------------------------------------------------
def _init_linear(key, fin, fout):
    kw, kb = jax.random.split(key)
    bound = 1.0 / (fin ** 0.5)
    w = jax.random.uniform(kw, (fin, fout), jnp.float32, -bound, bound)
    b = jax.random.uniform(kb, (fout,), jnp.float32, -bound, bound)
    return w, b


def _init_mlp(key, fin, hidden, fout):
    k1, k2 = jax.random.split(key)
    return {"lin1": _init_linear(k1, fin, hidden),
            "lin2": _init_linear(k2, hidden, fout)}


def _init_layernorm(dim):
    return (jnp.ones((dim,), jnp.float32), jnp.zeros((dim,), jnp.float32))


def init_params(key, cfg):
    n_atom, n_basis, n_radial = cfg["n_atom"], cfg["n_basis"], cfg["n_radial"]
    s, a = cfg["n_sqrt_radial"], cfg["n_axis"]
    n_hidden = a * s
    rh, hh = cfg["radial_hidden"], cfg["hidden_hidden"]
    keys = jax.random.split(key, 3 + 3 * cfg["n_layer"])
    node_emb = {
        "bessel_w": jnp.pi * jnp.arange(1, n_basis + 1, dtype=jnp.float32),
        "mlp_radial": _init_mlp(keys[0], 2 * n_atom + n_basis, rh, n_radial),
        "mlp_sqrt_radial": _init_mlp(keys[1], 2 * n_atom + n_basis, rh, s),
        "mlp_emb": _init_linear(keys[2], n_radial, n_hidden),
        "node_ln": _init_layernorm(n_hidden),
        "edge_ln": _init_layernorm(n_radial),
    }
    layers = []
    for li in range(cfg["n_layer"]):
        k0, k1, k2 = keys[3 + 3 * li: 6 + 3 * li]
        layers.append({
            "mlp_emb": _init_linear(k0, n_radial, n_hidden),
            "mlp_hid": _init_mlp(k1, 2 * n_hidden, hh, n_hidden),
            "mlp_radial": _init_mlp(k2, n_radial + n_hidden, rh, n_radial),
            "node_ln": _init_layernorm(n_hidden),
            "edge_ln": _init_layernorm(n_radial),
        })
    return {"node_emb": node_emb, "layers": layers}


# ----------------------------------------------------------------------------
# Model forward (faithful to BASELINE.forward semantics)
# ----------------------------------------------------------------------------
def baseline_forward(params, atom_types, env_vectors, env_index, edge_index,
                     env_length, edge_length, *, cfg):
    # OneHotAtomEncoding(set_features=False): node_attrs only
    node_attrs = jax.nn.one_hot(atom_types, cfg["n_atom"], dtype=jnp.float32)
    n_nodes = node_attrs.shape[0]
    n_env = env_index.shape[1]
    n_edge = edge_index.shape[1]
    s, a = cfg["n_sqrt_radial"], cfg["n_axis"]
    rc, pp = cfg["rc"], cfg["p"]

    # Pad env/edge row counts ONCE; padded rows stay finite (length 1.0, index -1)
    # and are masked out of every aggregation.  Only the final outputs are sliced.
    ep = _pad_count(n_env)
    edp = _pad_count(n_edge)

    # atom_attr[index].transpose(1,0).reshape(E,-1)  (plain-JAX gather glue)
    env_attr = jnp.transpose(node_attrs[env_index], (1, 0, 2)).reshape(n_env, -1)
    edge_attr = jnp.transpose(node_attrs[edge_index], (1, 0, 2)).reshape(n_edge, -1)
    attr_cat = jnp.concatenate([_pad_rows(env_attr, ep), _pad_rows(edge_attr, edp)], axis=0)
    len_cat = jnp.concatenate(
        [_pad_rows(env_length.astype(jnp.float32).reshape(-1, 1), ep, value=1.0),
         _pad_rows(edge_length.astype(jnp.float32).reshape(-1, 1), edp, value=1.0)], axis=0)
    env_vec_p = _pad_rows(env_vectors.astype(jnp.float32), ep)

    env_dst_row = _pad_idx_row(env_index[1], ep)      # (1, Ep) scatter index
    env_dst_col = _pad_idx_col(env_index[1], ep)      # (Ep, 1) gather index
    dst_cat_col = jnp.concatenate([env_dst_col, _pad_idx_col(edge_index[1], edp)], axis=0)
    src_cat_col = jnp.concatenate([_pad_idx_col(env_index[0], ep),
                                   _pad_idx_col(edge_index[0], edp)], axis=0)

    pe = params["node_emb"]
    # 1) fused bessel/cutoff + mlp_radial (+edge LN) + mlp_sqrt_radial, both *ud,
    #    over env+edge rows in one call with two outputs.
    radial_cat, sqrt_cat = node_radial_dual(attr_cat, len_cat, pe["bessel_w"],
                                            pe["mlp_radial"], pe["edge_ln"],
                                            pe["mlp_sqrt_radial"], rc=rc, p=pp)
    # 2) SE2 aggregation: (ud*vec)(x)sqrt_radial message + segment-mean at env_index[1]
    #    + Gram product + node LayerNorm (env rows read directly out of the cat arrays).
    node_emb = se2_aggregate(env_dst_row, sqrt_cat, env_vec_p, len_cat, n_nodes,
                             s, a, pe["node_ln"], ep, rc=rc, p=pp)
    # 3) hidden = mlp_emb(radial) * 0.5*(emb[dst]+emb[src]); gathers fused in-kernel.
    hidden_cat = node_hidden(radial_cat, dst_cat_col, src_cat_col, node_emb,
                             *pe["mlp_emb"])

    for lp in params["layers"]:
        # node_emb: in-kernel mlp_emb + gather(env_index[1]) + segment-mean + LN + residual
        node_emb = layer_aggregate(env_dst_row, env_dst_col, radial_cat, node_emb,
                                   lp["mlp_emb"], lp["node_ln"], ep)
        # hidden: in-kernel gather(node_emb[index[0]]) + FFN over env+edge rows
        hidden_cat = hid_ffn(src_cat_col, node_emb, hidden_cat, lp["mlp_hid"])
        # radial: FFN + edge LN + cutoff residual over env+edge rows
        radial_cat = layer_radial(radial_cat, hidden_cat, len_cat,
                                  lp["mlp_radial"], lp["edge_ln"], rc=rc, p=pp)

    # NODE_FEATURES, EDGE_FEATURES (single slice at the very end)
    edge_radial = radial_cat[ep:ep + n_edge]
    return node_emb, edge_radial


# ----------------------------------------------------------------------------
if __name__ == "__main__":
    cfg = dict(rc=4.0, p=6, n_atom=2, n_basis=8, n_radial=16,
               n_sqrt_radial=8, n_axis=4, n_layer=2,
               radial_hidden=32, hidden_hidden=32)
    assert cfg["n_axis"] <= cfg["n_sqrt_radial"]

    key = jax.random.PRNGKey(0)
    ks = jax.random.split(key, 6)
    n_nodes, n_env, n_edge = 8, 32, 16

    atom_types = jax.random.randint(ks[0], (n_nodes,), 0, cfg["n_atom"])
    env_index = jax.random.randint(ks[1], (2, n_env), 0, n_nodes)
    edge_index = jax.random.randint(ks[2], (2, n_edge), 0, n_nodes)
    env_vectors = jax.random.normal(ks[3], (n_env, 3), jnp.float32)
    edge_vectors = jax.random.normal(ks[4], (n_edge, 3), jnp.float32)
    env_length = jnp.linalg.norm(env_vectors, axis=-1)
    edge_length = jnp.linalg.norm(edge_vectors, axis=-1)

    params = init_params(ks[5], cfg)

    fwd = jax.jit(functools.partial(baseline_forward, cfg=cfg))
    node_features, edge_features = fwd(params, atom_types, env_vectors,
                                       env_index, edge_index, env_length, edge_length)
    jax.block_until_ready((node_features, edge_features))

    assert node_features.shape == (n_nodes, cfg["n_axis"] * cfg["n_sqrt_radial"])
    assert edge_features.shape == (n_edge, cfg["n_radial"])
    assert bool(jnp.all(jnp.isfinite(node_features)))
    assert bool(jnp.all(jnp.isfinite(edge_features)))
    print("KERNEL_OK")
</pallas_src>

<mosaic_0001>
module attributes {stable_mosaic.version = 11 : i64} {
  func.func @_node_radial_dual_kernel(%arg0: i32, %arg1: memref<48x4xf32, #tpu.memory_space<vmem>>, %arg2: memref<48x1xf32, #tpu.memory_space<vmem>>, %arg3: memref<1x8xf32, #tpu.memory_space<vmem>>, %arg4: memref<4x32xf32, #tpu.memory_space<vmem>>, %arg5: memref<8x32xf32, #tpu.memory_space<vmem>>, %arg6: memref<1x32xf32, #tpu.memory_space<vmem>>, %arg7: memref<32x16xf32, #tpu.memory_space<vmem>>, %arg8: memref<1x16xf32, #tpu.memory_space<vmem>>, %arg9: memref<1x16xf32, #tpu.memory_space<vmem>>, %arg10: memref<1x16xf32, #tpu.memory_space<vmem>>, %arg11: memref<4x32xf32, #tpu.memory_space<vmem>>, %arg12: memref<8x32xf32, #tpu.memory_space<vmem>>, %arg13: memref<1x32xf32, #tpu.memory_space<vmem>>, %arg14: memref<32x8xf32, #tpu.memory_space<vmem>>, %arg15: memref<1x8xf32, #tpu.memory_space<vmem>>, %arg16: memref<48x16xf32, #tpu.memory_space<vmem>>, %arg17: memref<48x8xf32, #tpu.memory_space<vmem>>) attributes {dimension_semantics = [#tpu.dimension_semantics<parallel>], iteration_bounds = array<i64: 1>, scalar_prefetch = 0 : i64, scratch_operands = 0 : i64, tpu.core_type = #tpu.core_type<tc>, window_params = [{transform_indices = @transform_0, window_bounds = array<i64: 48, 4>}, {transform_indices = @transform_1, window_bounds = array<i64: 48, 1>}, {pipeline_mode = #tpu.pipeline_mode<synchronous>, transform_indices = @transform_2, window_bounds = array<i64: 1, 8>}, {pipeline_mode = #tpu.pipeline_mode<synchronous>, transform_indices = @transform_3, window_bounds = array<i64: 4, 32>}, {pipeline_mode = #tpu.pipeline_mode<synchronous>, transform_indices = @transform_4, window_bounds = array<i64: 8, 32>}, {pipeline_mode = #tpu.pipeline_mode<synchronous>, transform_indices = @transform_5, window_bounds = array<i64: 1, 32>}, {pipeline_mode = #tpu.pipeline_mode<synchronous>, transform_indices = @transform_6, window_bounds = array<i64: 32, 16>}, {pipeline_mode = #tpu.pipeline_mode<synchronous>, transform_indices = @transform_7, window_bounds = array<i64: 1, 16>}, {pipeline_mode = #tpu.pipeline_mode<synchronous>, transform_indices = @transform_8, window_bounds = array<i64: 1, 16>}, {pipeline_mode = #tpu.pipeline_mode<synchronous>, transform_indices = @transform_9, window_bounds = array<i64: 1, 16>}, {pipeline_mode = #tpu.pipeline_mode<synchronous>, transform_indices = @transform_10, window_bounds = array<i64: 4, 32>}, {pipeline_mode = #tpu.pipeline_mode<synchronous>, transform_indices = @transform_11, window_bounds = array<i64: 8, 32>}, {pipeline_mode = #tpu.pipeline_mode<synchronous>, transform_indices = @transform_12, window_bounds = array<i64: 1, 32>}, {pipeline_mode = #tpu.pipeline_mode<synchronous>, transform_indices = @transform_13, window_bounds = array<i64: 32, 8>}, {pipeline_mode = #tpu.pipeline_mode<synchronous>, transform_indices = @transform_14, window_bounds = array<i64: 1, 8>}, {transform_indices = @transform_15, window_bounds = array<i64: 48, 16>}, {transform_indices = @transform_16, window_bounds = array<i64: 48, 8>}]} {
    %c0 = arith.constant 0 : index
    %c0_0 = arith.constant 0 : index
    %0 = vector.load %arg2[%c0, %c0_0] : memref<48x1xf32, #tpu.memory_space<vmem>>, vector<48x1xf32>
    %cst = arith.constant 2.500000e-01 : f32
    %1 = vector.broadcast %cst : f32 to vector<48x1xf32>
    %2 = arith.mulf %0, %1 : vector<48x1xf32>
    %3 = arith.mulf %2, %2 : vector<48x1xf32>
    %4 = arith.mulf %3, %3 : vector<48x1xf32>
    %5 = arith.mulf %3, %4 : vector<48x1xf32>
    %6 = arith.mulf %5, %2 : vector<48x1xf32>
    %7 = arith.mulf %6, %2 : vector<48x1xf32>
    %cst_1 = arith.constant 2.800000e+01 : f32
    %8 = vector.broadcast %cst_1 : f32 to vector<48x1xf32>
    %9 = arith.mulf %8, %5 : vector<48x1xf32>
    %cst_2 = arith.constant 1.000000e+00 : f32
    %10 = vector.broadcast %cst_2 : f32 to vector<48x1xf32>
    %11 = arith.subf %10, %9 : vector<48x1xf32>
    %cst_3 = arith.constant 4.800000e+01 : f32
    %12 = vector.broadcast %cst_3 : f32 to vector<48x1xf32>
    %13 = arith.mulf %12, %6 : vector<48x1xf32>
    %14 = arith.addf %11, %13 : vector<48x1xf32>
    %cst_4 = arith.constant 2.100000e+01 : f32
    %15 = vector.broadcast %cst_4 : f32 to vector<48x1xf32>
    %16 = arith.mulf %15, %7 : vector<48x1xf32>
    %17 = arith.subf %14, %16 : vector<48x1xf32>
    %cst_5 = arith.constant 1.000000e+00 : f32
    %18 = vector.broadcast %cst_5 : f32 to vector<48x1xf32>
    %19 = arith.cmpf olt, %2, %18 : vector<48x1xf32>
    %cst_6 = arith.constant 0.000000e+00 : f32
    %20 = vector.broadcast %cst_6 : f32 to vector<48x1xf32>
    %21 = arith.select %19, %17, %20 : vector<48x1xi1>, vector<48x1xf32>
    %c0_7 = arith.constant 0 : index
    %c0_8 = arith.constant 0 : index
    %22 = vector.load %arg3[%c0_7, %c0_8] : memref<1x8xf32, #tpu.memory_space<vmem>>, vector<1x8xf32>
    %23 = vector.broadcast %22 : vector<1x8xf32> to vector<48x8xf32>
    %24 = vector.broadcast %2 : vector<48x1xf32> to vector<48x8xf32>
    %25 = arith.mulf %23, %24 : vector<48x8xf32>
    %26 = math.sin %25 : vector<48x8xf32>
    %cst_9 = arith.constant 5.000000e-01 : f32
    %27 = vector.broadcast %cst_9 : f32 to vector<48x8xf32>
    %28 = arith.mulf %27, %26 : vector<48x8xf32>
    %29 = vector.broadcast %0 : vector<48x1xf32> to vector<48x8xf32>
    %30 = arith.divf %28, %29 : vector<48x8xf32>
    %31 = vector.broadcast %21 : vector<48x1xf32> to vector<48x8xf32>
    %32 = arith.mulf %31, %30 : vector<48x8xf32>
    %c0_10 = arith.constant 0 : index
    %c0_11 = arith.constant 0 : index
    %33 = vector.load %arg1[%c0_10, %c0_11] : memref<48x4xf32, #tpu.memory_space<vmem>>, vector<48x4xf32>
    %c0_12 = arith.constant 0 : index
    %c0_13 = arith.constant 0 : index
    %34 = vector.load %arg4[%c0_12, %c0_13] : memref<4x32xf32, #tpu.memory_space<vmem>>, vector<4x32xf32>
    %cst_14 = arith.constant dense<0.000000e+00> : vector<48x32xf32>
    %35 = tpu.matmul %33, %34, %cst_14 {dimension_numbers = #tpu.dot_dimension_numbers<[1], [0], [0], [1], [0, 0, 1, 1], [], []>} : vector<48x4xf32>, vector<4x32xf32>, vector<48x32xf32> -> vector<48x32xf32>
    %c0_15 = arith.constant 0 : index
    %c0_16 = arith.constant 0 : index
    %36 = vector.load %arg5[%c0_15, %c0_16] : memref<8x32xf32, #tpu.memory_space<vmem>>, vector<8x32xf32>
    %cst_17 = arith.constant dense<0.000000e+00> : vector<48x32xf32>
    %37 = tpu.matmul %32, %36, %cst_17 {dimension_numbers = #tpu.dot_dimension_numbers<[1], [0], [0], [1], [0, 0, 1, 1], [], []>} : vector<48x8xf32>, vector<8x32xf32>, vector<48x32xf32> -> vector<48x32xf32>
    %38 = arith.addf %35, %37 : vector<48x32xf32>
    %c0_18 = arith.constant 0 : index
    %c0_19 = arith.constant 0 : index
    %39 = vector.load %arg6[%c0_18, %c0_19] : memref<1x32xf32, #tpu.memory_space<vmem>>, vector<1x32xf32>
    %40 = vector.broadcast %39 : vector<1x32xf32> to vector<48x32xf32>
    %41 = arith.addf %38, %40 : vector<48x32xf32>
    %42 = math.tanh %41 : vector<48x32xf32>
    %c0_20 = arith.constant 0 : index
    %c0_21 = arith.constant 0 : index
    %43 = vector.load %arg7[%c0_20, %c0_21] : memref<32x16xf32, #tpu.memory_space<vmem>>, vector<32x16xf32>
    %cst_22 = arith.constant dense<0.000000e+00> : vector<48x16xf32>
    %44 = tpu.matmul %42, %43, %cst_22 {dimension_numbers = #tpu.dot_dimension_numbers<[1], [0], [0], [1], [0, 0, 1, 1], [], []>} : vector<48x32xf32>, vector<32x16xf32>, vector<48x16xf32> -> vector<48x16xf32>
    %c0_23 = arith.constant 0 : index
    %c0_24 = arith.constant 0 : index
    %45 = vector.load %arg8[%c0_23, %c0_24] : memref<1x16xf32, #tpu.memory_space<vmem>>, vector<1x16xf32>
    %46 = vector.broadcast %45 : vector<1x16xf32> to vector<48x16xf32>
    %47 = arith.addf %44, %46 : vector<48x16xf32>
    %c0_25 = arith.constant 0 : index
    %c0_26 = arith.constant 0 : index
    %48 = vector.load %arg9[%c0_25, %c0_26] : memref<1x16xf32, #tpu.memory_space<vmem>>, vector<1x16xf32>
    %c0_27 = arith.constant 0 : index
    %c0_28 = arith.constant 0 : index
    %49 = vector.load %arg10[%c0_27, %c0_28] : memref<1x16xf32, #tpu.memory_space<vmem>>, vector<1x16xf32>
    %cst_29 = arith.constant dense<0.000000e+00> : vector<48xf32>
    %50 = vector.multi_reduction <add>, %47, %cst_29 [1] : vector<48x16xf32> to vector<48xf32>
    %51 = vector.shape_cast %50 : vector<48xf32> to vector<48x1xf32>
    %cst_30 = arith.constant 1.600000e+01 : f32
    %52 = vector.broadcast %cst_30 : f32 to vector<48x1xf32>
    %53 = arith.divf %51, %52 : vector<48x1xf32>
    %54 = vector.broadcast %53 : vector<48x1xf32> to vector<48x16xf32>
    %55 = arith.subf %47, %54 : vector<48x16xf32>
    %56 = arith.mulf %55, %55 : vector<48x16xf32>
    %cst_31 = arith.constant dense<0.000000e+00> : vector<48xf32>
    %57 = vector.multi_reduction <add>, %56, %cst_31 [1] : vector<48x16xf32> to vector<48xf32>
    %58 = vector.shape_cast %57 : vector<48xf32> to vector<48x1xf32>
    %cst_32 = arith.constant 1.600000e+01 : f32
    %59 = vector.broadcast %cst_32 : f32 to vector<48x1xf32>
    %60 = arith.divf %58, %59 : vector<48x1xf32>
    %cst_33 = arith.constant 9.99999974E-6 : f32
    %61 = vector.broadcast %cst_33 : f32 to vector<48x1xf32>
    %62 = arith.addf %60, %61 : vector<48x1xf32>
    %63 = math.rsqrt %62 : vector<48x1xf32>
    %64 = vector.broadcast %63 : vector<48x1xf32> to vector<48x16xf32>
    %65 = arith.mulf %55, %64 : vector<48x16xf32>
    %66 = vector.broadcast %48 : vector<1x16xf32> to vector<48x16xf32>
    %67 = arith.mulf %65, %66 : vector<48x16xf32>
    %68 = vector.broadcast %49 : vector<1x16xf32> to vector<48x16xf32>
    %69 = arith.addf %67, %68 : vector<48x16xf32>
    %70 = vector.broadcast %21 : vector<48x1xf32> to vector<48x16xf32>
    %71 = arith.mulf %69, %70 : vector<48x16xf32>
    %c0_34 = arith.constant 0 : index
    %c0_35 = arith.constant 0 : index
    %72 = vector.load %arg16[%c0_34, %c0_35] : memref<48x16xf32, #tpu.memory_space<vmem>>, vector<48x16xf32>
    tpu.vector_store %arg16[%c0_34, %c0_35], %71 {strides = array<i32>} : memref<48x16xf32, #tpu.memory_space<vmem>>, vector<48x16xf32>,
    %c0_36 = arith.constant 0 : index
    %c0_37 = arith.constant 0 : index
    %73 = vector.load %arg11[%c0_36, %c0_37] : memref<4x32xf32, #tpu.memory_space<vmem>>, vector<4x32xf32>
    %cst_38 = arith.constant dense<0.000000e+00> : vector<48x32xf32>
    %74 = tpu.matmul %33, %73, %cst_38 {dimension_numbers = #tpu.dot_dimension_numbers<[1], [0], [0], [1], [0, 0, 1, 1], [], []>} : vector<48x4xf32>, vector<4x32xf32>, vector<48x32xf32> -> vector<48x32xf32>
    %c0_39 = arith.constant 0 : index
    %c0_40 = arith.constant 0 : index
    %75 = vector.load %arg12[%c0_39, %c0_40] : memref<8x32xf32, #tpu.memory_space<vmem>>, vector<8x32xf32>
    %cst_41 = arith.constant dense<0.000000e+00> : vector<48x32xf32>
    %76 = tpu.matmul %32, %75, %cst_41 {dimension_numbers = #tpu.dot_dimension_numbers<[1], [0], [0], [1], [0, 0, 1, 1], [], []>} : vector<48x8xf32>, vector<8x32xf32>, vector<48x32xf32> -> vector<48x32xf32>
    %77 = arith.addf %74, %76 : vector<48x32xf32>
    %c0_42 = arith.constant 0 : index
    %c0_43 = arith.constant 0 : index
    %78 = vector.load %arg13[%c0_42, %c0_43] : memref<1x32xf32, #tpu.memory_space<vmem>>, vector<1x32xf32>
    %79 = vector.broadcast %78 : vector<1x32xf32> to vector<48x32xf32>
    %80 = arith.addf %77, %79 : vector<48x32xf32>
    %81 = math.tanh %80 : vector<48x32xf32>
    %c0_44 = arith.constant 0 : index
    %c0_45 = arith.constant 0 : index
    %82 = vector.load %arg14[%c0_44, %c0_45] : memref<32x8xf32, #tpu.memory_space<vmem>>, vector<32x8xf32>
    %cst_46 = arith.constant dense<0.000000e+00> : vector<48x8xf32>
    %83 = tpu.matmul %81, %82, %cst_46 {dimension_numbers = #tpu.dot_dimension_numbers<[1], [0], [0], [1], [0, 0, 1, 1], [], []>} : vector<48x32xf32>, vector<32x8xf32>, vector<48x8xf32> -> vector<48x8xf32>
    %c0_47 = arith.constant 0 : index
    %c0_48 = arith.constant 0 : index
    %84 = vector.load %arg15[%c0_47, %c0_48] : memref<1x8xf32, #tpu.memory_space<vmem>>, vector<1x8xf32>
    %85 = vector.broadcast %84 : vector<1x8xf32> to vector<48x8xf32>
    %86 = arith.addf %83, %85 : vector<48x8xf32>
    %87 = vector.broadcast %21 : vector<48x1xf32> to vector<48x8xf32>
    %88 = arith.mulf %86, %87 : vector<48x8xf32>
    %c0_49 = arith.constant 0 : index
    %c0_50 = arith.constant 0 : index
    %89 = vector.load %arg17[%c0_49, %c0_50] : memref<48x8xf32, #tpu.memory_space<vmem>>, vector<48x8xf32>
    tpu.vector_store %arg17[%c0_49, %c0_50], %88 {strides = array<i32>} : memref<48x8xf32, #tpu.memory_space<vmem>>, vector<48x8xf32>,
    return
  }
  func.func @transform_0(%arg0: i32) -> (i32, i32) {
    %c0_i32 = arith.constant 0 : i32
    %c0_i32_0 = arith.constant 0 : i32
    return %arg0, %c0_i32 : i32, i32
  }
  func.func @transform_1(%arg0: i32) -> (i32, i32) {
    %c0_i32 = arith.constant 0 : i32
    %c0_i32_0 = arith.constant 0 : i32
    return %arg0, %c0_i32 : i32, i32
  }
  func.func @transform_2(%arg0: i32) -> (i32, i32) {
    %c0_i32 = arith.constant 0 : i32
    %c0_i32_0 = arith.constant 0 : i32
    %c0_i32_1 = arith.constant 0 : i32
    return %c0_i32, %c0_i32_0 : i32, i32
  }
  func.func @transform_3(%arg0: i32) -> (i32, i32) {
    %c0_i32 = arith.constant 0 : i32
    %c0_i32_0 = arith.constant 0 : i32
    %c0_i32_1 = arith.constant 0 : i32
    return %c0_i32, %c0_i32_0 : i32, i32
  }
  func.func @transform_4(%arg0: i32) -> (i32, i32) {
    %c0_i32 = arith.constant 0 : i32
    %c0_i32_0 = arith.constant 0 : i32
    %c0_i32_1 = arith.constant 0 : i32
    return %c0_i32, %c0_i32_0 : i32, i32
  }
  func.func @transform_5(%arg0: i32) -> (i32, i32) {
    %c0_i32 = arith.constant 0 : i32
    %c0_i32_0 = arith.constant 0 : i32
    %c0_i32_1 = arith.constant 0 : i32
    return %c0_i32, %c0_i32_0 : i32, i32
  }
  func.func @transform_6(%arg0: i32) -> (i32, i32) {
    %c0_i32 = arith.constant 0 : i32
    %c0_i32_0 = arith.constant 0 : i32
    %c0_i32_1 = arith.constant 0 : i32
    return %c0_i32, %c0_i32_0 : i32, i32
  }
  func.func @transform_7(%arg0: i32) -> (i32, i32) {
    %c0_i32 = arith.constant 0 : i32
    %c0_i32_0 = arith.constant 0 : i32
    %c0_i32_1 = arith.constant 0 : i32
    return %c0_i32, %c0_i32_0 : i32, i32
  }
  func.func @transform_8(%arg0: i32) -> (i32, i32) {
    %c0_i32 = arith.constant 0 : i32
    %c0_i32_0 = arith.constant 0 : i32
    %c0_i32_1 = arith.constant 0 : i32
    return %c0_i32, %c0_i32_0 : i32, i32
  }
  func.func @transform_9(%arg0: i32) -> (i32, i32) {
    %c0_i32 = arith.constant 0 : i32
    %c0_i32_0 = arith.constant 0 : i32
    %c0_i32_1 = arith.constant 0 : i32
    return %c0_i32, %c0_i32_0 : i32, i32
  }
  func.func @transform_10(%arg0: i32) -> (i32, i32) {
    %c0_i32 = arith.constant 0 : i32
    %c0_i32_0 = arith.constant 0 : i32
    %c0_i32_1 = arith.constant 0 : i32
    return %c0_i32, %c0_i32_0 : i32, i32
  }
  func.func @transform_11(%arg0: i32) -> (i32, i32) {
    %c0_i32 = arith.constant 0 : i32
    %c0_i32_0 = arith.constant 0 : i32
    %c0_i32_1 = arith.constant 0 : i32
    return %c0_i32, %c0_i32_0 : i32, i32
  }
  func.func @transform_12(%arg0: i32) -> (i32, i32) {
    %c0_i32 = arith.constant 0 : i32
    %c0_i32_0 = arith.constant 0 : i32
    %c0_i32_1 = arith.constant 0 : i32
    return %c0_i32, %c0_i32_0 : i32, i32
  }
  func.func @transform_13(%arg0: i32) -> (i32, i32) {
    %c0_i32 = arith.constant 0 : i32
    %c0_i32_0 = arith.constant 0 : i32
    %c0_i32_1 = arith.constant 0 : i32
    return %c0_i32, %c0_i32_0 : i32, i32
  }
  func.func @transform_14(%arg0: i32) -> (i32, i32) {
    %c0_i32 = arith.constant 0 : i32
    %c0_i32_0 = arith.constant 0 : i32
    %c0_i32_1 = arith.constant 0 : i32
    return %c0_i32, %c0_i32_0 : i32, i32
  }
  func.func @transform_15(%arg0: i32) -> (i32, i32) {
    %c0_i32 = arith.constant 0 : i32
    %c0_i32_0 = arith.constant 0 : i32
    return %arg0, %c0_i32 : i32, i32
  }
  func.func @transform_16(%arg0: i32) -> (i32, i32) {
    %c0_i32 = arith.constant 0 : i32
    %c0_i32_0 = arith.constant 0 : i32
    return %arg0, %c0_i32 : i32, i32
  }
}

module attributes {stable_mosaic.version = 11 : i64} {
  func.func @_se2_aggr_kernel(%arg0: i32, %arg1: memref<1x32xi32, #tpu.memory_space<vmem>>, %arg2: memref<32x8xf32, #tpu.memory_space<vmem>>, %arg3: memref<32x3xf32, #tpu.memory_space<vmem>>, %arg4: memref<32x1xf32, #tpu.memory_space<vmem>>, %arg5: memref<1x32xf32, #tpu.memory_space<vmem>>, %arg6: memref<1x32xf32, #tpu.memory_space<vmem>>, %arg7: memref<8x32xf32, #tpu.memory_space<vmem>>, %arg8: memref<8x8xf32, #tpu.memory_space<vmem>>, %arg9: memref<8x8xf32, #tpu.memory_space<vmem>>, %arg10: memref<8x8xf32, #tpu.memory_space<vmem>>, %arg11: memref<8x1xf32, #tpu.memory_space<vmem>>) attributes {dimension_semantics = [#tpu.dimension_semantics<arbitrary>], iteration_bounds = array<i64: 1>, scalar_prefetch = 0 : i64, scratch_operands = 4 : i64, tpu.core_type = #tpu.core_type<tc>, window_params = [{transform_indices = @transform_0, window_bounds = array<i64: 1, 32>}, {transform_indices = @transform_1, window_bounds = array<i64: 32, 8>}, {transform_indices = @transform_2, window_bounds = array<i64: 32, 3>}, {transform_indices = @transform_3, window_bounds = array<i64: 32, 1>}, {pipeline_mode = #tpu.pipeline_mode<synchronous>, transform_indices = @transform_4, window_bounds = array<i64: 1, 32>}, {pipeline_mode = #tpu.pipeline_mode<synchronous>, transform_indices = @transform_5, window_bounds = array<i64: 1, 32>}, {pipeline_mode = #tpu.pipeline_mode<synchronous>, transform_indices = @transform_6, window_bounds = array<i64: 8, 32>}]} {
    %c0_i32 = arith.constant 0 : i32
    %0 = arith.cmpi eq, %arg0, %c0_i32 : i32
    %1 = arith.extui %0 : i1 to i32
    %c0_i32_0 = arith.constant 0 : i32
    %2 = arith.cmpi ne, %1, %c0_i32_0 : i32
    scf.if %2 {
      %cst_36 = arith.constant 0.000000e+00 : f32
      %65 = vector.broadcast %cst_36 : f32 to vector<8x8xf32>
      %c0_37 = arith.constant 0 : index
      %c0_38 = arith.constant 0 : index
      %66 = vector.load %arg8[%c0_37, %c0_38] : memref<8x8xf32, #tpu.memory_space<vmem>>, vector<8x8xf32>
      tpu.vector_store %arg8[%c0_37, %c0_38], %65 {strides = array<i32>} : memref<8x8xf32, #tpu.memory_space<vmem>>, vector<8x8xf32>,
      %cst_39 = arith.constant 0.000000e+00 : f32
      %67 = vector.broadcast %cst_39 : f32 to vector<8x8xf32>
      %c0_40 = arith.constant 0 : index
      %c0_41 = arith.constant 0 : index
      %68 = vector.load %arg9[%c0_40, %c0_41] : memref<8x8xf32, #tpu.memory_space<vmem>>, vector<8x8xf32>
      tpu.vector_store %arg9[%c0_40, %c0_41], %67 {strides = array<i32>} : memref<8x8xf32, #tpu.memory_space<vmem>>, vector<8x8xf32>,
      %cst_42 = arith.constant 0.000000e+00 : f32
      %69 = vector.broadcast %cst_42 : f32 to vector<8x8xf32>
      %c0_43 = arith.constant 0 : index
      %c0_44 = arith.constant 0 : index
      %70 = vector.load %arg10[%c0_43, %c0_44] : memref<8x8xf32, #tpu.memory_space<vmem>>, vector<8x8xf32>
      tpu.vector_store %arg10[%c0_43, %c0_44], %69 {strides = array<i32>} : memref<8x8xf32, #tpu.memory_space<vmem>>, vector<8x8xf32>,
      %cst_45 = arith.constant 0.000000e+00 : f32
      %71 = vector.broadcast %cst_45 : f32 to vector<8x1xf32>
      %c0_46 = arith.constant 0 : index
      %c0_47 = arith.constant 0 : index
      %72 = vector.load %arg11[%c0_46, %c0_47] : memref<8x1xf32, #tpu.memory_space<vmem>>, vector<8x1xf32>
      tpu.vector_store %arg11[%c0_46, %c0_47], %71 {strides = array<i32>} : memref<8x1xf32, #tpu.memory_space<vmem>>, vector<8x1xf32>,
    } else {
    }
    %c0 = arith.constant 0 : index
    %c0_1 = arith.constant 0 : index
    %3 = vector.load %arg1[%c0, %c0_1] : memref<1x32xi32, #tpu.memory_space<vmem>>, vector<1x32xi32>
    %4 = tpu.iota {dimensions = array<i32: 0>} : vector<8x1xi32>
    %5 = vector.broadcast %4 : vector<8x1xi32> to vector<8x32xi32>
    %6 = vector.broadcast %3 : vector<1x32xi32> to vector<8x32xi32>
    %7 = arith.cmpi eq, %5, %6 : vector<8x32xi32>
    %8 = arith.extui %7 : vector<8x32xi1> to vector<8x32xi32>
    %9 = arith.sitofp %8 : vector<8x32xi32> to vector<8x32xf32>
    %c0_2 = arith.constant 0 : index
    %c0_3 = arith.constant 0 : index
    %10 = vector.load %arg4[%c0_2, %c0_3] : memref<32x1xf32, #tpu.memory_space<vmem>>, vector<32x1xf32>
    %cst = arith.constant 2.500000e-01 : f32
    %11 = vector.broadcast %cst : f32 to vector<32x1xf32>
    %12 = arith.mulf %10, %11 : vector<32x1xf32>
    %13 = arith.mulf %12, %12 : vector<32x1xf32>
    %14 = arith.mulf %13, %13 : vector<32x1xf32>
    %15 = arith.mulf %13, %14 : vector<32x1xf32>
    %16 = arith.mulf %15, %12 : vector<32x1xf32>
    %17 = arith.mulf %16, %12 : vector<32x1xf32>
    %cst_4 = arith.constant 2.800000e+01 : f32
    %18 = vector.broadcast %cst_4 : f32 to vector<32x1xf32>
    %19 = arith.mulf %18, %15 : vector<32x1xf32>
    %cst_5 = arith.constant 1.000000e+00 : f32
    %20 = vector.broadcast %cst_5 : f32 to vector<32x1xf32>
    %21 = arith.subf %20, %19 : vector<32x1xf32>
    %cst_6 = arith.constant 4.800000e+01 : f32
    %22 = vector.broadcast %cst_6 : f32 to vector<32x1xf32>
    %23 = arith.mulf %22, %16 : vector<32x1xf32>
    %24 = arith.addf %21, %23 : vector<32x1xf32>
    %cst_7 = arith.constant 2.100000e+01 : f32
    %25 = vector.broadcast %cst_7 : f32 to vector<32x1xf32>
    %26 = arith.mulf %25, %17 : vector<32x1xf32>
    %27 = arith.subf %24, %26 : vector<32x1xf32>
    %cst_8 = arith.constant 1.000000e+00 : f32
    %28 = vector.broadcast %cst_8 : f32 to vector<32x1xf32>
    %29 = arith.cmpf olt, %12, %28 : vector<32x1xf32>
    %cst_9 = arith.constant 0.000000e+00 : f32
    %30 = vector.broadcast %cst_9 : f32 to vector<32x1xf32>
    %31 = arith.select %29, %27, %30 : vector<32x1xi1>, vector<32x1xf32>
    %c0_10 = arith.constant 0 : index
    %c0_11 = arith.constant 0 : index
    %32 = vector.load %arg2[%c0_10, %c0_11] : memref<32x8xf32, #tpu.memory_space<vmem>>, vector<32x8xf32>
    %c0_12 = arith.constant 0 : index
    %c0_13 = arith.constant 0 : index
    %33 = vector.load %arg3[%c0_12, %c0_13] : memref<32x3xf32, #tpu.memory_space<vmem>>, vector<32x3xf32>
    %34 = vector.broadcast %31 : vector<32x1xf32> to vector<32x3xf32>
    %35 = arith.mulf %33, %34 : vector<32x3xf32>
    %c0_14 = arith.constant 0 : index
    %c0_15 = arith.constant 0 : index
    %36 = vector.load %arg8[%c0_14, %c0_15] : memref<8x8xf32, #tpu.memory_space<vmem>>, vector<8x8xf32>
    %37 = vector.extract_strided_slice %35 {offsets = [0, 0], sizes = [32, 1], strides = [1, 1]} : vector<32x3xf32> to vector<32x1xf32>
    %38 = vector.broadcast %37 : vector<32x1xf32> to vector<32x8xf32>
    %39 = arith.mulf %38, %32 : vector<32x8xf32>
    %cst_16 = arith.constant dense<0.000000e+00> : vector<8x8xf32>
    %40 = tpu.matmul %9, %39, %cst_16 {dimension_numbers = #tpu.dot_dimension_numbers<[1], [0], [0], [1], [0, 0, 1, 1], [], []>} : vector<8x32xf32>, vector<32x8xf32>, vector<8x8xf32> -> vector<8x8xf32>
    %41 = arith.addf %36, %40 : vector<8x8xf32>
    %c0_17 = arith.constant 0 : index
    %c0_18 = arith.constant 0 : index
    %42 = vector.load %arg8[%c0_17, %c0_18] : memref<8x8xf32, #tpu.memory_space<vmem>>, vector<8x8xf32>
    tpu.vector_store %arg8[%c0_17, %c0_18], %41 {strides = array<i32>} : memref<8x8xf32, #tpu.memory_space<vmem>>, vector<8x8xf32>,
    %c0_19 = arith.constant 0 : index
    %c0_20 = arith.constant 0 : index
    %43 = vector.load %arg9[%c0_19, %c0_20] : memref<8x8xf32, #tpu.memory_space<vmem>>, vector<8x8xf32>
    %44 = vector.extract_strided_slice %35 {offsets = [0, 1], sizes = [32, 1], strides = [1, 1]} : vector<32x3xf32> to vector<32x1xf32>
    %45 = vector.broadcast %44 : vector<32x1xf32> to vector<32x8xf32>
    %46 = arith.mulf %45, %32 : vector<32x8xf32>
    %cst_21 = arith.constant dense<0.000000e+00> : vector<8x8xf32>
    %47 = tpu.matmul %9, %46, %cst_21 {dimension_numbers = #tpu.dot_dimension_numbers<[1], [0], [0], [1], [0, 0, 1, 1], [], []>} : vector<8x32xf32>, vector<32x8xf32>, vector<8x8xf32> -> vector<8x8xf32>
    %48 = arith.addf %43, %47 : vector<8x8xf32>
    %c0_22 = arith.constant 0 : index
    %c0_23 = arith.constant 0 : index
    %49 = vector.load %arg9[%c0_22, %c0_23] : memref<8x8xf32, #tpu.memory_space<vmem>>, vector<8x8xf32>
    tpu.vector_store %arg9[%c0_22, %c0_23], %48 {strides = array<i32>} : memref<8x8xf32, #tpu.memory_space<vmem>>, vector<8x8xf32>,
    %c0_24 = arith.constant 0 : index
    %c0_25 = arith.constant 0 : index
    %50 = vector.load %arg10[%c0_24, %c0_25] : memref<8x8xf32, #tpu.memory_space<vmem>>, vector<8x8xf32>
    %51 = vector.extract_strided_slice %35 {offsets = [0, 2], sizes = [32, 1], strides = [1, 1]} : vector<32x3xf32> to vector<32x1xf32>
    %52 = vector.broadcast %51 : vector<32x1xf32> to vector<32x8xf32>
    %53 = arith.mulf %52, %32 : vector<32x8xf32>
    %cst_26 = arith.constant dense<0.000000e+00> : vector<8x8xf32>
    %54 = tpu.matmul %9, %53, %cst_26 {dimension_numbers = #tpu.dot_dimension_numbers<[1], [0], [0], [1], [0, 0, 1, 1], [], []>} : vector<8x32xf32>, vector<32x8xf32>, vector<8x8xf32> -> vector<8x8xf32>
    %55 = arith.addf %50, %54 : vector<8x8xf32>
    %c0_27 = arith.constant 0 : index
    %c0_28 = arith.constant 0 : index
    %56 = vector.load %arg10[%c0_27, %c0_28] : memref<8x8xf32, #tpu.memory_space<vmem>>, vector<8x8xf32>
    tpu.vector_store %arg10[%c0_27, %c0_28], %55 {strides = array<i32>} : memref<8x8xf32, #tpu.memory_space<vmem>>, vector<8x8xf32>,
    %c0_29 = arith.constant 0 : index
    %c0_30 = arith.constant 0 : index
    %57 = vector.load %arg11[%c0_29, %c0_30] : memref<8x1xf32, #tpu.memory_space<vmem>>, vector<8x1xf32>
    %cst_31 = arith.constant dense<0.000000e+00> : vector<8xf32>
    %58 = vector.multi_reduction <add>, %9, %cst_31 [1] : vector<8x32xf32> to vector<8xf32>
    %59 = vector.shape_cast %58 : vector<8xf32> to vector<8x1xf32>
    %60 = arith.addf %57, %59 : vector<8x1xf32>
    %c0_32 = arith.constant 0 : index
    %c0_33 = arith.constant 0 : index
    %61 = vector.load %arg11[%c0_32, %c0_33] : memref<8x1xf32, #tpu.memory_space<vmem>>, vector<8x1xf32>
    tpu.vector_store %arg11[%c0_32, %c0_33], %60 {strides = array<i32>} : memref<8x1xf32, #tpu.memory_space<vmem>>, vector<8x1xf32>,
    %c0_i32_34 = arith.constant 0 : i32
    %62 = arith.cmpi eq, %arg0, %c0_i32_34 : i32
    %63 = arith.extui %62 : i1 to i32
    %c0_i32_35 = arith.constant 0 : i32
    %64 = arith.cmpi ne, %63, %c0_i32_35 : i32
    scf.if %64 {
      %c0_36 = arith.constant 0 : index
      %c0_37 = arith.constant 0 : index
      %65 = vector.load %arg11[%c0_36, %c0_37] : memref<8x1xf32, #tpu.memory_space<vmem>>, vector<8x1xf32>
      %cst_38 = arith.constant 1.000000e+00 : f32
      %66 = vector.broadcast %cst_38 : f32 to vector<8x1xf32>
      %67 = arith.maximumf %65, %66 : vector<8x1xf32>
      %cst_39 = arith.constant 1.000000e+00 : f32
      %68 = vector.broadcast %cst_39 : f32 to vector<8x1xf32>
      %69 = arith.divf %68, %67 : vector<8x1xf32>
      %c0_40 = arith.constant 0 : index
      %c0_41 = arith.constant 0 : index
      %70 = vector.load %arg8[%c0_40, %c0_41] : memref<8x8xf32, #tpu.memory_space<vmem>>, vector<8x8xf32>
      %71 = vector.broadcast %69 : vector<8x1xf32> to vector<8x8xf32>
      %72 = arith.mulf %70, %71 : vector<8x8xf32>
      %c0_42 = arith.constant 0 : index
      %c0_43 = arith.constant 0 : index
      %73 = vector.load %arg9[%c0_42, %c0_43] : memref<8x8xf32, #tpu.memory_space<vmem>>, vector<8x8xf32>
      %74 = vector.broadcast %69 : vector<8x1xf32> to vector<8x8xf32>
      %75 = arith.mulf %73, %74 : vector<8x8xf32>
      %c0_44 = arith.constant 0 : index
      %c0_45 = arith.constant 0 : index
      %76 = vector.load %arg10[%c0_44, %c0_45] : memref<8x8xf32, #tpu.memory_space<vmem>>, vector<8x8xf32>
      %77 = vector.broadcast %69 : vector<8x1xf32> to vector<8x8xf32>
      %78 = arith.mulf %76, %77 : vector<8x8xf32>
      %79 = vector.extract_strided_slice %72 {offsets = [0, 0], sizes = [8, 1], strides = [1, 1]} : vector<8x8xf32> to vector<8x1xf32>
      %80 = vector.extract_strided_slice %72 {offsets = [0, 0], sizes = [8, 4], strides = [1, 1]} : vector<8x8xf32> to vector<8x4xf32>
      %81 = vector.broadcast %79 : vector<8x1xf32> to vector<8x4xf32>
      %82 = arith.mulf %81, %80 : vector<8x4xf32>
      %83 = vector.extract_strided_slice %75 {offsets = [0, 0], sizes = [8, 1], strides = [1, 1]} : vector<8x8xf32> to vector<8x1xf32>
      %84 = vector.extract_strided_slice %75 {offsets = [0, 0], sizes = [8, 4], strides = [1, 1]} : vector<8x8xf32> to vector<8x4xf32>
      %85 = vector.broadcast %83 : vector<8x1xf32> to vector<8x4xf32>
      %86 = arith.mulf %85, %84 : vector<8x4xf32>
      %87 = arith.addf %82, %86 : vector<8x4xf32>
      %88 = vector.extract_strided_slice %78 {offsets = [0, 0], sizes = [8, 1], strides = [1, 1]} : vector<8x8xf32> to vector<8x1xf32>
      %89 = vector.extract_strided_slice %78 {offsets = [0, 0], sizes = [8, 4], strides = [1, 1]} : vector<8x8xf32> to vector<8x4xf32>
      %90 = vector.broadcast %88 : vector<8x1xf32> to vector<8x4xf32>
      %91 = arith.mulf %90, %89 : vector<8x4xf32>
      %92 = arith.addf %87, %91 : vector<8x4xf32>
      %93 = vector.extract_strided_slice %72 {offsets = [0, 1], sizes = [8, 1], strides = [1, 1]} : vector<8x8xf32> to vector<8x1xf32>
      %94 = vector.extract_strided_slice %72 {offsets = [0, 0], sizes = [8, 4], strides = [1, 1]} : vector<8x8xf32> to vector<8x4xf32>
      %95 = vector.broadcast %93 : vector<8x1xf32> to vector<8x4xf32>
      %96 = arith.mulf %95, %94 : vector<8x4xf32>
      %97 = vector.extract_strided_slice %75 {offsets = [0, 1], sizes = [8, 1], strides = [1, 1]} : vector<8x8xf32> to vector<8x1xf32>
      %98 = vector.extract_strided_slice %75 {offsets = [0, 0], sizes = [8, 4], strides = [1, 1]} : vector<8x8xf32> to vector<8x4xf32>
      %99 = vector.broadcast %97 : vector<8x1xf32> to vector<8x4xf32>
      %100 = arith.mulf %99, %98 : vector<8x4xf32>
      %101 = arith.addf %96, %100 : vector<8x4xf32>
      %102 = vector.extract_strided_slice %78 {offsets = [0, 1], sizes = [8, 1], strides = [1, 1]} : vector<8x8xf32> to vector<8x1xf32>
      %103 = vector.extract_strided_slice %78 {offsets = [0, 0], sizes = [8, 4], strides = [1, 1]} : vector<8x8xf32> to vector<8x4xf32>
      %104 = vector.broadcast %102 : vector<8x1xf32> to vector<8x4xf32>
      %105 = arith.mulf %104, %103 : vector<8x4xf32>
      %106 = arith.addf %101, %105 : vector<8x4xf32>
      %107 = vector.extract_strided_slice %72 {offsets = [0, 2], sizes = [8, 1], strides = [1, 1]} : vector<8x8xf32> to vector<8x1xf32>
      %108 = vector.extract_strided_slice %72 {offsets = [0, 0], sizes = [8, 4], strides = [1, 1]} : vector<8x8xf32> to vector<8x4xf32>
      %109 = vector.broadcast %107 : vector<8x1xf32> to vector<8x4xf32>
      %110 = arith.mulf %109, %108 : vector<8x4xf32>
      %111 = vector.extract_strided_slice %75 {offsets = [0, 2], sizes = [8, 1], strides = [1, 1]} : vector<8x8xf32> to vector<8x1xf32>
      %112 = vector.extract_strided_slice %75 {offsets = [0, 0], sizes = [8, 4], strides = [1, 1]} : vector<8x8xf32> to vector<8x4xf32>
      %113 = vector.broadcast %111 : vector<8x1xf32> to vector<8x4xf32>
      %114 = arith.mulf %113, %112 : vector<8x4xf32>
      %115 = arith.addf %110, %114 : vector<8x4xf32>
      %116 = vector.extract_strided_slice %78 {offsets = [0, 2], sizes = [8, 1], strides = [1, 1]} : vector<8x8xf32> to vector<8x1xf32>
      %117 = vector.extract_strided_slice %78 {offsets = [0, 0], sizes = [8, 4], strides = [1, 1]} : vector<8x8xf32> to vector<8x4xf32>
      %118 = vector.broadcast %116 : vector<8x1xf32> to vector<8x4xf32>
      %119 = arith.mulf %118, %117 : vector<8x4xf32>
      %120 = arith.addf %115, %119 : vector<8x4xf32>
      %121 = vector.extract_strided_slice %72 {offsets = [0, 3], sizes = [8, 1], strides = [1, 1]} : vector<8x8xf32> to vector<8x1xf32>
      %122 = vector.extract_strided_slice %72 {offsets = [0, 0], sizes = [8, 4], strides = [1, 1]} : vector<8x8xf32> to vector<8x4xf32>
      %123 = vector.broadcast %121 : vector<8x1xf32> to vector<8x4xf32>
      %124 = arith.mulf %123, %122 : vector<8x4xf32>
      %125 = vector.extract_strided_slice %75 {offsets = [0, 3], sizes = [8, 1], strides = [1, 1]} : vector<8x8xf32> to vector<8x1xf32>
      %126 = vector.extract_strided_slice %75 {offsets = [0, 0], sizes = [8, 4], strides = [1, 1]} : vector<8x8xf32> to vector<8x4xf32>
      %127 = vector.broadcast %125 : vector<8x1xf32> to vector<8x4xf32>
      %128 = arith.mulf %127, %126 : vector<8x4xf32>
      %129 = arith.addf %124, %128 : vector<8x4xf32>
      %130 = vector.extract_strided_slice %78 {offsets = [0, 3], sizes = [8, 1], strides = [1, 1]} : vector<8x8xf32> to vector<8x1xf32>
      %131 = vector.extract_strided_slice %78 {offsets = [0, 0], sizes = [8, 4], strides = [1, 1]} : vector<8x8xf32> to vector<8x4xf32>
      %132 = vector.broadcast %130 : vector<8x1xf32> to vector<8x4xf32>
      %133 = arith.mulf %132, %131 : vector<8x4xf32>
      %134 = arith.addf %129, %133 : vector<8x4xf32>
      %135 = vector.extract_strided_slice %72 {offsets = [0, 4], sizes = [8, 1], strides = [1, 1]} : vector<8x8xf32> to vector<8x1xf32>
      %136 = vector.extract_strided_slice %72 {offsets = [0, 0], sizes = [8, 4], strides = [1, 1]} : vector<8x8xf32> to vector<8x4xf32>
      %137 = vector.broadcast %135 : vector<8x1xf32> to vector<8x4xf32>
      %138 = arith.mulf %137, %136 : vector<8x4xf32>
      %139 = vector.extract_strided_slice %75 {offsets = [0, 4], sizes = [8, 1], strides = [1, 1]} : vector<8x8xf32> to vector<8x1xf32>
      %140 = vector.extract_strided_slice %75 {offsets = [0, 0], sizes = [8, 4], strides = [1, 1]} : vector<8x8xf32> to vector<8x4xf32>
      %141 = vector.broadcast %139 : vector<8x1xf32> to vector<8x4xf32>
      %142 = arith.mulf %141, %140 : vector<8x4xf32>
      %143 = arith.addf %138, %142 : vector<8x4xf32>
      %144 = vector.extract_strided_slice %78 {offsets = [0, 4], sizes = [8, 1], strides = [1, 1]} : vector<8x8xf32> to vector<8x1xf32>
      %145 = vector.extract_strided_slice %78 {offsets = [0, 0], sizes = [8, 4], strides = [1, 1]} : vector<8x8xf32> to vector<8x4xf32>
      %146 = vector.broadcast %144 : vector<8x1xf32> to vector<8x4xf32>
      %147 = arith.mulf %146, %145 : vector<8x4xf32>
      %148 = arith.addf %143, %147 : vector<8x4xf32>
      %149 = vector.extract_strided_slice %72 {offsets = [0, 5], sizes = [8, 1], strides = [1, 1]} : vector<8x8xf32> to vector<8x1xf32>
      %150 = vector.extract_strided_slice %72 {offsets = [0, 0], sizes = [8, 4], strides = [1, 1]} : vector<8x8xf32> to vector<8x4xf32>
      %151 = vector.broadcast %149 : vector<8x1xf32> to vector<8x4xf32>
      %152 = arith.mulf %151, %150 : vector<8x4xf32>
      %153 = vector.extract_strided_slice %75 {offsets = [0, 5], sizes = [8, 1], strides = [1, 1]} : vector<8x8xf32> to vector<8x1xf32>
      %154 = vector.extract_strided_slice %75 {offsets = [0, 0], sizes = [8, 4], strides = [1, 1]} : vector<8x8xf32> to vector<8x4xf32>
      %155 = vector.broadcast %153 : vector<8x1xf32> to vector<8x4xf32>
      %156 = arith.mulf %155, %154 : vector<8x4xf32>
      %157 = arith.addf %152, %156 : vector<8x4xf32>
      %158 = vector.extract_strided_slice %78 {offsets = [0, 5], sizes = [8, 1], strides = [1, 1]} : vector<8x8xf32> to vector<8x1xf32>
      %159 = vector.extract_strided_slice %78 {offsets = [0, 0], sizes = [8, 4], strides = [1, 1]} : vector<8x8xf32> to vector<8x4xf32>
      %160 = vector.broadcast %158 : vector<8x1xf32> to vector<8x4xf32>
      %161 = arith.mulf %160, %159 : vector<8x4xf32>
      %162 = arith.addf %157, %161 : vector<8x4xf32>
      %163 = vector.extract_strided_slice %72 {offsets = [0, 6], sizes = [8, 1], strides = [1, 1]} : vector<8x8xf32> to vector<8x1xf32>
      %164 = vector.extract_strided_slice %72 {offsets = [0, 0], sizes = [8, 4], strides = [1, 1]} : vector<8x8xf32> to vector<8x4xf32>
      %165 = vector.broadcast %163 : vector<8x1xf32> to vector<8x4xf32>
      %166 = arith.mulf %165, %164 : vector<8x4xf32>
      %167 = vector.extract_strided_slice %75 {offsets = [0, 6], sizes = [8, 1], strides = [1, 1]} : vector<8x8xf32> to vector<8x1xf32>
      %168 = vector.extract_strided_slice %75 {offsets = [0, 0], sizes = [8, 4], strides = [1, 1]} : vector<8x8xf32> to vector<8x4xf32>
      %169 = vector.broadcast %167 : vector<8x1xf32> to vector<8x4xf32>
      %170 = arith.mulf %169, %168 : vector<8x4xf32>
      %171 = arith.addf %166, %170 : vector<8x4xf32>
      %172 = vector.extract_strided_slice %78 {offsets = [0, 6], sizes = [8, 1], strides = [1, 1]} : vector<8x8xf32> to vector<8x1xf32>
      %173 = vector.extract_strided_slice %78 {offsets = [0, 0], sizes = [8, 4], strides = [1, 1]} : vector<8x8xf32> to vector<8x4xf32>
      %174 = vector.broadcast %172 : vector<8x1xf32> to vector<8x4xf32>
      %175 = arith.mulf %174, %173 : vector<8x4xf32>
      %176 = arith.addf %171, %175 : vector<8x4xf32>
      %177 = vector.extract_strided_slice %72 {offsets = [0, 7], sizes = [8, 1], strides = [1, 1]} : vector<8x8xf32> to vector<8x1xf32>
      %178 = vector.extract_strided_slice %72 {offsets = [0, 0], sizes = [8, 4], strides = [1, 1]} : vector<8x8xf32> to vector<8x4xf32>
      %179 = vector.broadcast %177 : vector<8x1xf32> to vector<8x4xf32>
      %180 = arith.mulf %179, %178 : vector<8x4xf32>
      %181 = vector.extract_strided_slice %75 {offsets = [0, 7], sizes = [8, 1], strides = [1, 1]} : vector<8x8xf32> to vector<8x1xf32>
      %182 = vector.extract_strided_slice %75 {offsets = [0, 0], sizes = [8, 4], strides = [1, 1]} : vector<8x8xf32> to vector<8x4xf32>
      %183 = vector.broadcast %181 : vector<8x1xf32> to vector<8x4xf32>
      %184 = arith.mulf %183, %182 : vector<8x4xf32>
      %185 = arith.addf %180, %184 : vector<8x4xf32>
      %186 = vector.extract_strided_slice %78 {offsets = [0, 7], sizes = [8, 1], strides = [1, 1]} : vector<8x8xf32> to vector<8x1xf32>
      %187 = vector.extract_strided_slice %78 {offsets = [0, 0], sizes = [8, 4], strides = [1, 1]} : vector<8x8xf32> to vector<8x4xf32>
      %188 = vector.broadcast %186 : vector<8x1xf32> to vector<8x4xf32>
      %189 = arith.mulf %188, %187 : vector<8x4xf32>
      %190 = arith.addf %185, %189 : vector<8x4xf32>
      %191 = tpu.concatenate %92, %106, %120, %134, %148, %162, %176, %190 in 1 : vector<8x4xf32>, vector<8x4xf32>, vector<8x4xf32>, vector<8x4xf32>, vector<8x4xf32>, vector<8x4xf32>, vector<8x4xf32>, vector<8x4xf32> -> vector<8x32xf32>
      %c0_46 = arith.constant 0 : index
      %c0_47 = arith.constant 0 : index
      %192 = vector.load %arg5[%c0_46, %c0_47] : memref<1x32xf32, #tpu.memory_space<vmem>>, vector<1x32xf32>
      %c0_48 = arith.constant 0 : index
      %c0_49 = arith.constant 0 : index
      %193 = vector.load %arg6[%c0_48, %c0_49] : memref<1x32xf32, #tpu.memory_space<vmem>>, vector<1x32xf32>
      %cst_50 = arith.constant dense<0.000000e+00> : vector<8xf32>
      %194 = vector.multi_reduction <add>, %191, %cst_50 [1] : vector<8x32xf32> to vector<8xf32>
      %195 = vector.shape_cast %194 : vector<8xf32> to vector<8x1xf32>
      %cst_51 = arith.constant 3.200000e+01 : f32
      %196 = vector.broadcast %cst_51 : f32 to vector<8x1xf32>
      %197 = arith.divf %195, %196 : vector<8x1xf32>
      %198 = vector.broadcast %197 : vector<8x1xf32> to vector<8x32xf32>
      %199 = arith.subf %191, %198 : vector<8x32xf32>
      %200 = arith.mulf %199, %199 : vector<8x32xf32>
      %cst_52 = arith.constant dense<0.000000e+00> : vector<8xf32>
      %201 = vector.multi_reduction <add>, %200, %cst_52 [1] : vector<8x32xf32> to vector<8xf32>
      %202 = vector.shape_cast %201 : vector<8xf32> to vector<8x1xf32>
      %cst_53 = arith.constant 3.200000e+01 : f32
      %203 = vector.broadcast %cst_53 : f32 to vector<8x1xf32>
      %204 = arith.divf %202, %203 : vector<8x1xf32>
      %cst_54 = arith.constant 9.99999974E-6 : f32
      %205 = vector.broadcast %cst_54 : f32 to vector<8x1xf32>
      %206 = arith.addf %204, %205 : vector<8x1xf32>
      %207 = math.rsqrt %206 : vector<8x1xf32>
      %208 = vector.broadcast %207 : vector<8x1xf32> to vector<8x32xf32>
      %209 = arith.mulf %199, %208 : vector<8x32xf32>
      %210 = vector.broadcast %192 : vector<1x32xf32> to vector<8x32xf32>
      %211 = arith.mulf %209, %210 : vector<8x32xf32>
      %212 = vector.broadcast %193 : vector<1x32xf32> to vector<8x32xf32>
      %213 = arith.addf %211, %212 : vector<8x32xf32>
      %c0_55 = arith.constant 0 : index
      %c0_56 = arith.constant 0 : index
      %214 = vector.load %arg7[%c0_55, %c0_56] : memref<8x32xf32, #tpu.memory_space<vmem>>, vector<8x32xf32>
      tpu.vector_store %arg7[%c0_55, %c0_56], %213 {strides = array<i32>} : memref<8x32xf32, #tpu.memory_space<vmem>>, vector<8x32xf32>,
    } else {
    }
    return
  }
  func.func @transform_0(%arg0: i32) -> (i32, i32) {
    %c0_i32 = arith.constant 0 : i32
    %c0_i32_0 = arith.constant 0 : i32
    return %c0_i32, %arg0 : i32, i32
  }
  func.func @transform_1(%arg0: i32) -> (i32, i32) {
    %c0_i32 = arith.constant 0 : i32
    %c0_i32_0 = arith.constant 0 : i32
    return %arg0, %c0_i32 : i32, i32
  }
  func.func @transform_2(%arg0: i32) -> (i32, i32) {
    %c0_i32 = arith.constant 0 : i32
    %c0_i32_0 = arith.constant 0 : i32
    return %arg0, %c0_i32 : i32, i32
  }
  func.func @transform_3(%arg0: i32) -> (i32, i32) {
    %c0_i32 = arith.constant 0 : i32
    %c0_i32_0 = arith.constant 0 : i32
    return %arg0, %c0_i32 : i32, i32
  }
  func.func @transform_4(%arg0: i32) -> (i32, i32) {
    %c0_i32 = arith.constant 0 : i32
    %c0_i32_0 = arith.constant 0 : i32
    %c0_i32_1 = arith.constant 0 : i32
    return %c0_i32, %c0_i32_0 : i32, i32
  }
  func.func @transform_5(%arg0: i32) -> (i32, i32) {
    %c0_i32 = arith.constant 0 : i32
    %c0_i32_0 = arith.constant 0 : i32
    %c0_i32_1 = arith.constant 0 : i32
    return %c0_i32, %c0_i32_0 : i32, i32
  }
  func.func @transform_6(%arg0: i32) -> (i32, i32) {
    %c0_i32 = arith.constant 0 : i32
    %c0_i32_0 = arith.constant 0 : i32
    %c0_i32_1 = arith.constant 0 : i32
    return %c0_i32, %c0_i32_0 : i32, i32
  }
}

module attributes {stable_mosaic.version = 11 : i64} {
  func.func @_node_hidden_kernel(%arg0: i32, %arg1: memref<48x16xf32, #tpu.memory_space<vmem>>, %arg2: memref<48x1xi32, #tpu.memory_space<vmem>>, %arg3: memref<48x1xi32, #tpu.memory_space<vmem>>, %arg4: memref<8x32xf32, #tpu.memory_space<vmem>>, %arg5: memref<16x32xf32, #tpu.memory_space<vmem>>, %arg6: memref<1x32xf32, #tpu.memory_space<vmem>>, %arg7: memref<48x32xf32, #tpu.memory_space<vmem>>) attributes {dimension_semantics = [#tpu.dimension_semantics<parallel>], iteration_bounds = array<i64: 1>, scalar_prefetch = 0 : i64, scratch_operands = 0 : i64, tpu.core_type = #tpu.core_type<tc>, window_params = [{transform_indices = @transform_0, window_bounds = array<i64: 48, 16>}, {transform_indices = @transform_1, window_bounds = array<i64: 48, 1>}, {transform_indices = @transform_2, window_bounds = array<i64: 48, 1>}, {pipeline_mode = #tpu.pipeline_mode<synchronous>, transform_indices = @transform_3, window_bounds = array<i64: 8, 32>}, {pipeline_mode = #tpu.pipeline_mode<synchronous>, transform_indices = @transform_4, window_bounds = array<i64: 16, 32>}, {pipeline_mode = #tpu.pipeline_mode<synchronous>, transform_indices = @transform_5, window_bounds = array<i64: 1, 32>}, {transform_indices = @transform_6, window_bounds = array<i64: 48, 32>}]} {
    %0 = tpu.iota {dimensions = array<i32: 1>} : vector<1x8xi32>
    %c0 = arith.constant 0 : index
    %c0_0 = arith.constant 0 : index
    %1 = vector.load %arg2[%c0, %c0_0] : memref<48x1xi32, #tpu.memory_space<vmem>>, vector<48x1xi32>
    %2 = vector.broadcast %0 : vector<1x8xi32> to vector<48x8xi32>
    %3 = vector.broadcast %1 : vector<48x1xi32> to vector<48x8xi32>
    %4 = arith.cmpi eq, %2, %3 : vector<48x8xi32>
    %5 = arith.extui %4 : vector<48x8xi1> to vector<48x8xi32>
    %6 = arith.sitofp %5 : vector<48x8xi32> to vector<48x8xf32>
    %c0_1 = arith.constant 0 : index
    %c0_2 = arith.constant 0 : index
    %7 = vector.load %arg3[%c0_1, %c0_2] : memref<48x1xi32, #tpu.memory_space<vmem>>, vector<48x1xi32>
    %8 = vector.broadcast %0 : vector<1x8xi32> to vector<48x8xi32>
    %9 = vector.broadcast %7 : vector<48x1xi32> to vector<48x8xi32>
    %10 = arith.cmpi eq, %8, %9 : vector<48x8xi32>
    %11 = arith.extui %10 : vector<48x8xi1> to vector<48x8xi32>
    %12 = arith.sitofp %11 : vector<48x8xi32> to vector<48x8xf32>
    %13 = arith.addf %6, %12 : vector<48x8xf32>
    %c0_3 = arith.constant 0 : index
    %c0_4 = arith.constant 0 : index
    %14 = vector.load %arg4[%c0_3, %c0_4] : memref<8x32xf32, #tpu.memory_space<vmem>>, vector<8x32xf32>
    %cst = arith.constant dense<0.000000e+00> : vector<48x32xf32>
    %15 = tpu.matmul %13, %14, %cst {dimension_numbers = #tpu.dot_dimension_numbers<[1], [0], [0], [1], [0, 0, 1, 1], [], []>} : vector<48x8xf32>, vector<8x32xf32>, vector<48x32xf32> -> vector<48x32xf32>
    %cst_5 = arith.constant 5.000000e-01 : f32
    %16 = vector.broadcast %cst_5 : f32 to vector<48x32xf32>
    %17 = arith.mulf %16, %15 : vector<48x32xf32>
    %c0_6 = arith.constant 0 : index
    %c0_7 = arith.constant 0 : index
    %18 = vector.load %arg1[%c0_6, %c0_7] : memref<48x16xf32, #tpu.memory_space<vmem>>, vector<48x16xf32>
    %c0_8 = arith.constant 0 : index
    %c0_9 = arith.constant 0 : index
    %19 = vector.load %arg5[%c0_8, %c0_9] : memref<16x32xf32, #tpu.memory_space<vmem>>, vector<16x32xf32>
    %cst_10 = arith.constant dense<0.000000e+00> : vector<48x32xf32>
    %20 = tpu.matmul %18, %19, %cst_10 {dimension_numbers = #tpu.dot_dimension_numbers<[1], [0], [0], [1], [0, 0, 1, 1], [], []>} : vector<48x16xf32>, vector<16x32xf32>, vector<48x32xf32> -> vector<48x32xf32>
    %c0_11 = arith.constant 0 : index
    %c0_12 = arith.constant 0 : index
    %21 = vector.load %arg6[%c0_11, %c0_12] : memref<1x32xf32, #tpu.memory_space<vmem>>, vector<1x32xf32>
    %22 = vector.broadcast %21 : vector<1x32xf32> to vector<48x32xf32>
    %23 = arith.addf %20, %22 : vector<48x32xf32>
    %24 = arith.mulf %23, %17 : vector<48x32xf32>
    %c0_13 = arith.constant 0 : index
    %c0_14 = arith.constant 0 : index
    %25 = vector.load %arg7[%c0_13, %c0_14] : memref<48x32xf32, #tpu.memory_space<vmem>>, vector<48x32xf32>
    tpu.vector_store %arg7[%c0_13, %c0_14], %24 {strides = array<i32>} : memref<48x32xf32, #tpu.memory_space<vmem>>, vector<48x32xf32>,
    return
  }
  func.func @transform_0(%arg0: i32) -> (i32, i32) {
    %c0_i32 = arith.constant 0 : i32
    %c0_i32_0 = arith.constant 0 : i32
    return %arg0, %c0_i32 : i32, i32
  }
  func.func @transform_1(%arg0: i32) -> (i32, i32) {
    %c0_i32 = arith.constant 0 : i32
    %c0_i32_0 = arith.constant 0 : i32
    return %arg0, %c0_i32 : i32, i32
  }
  func.func @transform_2(%arg0: i32) -> (i32, i32) {
    %c0_i32 = arith.constant 0 : i32
    %c0_i32_0 = arith.constant 0 : i32
    return %arg0, %c0_i32 : i32, i32
  }
  func.func @transform_3(%arg0: i32) -> (i32, i32) {
    %c0_i32 = arith.constant 0 : i32
    %c0_i32_0 = arith.constant 0 : i32
    %c0_i32_1 = arith.constant 0 : i32
    return %c0_i32, %c0_i32_0 : i32, i32
  }
  func.func @transform_4(%arg0: i32) -> (i32, i32) {
    %c0_i32 = arith.constant 0 : i32
    %c0_i32_0 = arith.constant 0 : i32
    %c0_i32_1 = arith.constant 0 : i32
    return %c0_i32, %c0_i32_0 : i32, i32
  }
  func.func @transform_5(%arg0: i32) -> (i32, i32) {
    %c0_i32 = arith.constant 0 : i32
    %c0_i32_0 = arith.constant 0 : i32
    %c0_i32_1 = arith.constant 0 : i32
    return %c0_i32, %c0_i32_0 : i32, i32
  }
  func.func @transform_6(%arg0: i32) -> (i32, i32) {
    %c0_i32 = arith.constant 0 : i32
    %c0_i32_0 = arith.constant 0 : i32
    return %arg0, %c0_i32 : i32, i32
  }
}

module attributes {stable_mosaic.version = 11 : i64} {
  func.func @_layer_aggr_kernel(%arg0: i32, %arg1: memref<1x32xi32, #tpu.memory_space<vmem>>, %arg2: memref<32x1xi32, #tpu.memory_space<vmem>>, %arg3: memref<32x16xf32, #tpu.memory_space<vmem>>, %arg4: memref<8x32xf32, #tpu.memory_space<vmem>>, %arg5: memref<16x32xf32, #tpu.memory_space<vmem>>, %arg6: memref<1x32xf32, #tpu.memory_space<vmem>>, %arg7: memref<1x32xf32, #tpu.memory_space<vmem>>, %arg8: memref<1x32xf32, #tpu.memory_space<vmem>>, %arg9: memref<8x32xf32, #tpu.memory_space<vmem>>, %arg10: memref<8x32xf32, #tpu.memory_space<vmem>>, %arg11: memref<8x1xf32, #tpu.memory_space<vmem>>) attributes {dimension_semantics = [#tpu.dimension_semantics<arbitrary>], iteration_bounds = array<i64: 1>, scalar_prefetch = 0 : i64, scratch_operands = 2 : i64, tpu.core_type = #tpu.core_type<tc>, window_params = [{transform_indices = @transform_0, window_bounds = array<i64: 1, 32>}, {transform_indices = @transform_1, window_bounds = array<i64: 32, 1>}, {transform_indices = @transform_2, window_bounds = array<i64: 32, 16>}, {pipeline_mode = #tpu.pipeline_mode<synchronous>, transform_indices = @transform_3, window_bounds = array<i64: 8, 32>}, {pipeline_mode = #tpu.pipeline_mode<synchronous>, transform_indices = @transform_4, window_bounds = array<i64: 16, 32>}, {pipeline_mode = #tpu.pipeline_mode<synchronous>, transform_indices = @transform_5, window_bounds = array<i64: 1, 32>}, {pipeline_mode = #tpu.pipeline_mode<synchronous>, transform_indices = @transform_6, window_bounds = array<i64: 1, 32>}, {pipeline_mode = #tpu.pipeline_mode<synchronous>, transform_indices = @transform_7, window_bounds = array<i64: 1, 32>}, {pipeline_mode = #tpu.pipeline_mode<synchronous>, transform_indices = @transform_8, window_bounds = array<i64: 8, 32>}]} {
    %c0_i32 = arith.constant 0 : i32
    %0 = arith.cmpi eq, %arg0, %c0_i32 : i32
    %1 = arith.extui %0 : i1 to i32
    %c0_i32_0 = arith.constant 0 : i32
    %2 = arith.cmpi ne, %1, %c0_i32_0 : i32
    scf.if %2 {
      %cst_25 = arith.constant 0.000000e+00 : f32
      %38 = vector.broadcast %cst_25 : f32 to vector<8x32xf32>
      %c0_26 = arith.constant 0 : index
      %c0_27 = arith.constant 0 : index
      %39 = vector.load %arg10[%c0_26, %c0_27] : memref<8x32xf32, #tpu.memory_space<vmem>>, vector<8x32xf32>
      tpu.vector_store %arg10[%c0_26, %c0_27], %38 {strides = array<i32>} : memref<8x32xf32, #tpu.memory_space<vmem>>, vector<8x32xf32>,
      %cst_28 = arith.constant 0.000000e+00 : f32
      %40 = vector.broadcast %cst_28 : f32 to vector<8x1xf32>
      %c0_29 = arith.constant 0 : index
      %c0_30 = arith.constant 0 : index
      %41 = vector.load %arg11[%c0_29, %c0_30] : memref<8x1xf32, #tpu.memory_space<vmem>>, vector<8x1xf32>
      tpu.vector_store %arg11[%c0_29, %c0_30], %40 {strides = array<i32>} : memref<8x1xf32, #tpu.memory_space<vmem>>, vector<8x1xf32>,
    } else {
    }
    %3 = tpu.iota {dimensions = array<i32: 1>} : vector<1x8xi32>
    %c0 = arith.constant 0 : index
    %c0_1 = arith.constant 0 : index
    %4 = vector.load %arg2[%c0, %c0_1] : memref<32x1xi32, #tpu.memory_space<vmem>>, vector<32x1xi32>
    %5 = vector.broadcast %3 : vector<1x8xi32> to vector<32x8xi32>
    %6 = vector.broadcast %4 : vector<32x1xi32> to vector<32x8xi32>
    %7 = arith.cmpi eq, %5, %6 : vector<32x8xi32>
    %8 = arith.extui %7 : vector<32x8xi1> to vector<32x8xi32>
    %9 = arith.sitofp %8 : vector<32x8xi32> to vector<32x8xf32>
    %c0_2 = arith.constant 0 : index
    %c0_3 = arith.constant 0 : index
    %10 = vector.load %arg4[%c0_2, %c0_3] : memref<8x32xf32, #tpu.memory_space<vmem>>, vector<8x32xf32>
    %cst = arith.constant dense<0.000000e+00> : vector<32x32xf32>
    %11 = tpu.matmul %9, %10, %cst {dimension_numbers = #tpu.dot_dimension_numbers<[1], [0], [0], [1], [0, 0, 1, 1], [], []>} : vector<32x8xf32>, vector<8x32xf32>, vector<32x32xf32> -> vector<32x32xf32>
    %c0_4 = arith.constant 0 : index
    %c0_5 = arith.constant 0 : index
    %12 = vector.load %arg3[%c0_4, %c0_5] : memref<32x16xf32, #tpu.memory_space<vmem>>, vector<32x16xf32>
    %c0_6 = arith.constant 0 : index
    %c0_7 = arith.constant 0 : index
    %13 = vector.load %arg5[%c0_6, %c0_7] : memref<16x32xf32, #tpu.memory_space<vmem>>, vector<16x32xf32>
    %cst_8 = arith.constant dense<0.000000e+00> : vector<32x32xf32>
    %14 = tpu.matmul %12, %13, %cst_8 {dimension_numbers = #tpu.dot_dimension_numbers<[1], [0], [0], [1], [0, 0, 1, 1], [], []>} : vector<32x16xf32>, vector<16x32xf32>, vector<32x32xf32> -> vector<32x32xf32>
    %c0_9 = arith.constant 0 : index
    %c0_10 = arith.constant 0 : index
    %15 = vector.load %arg6[%c0_9, %c0_10] : memref<1x32xf32, #tpu.memory_space<vmem>>, vector<1x32xf32>
    %16 = vector.broadcast %15 : vector<1x32xf32> to vector<32x32xf32>
    %17 = arith.addf %14, %16 : vector<32x32xf32>
    %18 = arith.mulf %17, %11 : vector<32x32xf32>
    %19 = tpu.iota {dimensions = array<i32: 0>} : vector<8x1xi32>
    %c0_11 = arith.constant 0 : index
    %c0_12 = arith.constant 0 : index
    %20 = vector.load %arg1[%c0_11, %c0_12] : memref<1x32xi32, #tpu.memory_space<vmem>>, vector<1x32xi32>
    %21 = vector.broadcast %19 : vector<8x1xi32> to vector<8x32xi32>
    %22 = vector.broadcast %20 : vector<1x32xi32> to vector<8x32xi32>
    %23 = arith.cmpi eq, %21, %22 : vector<8x32xi32>
    %24 = arith.extui %23 : vector<8x32xi1> to vector<8x32xi32>
    %25 = arith.sitofp %24 : vector<8x32xi32> to vector<8x32xf32>
    %c0_13 = arith.constant 0 : index
    %c0_14 = arith.constant 0 : index
    %26 = vector.load %arg10[%c0_13, %c0_14] : memref<8x32xf32, #tpu.memory_space<vmem>>, vector<8x32xf32>
    %cst_15 = arith.constant dense<0.000000e+00> : vector<8x32xf32>
    %27 = tpu.matmul %25, %18, %cst_15 {dimension_numbers = #tpu.dot_dimension_numbers<[1], [0], [0], [1], [0, 0, 1, 1], [], []>} : vector<8x32xf32>, vector<32x32xf32>, vector<8x32xf32> -> vector<8x32xf32>
    %28 = arith.addf %26, %27 : vector<8x32xf32>
    %c0_16 = arith.constant 0 : index
    %c0_17 = arith.constant 0 : index
    %29 = vector.load %arg10[%c0_16, %c0_17] : memref<8x32xf32, #tpu.memory_space<vmem>>, vector<8x32xf32>
    tpu.vector_store %arg10[%c0_16, %c0_17], %28 {strides = array<i32>} : memref<8x32xf32, #tpu.memory_space<vmem>>, vector<8x32xf32>,
    %c0_18 = arith.constant 0 : index
    %c0_19 = arith.constant 0 : index
    %30 = vector.load %arg11[%c0_18, %c0_19] : memref<8x1xf32, #tpu.memory_space<vmem>>, vector<8x1xf32>
    %cst_20 = arith.constant dense<0.000000e+00> : vector<8xf32>
    %31 = vector.multi_reduction <add>, %25, %cst_20 [1] : vector<8x32xf32> to vector<8xf32>
    %32 = vector.shape_cast %31 : vector<8xf32> to vector<8x1xf32>
    %33 = arith.addf %30, %32 : vector<8x1xf32>
    %c0_21 = arith.constant 0 : index
    %c0_22 = arith.constant 0 : index
    %34 = vector.load %arg11[%c0_21, %c0_22] : memref<8x1xf32, #tpu.memory_space<vmem>>, vector<8x1xf32>
    tpu.vector_store %arg11[%c0_21, %c0_22], %33 {strides = array<i32>} : memref<8x1xf32, #tpu.memory_space<vmem>>, vector<8x1xf32>,
    %c0_i32_23 = arith.constant 0 : i32
    %35 = arith.cmpi eq, %arg0, %c0_i32_23 : i32
    %36 = arith.extui %35 : i1 to i32
    %c0_i32_24 = arith.constant 0 : i32
    %37 = arith.cmpi ne, %36, %c0_i32_24 : i32
    scf.if %37 {
      %c0_25 = arith.constant 0 : index
      %c0_26 = arith.constant 0 : index
      %38 = vector.load %arg10[%c0_25, %c0_26] : memref<8x32xf32, #tpu.memory_space<vmem>>, vector<8x32xf32>
      %c0_27 = arith.constant 0 : index
      %c0_28 = arith.constant 0 : index
      %39 = vector.load %arg11[%c0_27, %c0_28] : memref<8x1xf32, #tpu.memory_space<vmem>>, vector<8x1xf32>
      %cst_29 = arith.constant 1.000000e+00 : f32
      %40 = vector.broadcast %cst_29 : f32 to vector<8x1xf32>
      %41 = arith.maximumf %39, %40 : vector<8x1xf32>
      %42 = vector.broadcast %41 : vector<8x1xf32> to vector<8x32xf32>
      %43 = arith.divf %38, %42 : vector<8x32xf32>
      %c0_30 = arith.constant 0 : index
      %c0_31 = arith.constant 0 : index
      %44 = vector.load %arg4[%c0_30, %c0_31] : memref<8x32xf32, #tpu.memory_space<vmem>>, vector<8x32xf32>
      %cst_32 = arith.constant 0.89442718 : f32
      %45 = vector.broadcast %cst_32 : f32 to vector<8x32xf32>
      %46 = arith.mulf %45, %44 : vector<8x32xf32>
      %c0_33 = arith.constant 0 : index
      %c0_34 = arith.constant 0 : index
      %47 = vector.load %arg7[%c0_33, %c0_34] : memref<1x32xf32, #tpu.memory_space<vmem>>, vector<1x32xf32>
      %c0_35 = arith.constant 0 : index
      %c0_36 = arith.constant 0 : index
      %48 = vector.load %arg8[%c0_35, %c0_36] : memref<1x32xf32, #tpu.memory_space<vmem>>, vector<1x32xf32>
      %cst_37 = arith.constant dense<0.000000e+00> : vector<8xf32>
      %49 = vector.multi_reduction <add>, %43, %cst_37 [1] : vector<8x32xf32> to vector<8xf32>
      %50 = vector.shape_cast %49 : vector<8xf32> to vector<8x1xf32>
      %cst_38 = arith.constant 3.200000e+01 : f32
      %51 = vector.broadcast %cst_38 : f32 to vector<8x1xf32>
      %52 = arith.divf %50, %51 : vector<8x1xf32>
      %53 = vector.broadcast %52 : vector<8x1xf32> to vector<8x32xf32>
      %54 = arith.subf %43, %53 : vector<8x32xf32>
      %55 = arith.mulf %54, %54 : vector<8x32xf32>
      %cst_39 = arith.constant dense<0.000000e+00> : vector<8xf32>
      %56 = vector.multi_reduction <add>, %55, %cst_39 [1] : vector<8x32xf32> to vector<8xf32>
      %57 = vector.shape_cast %56 : vector<8xf32> to vector<8x1xf32>
      %cst_40 = arith.constant 3.200000e+01 : f32
      %58 = vector.broadcast %cst_40 : f32 to vector<8x1xf32>
      %59 = arith.divf %57, %58 : vector<8x1xf32>
      %cst_41 = arith.constant 9.99999974E-6 : f32
      %60 = vector.broadcast %cst_41 : f32 to vector<8x1xf32>
      %61 = arith.addf %59, %60 : vector<8x1xf32>
      %62 = math.rsqrt %61 : vector<8x1xf32>
      %63 = vector.broadcast %62 : vector<8x1xf32> to vector<8x32xf32>
      %64 = arith.mulf %54, %63 : vector<8x32xf32>
      %65 = vector.broadcast %47 : vector<1x32xf32> to vector<8x32xf32>
      %66 = arith.mulf %64, %65 : vector<8x32xf32>
      %67 = vector.broadcast %48 : vector<1x32xf32> to vector<8x32xf32>
      %68 = arith.addf %66, %67 : vector<8x32xf32>
      %cst_42 = arith.constant 4.472000e-01 : f32
      %69 = vector.broadcast %cst_42 : f32 to vector<8x32xf32>
      %70 = arith.mulf %69, %68 : vector<8x32xf32>
      %71 = arith.addf %46, %70 : vector<8x32xf32>
      %c0_43 = arith.constant 0 : index
      %c0_44 = arith.constant 0 : index
      %72 = vector.load %arg9[%c0_43, %c0_44] : memref<8x32xf32, #tpu.memory_space<vmem>>, vector<8x32xf32>
      tpu.vector_store %arg9[%c0_43, %c0_44], %71 {strides = array<i32>} : memref<8x32xf32, #tpu.memory_space<vmem>>, vector<8x32xf32>,
    } else {
    }
    return
  }
  func.func @transform_0(%arg0: i32) -> (i32, i32) {
    %c0_i32 = arith.constant 0 : i32
    %c0_i32_0 = arith.constant 0 : i32
    return %c0_i32, %arg0 : i32, i32
  }
  func.func @transform_1(%arg0: i32) -> (i32, i32) {
    %c0_i32 = arith.constant 0 : i32
    %c0_i32_0 = arith.constant 0 : i32
    return %arg0, %c0_i32 : i32, i32
  }
  func.func @transform_2(%arg0: i32) -> (i32, i32) {
    %c0_i32 = arith.constant 0 : i32
    %c0_i32_0 = arith.constant 0 : i32
    return %arg0, %c0_i32 : i32, i32
  }
  func.func @transform_3(%arg0: i32) -> (i32, i32) {
    %c0_i32 = arith.constant 0 : i32
    %c0_i32_0 = arith.constant 0 : i32
    %c0_i32_1 = arith.constant 0 : i32
    return %c0_i32, %c0_i32_0 : i32, i32
  }
  func.func @transform_4(%arg0: i32) -> (i32, i32) {
    %c0_i32 = arith.constant 0 : i32
    %c0_i32_0 = arith.constant 0 : i32
    %c0_i32_1 = arith.constant 0 : i32
    return %c0_i32, %c0_i32_0 : i32, i32
  }
  func.func @transform_5(%arg0: i32) -> (i32, i32) {
    %c0_i32 = arith.constant 0 : i32
    %c0_i32_0 = arith.constant 0 : i32
    %c0_i32_1 = arith.constant 0 : i32
    return %c0_i32, %c0_i32_0 : i32, i32
  }
  func.func @transform_6(%arg0: i32) -> (i32, i32) {
    %c0_i32 = arith.constant 0 : i32
    %c0_i32_0 = arith.constant 0 : i32
    %c0_i32_1 = arith.constant 0 : i32
    return %c0_i32, %c0_i32_0 : i32, i32
  }
  func.func @transform_7(%arg0: i32) -> (i32, i32) {
    %c0_i32 = arith.constant 0 : i32
    %c0_i32_0 = arith.constant 0 : i32
    %c0_i32_1 = arith.constant 0 : i32
    return %c0_i32, %c0_i32_0 : i32, i32
  }
  func.func @transform_8(%arg0: i32) -> (i32, i32) {
    %c0_i32 = arith.constant 0 : i32
    %c0_i32_0 = arith.constant 0 : i32
    %c0_i32_1 = arith.constant 0 : i32
    return %c0_i32, %c0_i32_0 : i32, i32
  }
}

module attributes {stable_mosaic.version = 11 : i64} {
  func.func @_hid_ffn_kernel(%arg0: i32, %arg1: memref<48x1xi32, #tpu.memory_space<vmem>>, %arg2: memref<8x32xf32, #tpu.memory_space<vmem>>, %arg3: memref<48x32xf32, #tpu.memory_space<vmem>>, %arg4: memref<32x32xf32, #tpu.memory_space<vmem>>, %arg5: memref<32x32xf32, #tpu.memory_space<vmem>>, %arg6: memref<1x32xf32, #tpu.memory_space<vmem>>, %arg7: memref<32x32xf32, #tpu.memory_space<vmem>>, %arg8: memref<1x32xf32, #tpu.memory_space<vmem>>, %arg9: memref<48x32xf32, #tpu.memory_space<vmem>>) attributes {dimension_semantics = [#tpu.dimension_semantics<parallel>], iteration_bounds = array<i64: 1>, scalar_prefetch = 0 : i64, scratch_operands = 0 : i64, tpu.core_type = #tpu.core_type<tc>, window_params = [{transform_indices = @transform_0, window_bounds = array<i64: 48, 1>}, {pipeline_mode = #tpu.pipeline_mode<synchronous>, transform_indices = @transform_1, window_bounds = array<i64: 8, 32>}, {transform_indices = @transform_2, window_bounds = array<i64: 48, 32>}, {pipeline_mode = #tpu.pipeline_mode<synchronous>, transform_indices = @transform_3, window_bounds = array<i64: 32, 32>}, {pipeline_mode = #tpu.pipeline_mode<synchronous>, transform_indices = @transform_4, window_bounds = array<i64: 32, 32>}, {pipeline_mode = #tpu.pipeline_mode<synchronous>, transform_indices = @transform_5, window_bounds = array<i64: 1, 32>}, {pipeline_mode = #tpu.pipeline_mode<synchronous>, transform_indices = @transform_6, window_bounds = array<i64: 32, 32>}, {pipeline_mode = #tpu.pipeline_mode<synchronous>, transform_indices = @transform_7, window_bounds = array<i64: 1, 32>}, {transform_indices = @transform_8, window_bounds = array<i64: 48, 32>}]} {
    %0 = tpu.iota {dimensions = array<i32: 1>} : vector<1x8xi32>
    %c0 = arith.constant 0 : index
    %c0_0 = arith.constant 0 : index
    %1 = vector.load %arg1[%c0, %c0_0] : memref<48x1xi32, #tpu.memory_space<vmem>>, vector<48x1xi32>
    %2 = vector.broadcast %0 : vector<1x8xi32> to vector<48x8xi32>
    %3 = vector.broadcast %1 : vector<48x1xi32> to vector<48x8xi32>
    %4 = arith.cmpi eq, %2, %3 : vector<48x8xi32>
    %5 = arith.extui %4 : vector<48x8xi1> to vector<48x8xi32>
    %6 = arith.sitofp %5 : vector<48x8xi32> to vector<48x8xf32>
    %c0_1 = arith.constant 0 : index
    %c0_2 = arith.constant 0 : index
    %7 = vector.load %arg2[%c0_1, %c0_2] : memref<8x32xf32, #tpu.memory_space<vmem>>, vector<8x32xf32>
    %cst = arith.constant dense<0.000000e+00> : vector<48x32xf32>
    %8 = tpu.matmul %6, %7, %cst {dimension_numbers = #tpu.dot_dimension_numbers<[1], [0], [0], [1], [0, 0, 1, 1], [], []>} : vector<48x8xf32>, vector<8x32xf32>, vector<48x32xf32> -> vector<48x32xf32>
    %c0_3 = arith.constant 0 : index
    %c0_4 = arith.constant 0 : index
    %9 = vector.load %arg4[%c0_3, %c0_4] : memref<32x32xf32, #tpu.memory_space<vmem>>, vector<32x32xf32>
    %cst_5 = arith.constant dense<0.000000e+00> : vector<48x32xf32>
    %10 = tpu.matmul %8, %9, %cst_5 {dimension_numbers = #tpu.dot_dimension_numbers<[1], [0], [0], [1], [0, 0, 1, 1], [], []>} : vector<48x32xf32>, vector<32x32xf32>, vector<48x32xf32> -> vector<48x32xf32>
    %c0_6 = arith.constant 0 : index
    %c0_7 = arith.constant 0 : index
    %11 = vector.load %arg3[%c0_6, %c0_7] : memref<48x32xf32, #tpu.memory_space<vmem>>, vector<48x32xf32>
    %c0_8 = arith.constant 0 : index
    %c0_9 = arith.constant 0 : index
    %12 = vector.load %arg5[%c0_8, %c0_9] : memref<32x32xf32, #tpu.memory_space<vmem>>, vector<32x32xf32>
    %cst_10 = arith.constant dense<0.000000e+00> : vector<48x32xf32>
    %13 = tpu.matmul %11, %12, %cst_10 {dimension_numbers = #tpu.dot_dimension_numbers<[1], [0], [0], [1], [0, 0, 1, 1], [], []>} : vector<48x32xf32>, vector<32x32xf32>, vector<48x32xf32> -> vector<48x32xf32>
    %14 = arith.addf %10, %13 : vector<48x32xf32>
    %c0_11 = arith.constant 0 : index
    %c0_12 = arith.constant 0 : index
    %15 = vector.load %arg6[%c0_11, %c0_12] : memref<1x32xf32, #tpu.memory_space<vmem>>, vector<1x32xf32>
    %16 = vector.broadcast %15 : vector<1x32xf32> to vector<48x32xf32>
    %17 = arith.addf %14, %16 : vector<48x32xf32>
    %18 = math.tanh %17 : vector<48x32xf32>
    %c0_13 = arith.constant 0 : index
    %c0_14 = arith.constant 0 : index
    %19 = vector.load %arg7[%c0_13, %c0_14] : memref<32x32xf32, #tpu.memory_space<vmem>>, vector<32x32xf32>
    %cst_15 = arith.constant dense<0.000000e+00> : vector<48x32xf32>
    %20 = tpu.matmul %18, %19, %cst_15 {dimension_numbers = #tpu.dot_dimension_numbers<[1], [0], [0], [1], [0, 0, 1, 1], [], []>} : vector<48x32xf32>, vector<32x32xf32>, vector<48x32xf32> -> vector<48x32xf32>
    %c0_16 = arith.constant 0 : index
    %c0_17 = arith.constant 0 : index
    %21 = vector.load %arg8[%c0_16, %c0_17] : memref<1x32xf32, #tpu.memory_space<vmem>>, vector<1x32xf32>
    %22 = vector.broadcast %21 : vector<1x32xf32> to vector<48x32xf32>
    %23 = arith.addf %20, %22 : vector<48x32xf32>
    %c0_18 = arith.constant 0 : index
    %c0_19 = arith.constant 0 : index
    %24 = vector.load %arg9[%c0_18, %c0_19] : memref<48x32xf32, #tpu.memory_space<vmem>>, vector<48x32xf32>
    tpu.vector_store %arg9[%c0_18, %c0_19], %23 {strides = array<i32>} : memref<48x32xf32, #tpu.memory_space<vmem>>, vector<48x32xf32>,
    return
  }
  func.func @transform_0(%arg0: i32) -> (i32, i32) {
    %c0_i32 = arith.constant 0 : i32
    %c0_i32_0 = arith.constant 0 : i32
    return %arg0, %c0_i32 : i32, i32
  }
  func.func @transform_1(%arg0: i32) -> (i32, i32) {
    %c0_i32 = arith.constant 0 : i32
    %c0_i32_0 = arith.constant 0 : i32
    %c0_i32_1 = arith.constant 0 : i32
    return %c0_i32, %c0_i32_0 : i32, i32
  }
  func.func @transform_2(%arg0: i32) -> (i32, i32) {
    %c0_i32 = arith.constant 0 : i32
    %c0_i32_0 = arith.constant 0 : i32
    return %arg0, %c0_i32 : i32, i32
  }
  func.func @transform_3(%arg0: i32) -> (i32, i32) {
    %c0_i32 = arith.constant 0 : i32
    %c0_i32_0 = arith.constant 0 : i32
    %c0_i32_1 = arith.constant 0 : i32
    return %c0_i32, %c0_i32_0 : i32, i32
  }
  func.func @transform_4(%arg0: i32) -> (i32, i32) {
    %c0_i32 = arith.constant 0 : i32
    %c0_i32_0 = arith.constant 0 : i32
    %c0_i32_1 = arith.constant 0 : i32
    return %c0_i32, %c0_i32_0 : i32, i32
  }
  func.func @transform_5(%arg0: i32) -> (i32, i32) {
    %c0_i32 = arith.constant 0 : i32
    %c0_i32_0 = arith.constant 0 : i32
    %c0_i32_1 = arith.constant 0 : i32
    return %c0_i32, %c0_i32_0 : i32, i32
  }
  func.func @transform_6(%arg0: i32) -> (i32, i32) {
    %c0_i32 = arith.constant 0 : i32
    %c0_i32_0 = arith.constant 0 : i32
    %c0_i32_1 = arith.constant 0 : i32
    return %c0_i32, %c0_i32_0 : i32, i32
  }
  func.func @transform_7(%arg0: i32) -> (i32, i32) {
    %c0_i32 = arith.constant 0 : i32
    %c0_i32_0 = arith.constant 0 : i32
    %c0_i32_1 = arith.constant 0 : i32
    return %c0_i32, %c0_i32_0 : i32, i32
  }
  func.func @transform_8(%arg0: i32) -> (i32, i32) {
    %c0_i32 = arith.constant 0 : i32
    %c0_i32_0 = arith.constant 0 : i32
    return %arg0, %c0_i32 : i32, i32
  }
}

module attributes {stable_mosaic.version = 11 : i64} {
  func.func @_layer_radial_kernel(%arg0: i32, %arg1: memref<48x16xf32, #tpu.memory_space<vmem>>, %arg2: memref<48x32xf32, #tpu.memory_space<vmem>>, %arg3: memref<48x1xf32, #tpu.memory_space<vmem>>, %arg4: memref<16x32xf32, #tpu.memory_space<vmem>>, %arg5: memref<32x32xf32, #tpu.memory_space<vmem>>, %arg6: memref<1x32xf32, #tpu.memory_space<vmem>>, %arg7: memref<32x16xf32, #tpu.memory_space<vmem>>, %arg8: memref<1x16xf32, #tpu.memory_space<vmem>>, %arg9: memref<1x16xf32, #tpu.memory_space<vmem>>, %arg10: memref<1x16xf32, #tpu.memory_space<vmem>>, %arg11: memref<48x16xf32, #tpu.memory_space<vmem>>) attributes {dimension_semantics = [#tpu.dimension_semantics<parallel>], iteration_bounds = array<i64: 1>, scalar_prefetch = 0 : i64, scratch_operands = 0 : i64, tpu.core_type = #tpu.core_type<tc>, window_params = [{transform_indices = @transform_0, window_bounds = array<i64: 48, 16>}, {transform_indices = @transform_1, window_bounds = array<i64: 48, 32>}, {transform_indices = @transform_2, window_bounds = array<i64: 48, 1>}, {pipeline_mode = #tpu.pipeline_mode<synchronous>, transform_indices = @transform_3, window_bounds = array<i64: 16, 32>}, {pipeline_mode = #tpu.pipeline_mode<synchronous>, transform_indices = @transform_4, window_bounds = array<i64: 32, 32>}, {pipeline_mode = #tpu.pipeline_mode<synchronous>, transform_indices = @transform_5, window_bounds = array<i64: 1, 32>}, {pipeline_mode = #tpu.pipeline_mode<synchronous>, transform_indices = @transform_6, window_bounds = array<i64: 32, 16>}, {pipeline_mode = #tpu.pipeline_mode<synchronous>, transform_indices = @transform_7, window_bounds = array<i64: 1, 16>}, {pipeline_mode = #tpu.pipeline_mode<synchronous>, transform_indices = @transform_8, window_bounds = array<i64: 1, 16>}, {pipeline_mode = #tpu.pipeline_mode<synchronous>, transform_indices = @transform_9, window_bounds = array<i64: 1, 16>}, {transform_indices = @transform_10, window_bounds = array<i64: 48, 16>}]} {
    %c0 = arith.constant 0 : index
    %c0_0 = arith.constant 0 : index
    %0 = vector.load %arg1[%c0, %c0_0] : memref<48x16xf32, #tpu.memory_space<vmem>>, vector<48x16xf32>
    %c0_1 = arith.constant 0 : index
    %c0_2 = arith.constant 0 : index
    %1 = vector.load %arg3[%c0_1, %c0_2] : memref<48x1xf32, #tpu.memory_space<vmem>>, vector<48x1xf32>
    %cst = arith.constant 2.500000e-01 : f32
    %2 = vector.broadcast %cst : f32 to vector<48x1xf32>
    %3 = arith.mulf %1, %2 : vector<48x1xf32>
    %4 = arith.mulf %3, %3 : vector<48x1xf32>
    %5 = arith.mulf %4, %4 : vector<48x1xf32>
    %6 = arith.mulf %4, %5 : vector<48x1xf32>
    %7 = arith.mulf %6, %3 : vector<48x1xf32>
    %8 = arith.mulf %7, %3 : vector<48x1xf32>
    %cst_3 = arith.constant 2.800000e+01 : f32
    %9 = vector.broadcast %cst_3 : f32 to vector<48x1xf32>
    %10 = arith.mulf %9, %6 : vector<48x1xf32>
    %cst_4 = arith.constant 1.000000e+00 : f32
    %11 = vector.broadcast %cst_4 : f32 to vector<48x1xf32>
    %12 = arith.subf %11, %10 : vector<48x1xf32>
    %cst_5 = arith.constant 4.800000e+01 : f32
    %13 = vector.broadcast %cst_5 : f32 to vector<48x1xf32>
    %14 = arith.mulf %13, %7 : vector<48x1xf32>
    %15 = arith.addf %12, %14 : vector<48x1xf32>
    %cst_6 = arith.constant 2.100000e+01 : f32
    %16 = vector.broadcast %cst_6 : f32 to vector<48x1xf32>
    %17 = arith.mulf %16, %8 : vector<48x1xf32>
    %18 = arith.subf %15, %17 : vector<48x1xf32>
    %cst_7 = arith.constant 1.000000e+00 : f32
    %19 = vector.broadcast %cst_7 : f32 to vector<48x1xf32>
    %20 = arith.cmpf olt, %3, %19 : vector<48x1xf32>
    %cst_8 = arith.constant 0.000000e+00 : f32
    %21 = vector.broadcast %cst_8 : f32 to vector<48x1xf32>
    %22 = arith.select %20, %18, %21 : vector<48x1xi1>, vector<48x1xf32>
    %c0_9 = arith.constant 0 : index
    %c0_10 = arith.constant 0 : index
    %23 = vector.load %arg4[%c0_9, %c0_10] : memref<16x32xf32, #tpu.memory_space<vmem>>, vector<16x32xf32>
    %cst_11 = arith.constant dense<0.000000e+00> : vector<48x32xf32>
    %24 = tpu.matmul %0, %23, %cst_11 {dimension_numbers = #tpu.dot_dimension_numbers<[1], [0], [0], [1], [0, 0, 1, 1], [], []>} : vector<48x16xf32>, vector<16x32xf32>, vector<48x32xf32> -> vector<48x32xf32>
    %c0_12 = arith.constant 0 : index
    %c0_13 = arith.constant 0 : index
    %25 = vector.load %arg2[%c0_12, %c0_13] : memref<48x32xf32, #tpu.memory_space<vmem>>, vector<48x32xf32>
    %c0_14 = arith.constant 0 : index
    %c0_15 = arith.constant 0 : index
    %26 = vector.load %arg5[%c0_14, %c0_15] : memref<32x32xf32, #tpu.memory_space<vmem>>, vector<32x32xf32>
    %cst_16 = arith.constant dense<0.000000e+00> : vector<48x32xf32>
    %27 = tpu.matmul %25, %26, %cst_16 {dimension_numbers = #tpu.dot_dimension_numbers<[1], [0], [0], [1], [0, 0, 1, 1], [], []>} : vector<48x32xf32>, vector<32x32xf32>, vector<48x32xf32> -> vector<48x32xf32>
    %28 = arith.addf %24, %27 : vector<48x32xf32>
    %c0_17 = arith.constant 0 : index
    %c0_18 = arith.constant 0 : index
    %29 = vector.load %arg6[%c0_17, %c0_18] : memref<1x32xf32, #tpu.memory_space<vmem>>, vector<1x32xf32>
    %30 = vector.broadcast %29 : vector<1x32xf32> to vector<48x32xf32>
    %31 = arith.addf %28, %30 : vector<48x32xf32>
    %32 = math.tanh %31 : vector<48x32xf32>
    %c0_19 = arith.constant 0 : index
    %c0_20 = arith.constant 0 : index
    %33 = vector.load %arg7[%c0_19, %c0_20] : memref<32x16xf32, #tpu.memory_space<vmem>>, vector<32x16xf32>
    %cst_21 = arith.constant dense<0.000000e+00> : vector<48x16xf32>
    %34 = tpu.matmul %32, %33, %cst_21 {dimension_numbers = #tpu.dot_dimension_numbers<[1], [0], [0], [1], [0, 0, 1, 1], [], []>} : vector<48x32xf32>, vector<32x16xf32>, vector<48x16xf32> -> vector<48x16xf32>
    %c0_22 = arith.constant 0 : index
    %c0_23 = arith.constant 0 : index
    %35 = vector.load %arg8[%c0_22, %c0_23] : memref<1x16xf32, #tpu.memory_space<vmem>>, vector<1x16xf32>
    %36 = vector.broadcast %35 : vector<1x16xf32> to vector<48x16xf32>
    %37 = arith.addf %34, %36 : vector<48x16xf32>
    %c0_24 = arith.constant 0 : index
    %c0_25 = arith.constant 0 : index
    %38 = vector.load %arg9[%c0_24, %c0_25] : memref<1x16xf32, #tpu.memory_space<vmem>>, vector<1x16xf32>
    %c0_26 = arith.constant 0 : index
    %c0_27 = arith.constant 0 : index
    %39 = vector.load %arg10[%c0_26, %c0_27] : memref<1x16xf32, #tpu.memory_space<vmem>>, vector<1x16xf32>
    %cst_28 = arith.constant dense<0.000000e+00> : vector<48xf32>
    %40 = vector.multi_reduction <add>, %37, %cst_28 [1] : vector<48x16xf32> to vector<48xf32>
    %41 = vector.shape_cast %40 : vector<48xf32> to vector<48x1xf32>
    %cst_29 = arith.constant 1.600000e+01 : f32
    %42 = vector.broadcast %cst_29 : f32 to vector<48x1xf32>
    %43 = arith.divf %41, %42 : vector<48x1xf32>
    %44 = vector.broadcast %43 : vector<48x1xf32> to vector<48x16xf32>
    %45 = arith.subf %37, %44 : vector<48x16xf32>
    %46 = arith.mulf %45, %45 : vector<48x16xf32>
    %cst_30 = arith.constant dense<0.000000e+00> : vector<48xf32>
    %47 = vector.multi_reduction <add>, %46, %cst_30 [1] : vector<48x16xf32> to vector<48xf32>
    %48 = vector.shape_cast %47 : vector<48xf32> to vector<48x1xf32>
    %cst_31 = arith.constant 1.600000e+01 : f32
    %49 = vector.broadcast %cst_31 : f32 to vector<48x1xf32>
    %50 = arith.divf %48, %49 : vector<48x1xf32>
    %cst_32 = arith.constant 9.99999974E-6 : f32
    %51 = vector.broadcast %cst_32 : f32 to vector<48x1xf32>
    %52 = arith.addf %50, %51 : vector<48x1xf32>
    %53 = math.rsqrt %52 : vector<48x1xf32>
    %54 = vector.broadcast %53 : vector<48x1xf32> to vector<48x16xf32>
    %55 = arith.mulf %45, %54 : vector<48x16xf32>
    %56 = vector.broadcast %38 : vector<1x16xf32> to vector<48x16xf32>
    %57 = arith.mulf %55, %56 : vector<48x16xf32>
    %58 = vector.broadcast %39 : vector<1x16xf32> to vector<48x16xf32>
    %59 = arith.addf %57, %58 : vector<48x16xf32>
    %cst_33 = arith.constant 0.89442718 : f32
    %60 = vector.broadcast %cst_33 : f32 to vector<48x16xf32>
    %61 = arith.mulf %60, %0 : vector<48x16xf32>
    %cst_34 = arith.constant 4.472000e-01 : f32
    %62 = vector.broadcast %cst_34 : f32 to vector<48x1xf32>
    %63 = arith.mulf %62, %22 : vector<48x1xf32>
    %64 = vector.broadcast %63 : vector<48x1xf32> to vector<48x16xf32>
    %65 = arith.mulf %64, %59 : vector<48x16xf32>
    %66 = arith.addf %61, %65 : vector<48x16xf32>
    %c0_35 = arith.constant 0 : index
    %c0_36 = arith.constant 0 : index
    %67 = vector.load %arg11[%c0_35, %c0_36] : memref<48x16xf32, #tpu.memory_space<vmem>>, vector<48x16xf32>
    tpu.vector_store %arg11[%c0_35, %c0_36], %66 {strides = array<i32>} : memref<48x16xf32, #tpu.memory_space<vmem>>, vector<48x16xf32>,
    return
  }
  func.func @transform_0(%arg0: i32) -> (i32, i32) {
    %c0_i32 = arith.constant 0 : i32
    %c0_i32_0 = arith.constant 0 : i32
    return %arg0, %c0_i32 : i32, i32
  }
  func.func @transform_1(%arg0: i32) -> (i32, i32) {
    %c0_i32 = arith.constant 0 : i32
    %c0_i32_0 = arith.constant 0 : i32
    return %arg0, %c0_i32 : i32, i32
  }
  func.func @transform_2(%arg0: i32) -> (i32, i32) {
    %c0_i32 = arith.constant 0 : i32
    %c0_i32_0 = arith.constant 0 : i32
    return %arg0, %c0_i32 : i32, i32
  }
  func.func @transform_3(%arg0: i32) -> (i32, i32) {
    %c0_i32 = arith.constant 0 : i32
    %c0_i32_0 = arith.constant 0 : i32
    %c0_i32_1 = arith.constant 0 : i32
    return %c0_i32, %c0_i32_0 : i32, i32
  }
  func.func @transform_4(%arg0: i32) -> (i32, i32) {
    %c0_i32 = arith.constant 0 : i32
    %c0_i32_0 = arith.constant 0 : i32
    %c0_i32_1 = arith.constant 0 : i32
    return %c0_i32, %c0_i32_0 : i32, i32
  }
  func.func @transform_5(%arg0: i32) -> (i32, i32) {
    %c0_i32 = arith.constant 0 : i32
    %c0_i32_0 = arith.constant 0 : i32
    %c0_i32_1 = arith.constant 0 : i32
    return %c0_i32, %c0_i32_0 : i32, i32
  }
  func.func @transform_6(%arg0: i32) -> (i32, i32) {
    %c0_i32 = arith.constant 0 : i32
    %c0_i32_0 = arith.constant 0 : i32
    %c0_i32_1 = arith.constant 0 : i32
    return %c0_i32, %c0_i32_0 : i32, i32
  }
  func.func @transform_7(%arg0: i32) -> (i32, i32) {
    %c0_i32 = arith.constant 0 : i32
    %c0_i32_0 = arith.constant 0 : i32
    %c0_i32_1 = arith.constant 0 : i32
    return %c0_i32, %c0_i32_0 : i32, i32
  }
  func.func @transform_8(%arg0: i32) -> (i32, i32) {
    %c0_i32 = arith.constant 0 : i32
    %c0_i32_0 = arith.constant 0 : i32
    %c0_i32_1 = arith.constant 0 : i32
    return %c0_i32, %c0_i32_0 : i32, i32
  }
  func.func @transform_9(%arg0: i32) -> (i32, i32) {
    %c0_i32 = arith.constant 0 : i32
    %c0_i32_0 = arith.constant 0 : i32
    %c0_i32_1 = arith.constant 0 : i32
    return %c0_i32, %c0_i32_0 : i32, i32
  }
  func.func @transform_10(%arg0: i32) -> (i32, i32) {
    %c0_i32 = arith.constant 0 : i32
    %c0_i32_0 = arith.constant 0 : i32
    return %arg0, %c0_i32 : i32, i32
  }
}

</mosaic_0001>

<llo_original>
// kernel: baseline_forward.11
$region0: #{baseline_forward.11}
  #allocation0 [shape = 'u32[]', space=smem, size = 0x4, offset = 0x4, fixed_abs, tag = 'smem constant byte address 0x4 - core index']
  #allocation1 [shape = 'u32[144,128]{1,0:T(1,128)}', space=vmem, size = 0x12000, scoped, tag = 'internal scratch']
  %s0 = inlined_call_operand.vmem [shape: f32[48,16], index: 0, kind: input, shape index: {}]
  %s1 = inlined_call_operand.vmem [shape: s32[48,1], index: 1, kind: input, shape index: {}]
  %s2 = inlined_call_operand.vmem [shape: s32[48,1], index: 2, kind: input, shape index: {}]
  %s3 = inlined_call_operand.vmem [shape: f32[8,32], index: 3, kind: input, shape index: {}]
  %s4 = inlined_call_operand.vmem [shape: f32[16,32], index: 4, kind: input, shape index: {}]
  %s5 = inlined_call_operand.vmem [shape: f32[1,32], index: 5, kind: input, shape index: {}]
  %s6 = inlined_call_operand.vmem [shape: f32[48,32], index: 6, kind: output, shape index: {}]
  %s7 = sld [smem:[#allocation0]]
  $region34: #{baseline_forward.11} parent=0
    _
  %s9 = ssub.s32 1, %s7
  %s10 = scalar_select 0, %s9, %s7
  // Predicated region
  $region2: #{baseline_forward.11} parent=0 // pred_check
    _
  $region3: #{baseline_forward.11} parent=0 // pred_check_branch
    %12 = sbr.rel (0) target = $region5
  $region4: #{baseline_forward.11} parent=0 // pred_region
    _
  $region5: #{baseline_forward.11} parent=0 // pred_fallthru
    _
  // Predicated region
  $region6: #{baseline_forward.11} parent=0 // pred_check
    _
  $region7: #{baseline_forward.11} parent=0 // pred_check_branch
    %14 = sbr.rel (0) target = $region9
  $region8: #{baseline_forward.11} parent=0 // pred_region
    _
  $region9: #{baseline_forward.11} parent=0 // pred_fallthru
    _
  // Predicated region
  $region10: #{baseline_forward.11} parent=0 // pred_check
    _
  $region11: #{baseline_forward.11} parent=0 // pred_check_branch
    %16 = sbr.rel (0) target = $region13
  $region12: #{baseline_forward.11} parent=0 // pred_region
    _
  $region13: #{baseline_forward.11} parent=0 // pred_fallthru
    _
  // Predicated region
  $region14: #{baseline_forward.11} parent=0 // pred_check
    _
  $region15: #{baseline_forward.11} parent=0 // pred_check_branch
    %18 = sbr.rel (0) target = $region17
  $region16: #{baseline_forward.11} parent=0 // pred_region
    _
  $region17: #{baseline_forward.11} parent=0 // pred_fallthru
    _
  // Predicated region
  $region18: #{baseline_forward.11} parent=0 // pred_check
    _
  $region19: #{baseline_forward.11} parent=0 // pred_check_branch
    %20 = sbr.rel (0) target = $region21
  $region20: #{baseline_forward.11} parent=0 // pred_region
    _
  $region21: #{baseline_forward.11} parent=0 // pred_fallthru
    _
  // Predicated region
  $region22: #{baseline_forward.11} parent=0 // pred_check
    _
  $region23: #{baseline_forward.11} parent=0 // pred_check_branch
    %22 = sbr.rel (0) target = $region25
  $region24: #{baseline_forward.11} parent=0 // pred_region
    _
  $region25: #{baseline_forward.11} parent=0 // pred_fallthru
    _
  %v23 = vlaneseq
  %v24 = vand.u32 %v23, 127
  %v25 = vld [vmem:[%s1] sm:$0xff]
  %v26 = vld [vmem:[%s1 + $0x8] sm:$0xff]
  %v27 = vld [vmem:[%s1 + $0x10] sm:$0xff]
  %v28 = vld [vmem:[%s1 + $0x18] sm:$0xff]
  %v29 = vld [vmem:[%s1 + $0x20] sm:$0xff]
  %v30 = vld [vmem:[%s1 + $0x28] sm:$0xff]
  %31 = vset.pattern.permute.xlu0 0
  %32 = vperm.xlu0 %31, %v25
  %v33 = vpop.permute.xlu0 %32
  %34 = vset.pattern.permute.xlu0 0
  %35 = vperm.xlu0 %34, %v26
  %v36 = vpop.permute.xlu0 %35
  %37 = vset.pattern.permute.xlu0 0
  %38 = vperm.xlu0 %37, %v27
  %v39 = vpop.permute.xlu0 %38
  %40 = vset.pattern.permute.xlu0 0
  %41 = vperm.xlu0 %40, %v28
  %v42 = vpop.permute.xlu0 %41
  %43 = vset.pattern.permute.xlu0 0
  %44 = vperm.xlu0 %43, %v29
  %v45 = vpop.permute.xlu0 %44
  %46 = vset.pattern.permute.xlu0 0
  %47 = vperm.xlu0 %46, %v30
  %v48 = vpop.permute.xlu0 %47
  %vm49 = vcmp.eq.s32.totalorder %v24, %v33
  %vm50 = vcmp.eq.s32.totalorder %v24, %v36
  %vm51 = vcmp.eq.s32.totalorder %v24, %v39
  %vm52 = vcmp.eq.s32.totalorder %v24, %v42
  %vm53 = vcmp.eq.s32.totalorder %v24, %v45
  %vm54 = vcmp.eq.s32.totalorder %v24, %v48
  %v55 = vsel %vm49, 1, 0
  %v56 = vsel %vm50, 1, 0
  %v57 = vsel %vm51, 1, 0
  %v58 = vsel %vm52, 1, 0
  %v59 = vsel %vm53, 1, 0
  %v60 = vsel %vm54, 1, 0
  %v61 = vcvt.s32.f32 %v55
  %v62 = vcvt.s32.f32 %v56
  %v63 = vcvt.s32.f32 %v57
  %v64 = vcvt.s32.f32 %v58
  %v65 = vcvt.s32.f32 %v59
  %v66 = vcvt.s32.f32 %v60
  %v67 = vld [vmem:[%s2] sm:$0xff]
  %v68 = vld [vmem:[%s2 + $0x8] sm:$0xff]
  %v69 = vld [vmem:[%s2 + $0x10] sm:$0xff]
  %v70 = vld [vmem:[%s2 + $0x18] sm:$0xff]
  %v71 = vld [vmem:[%s2 + $0x20] sm:$0xff]
  %v72 = vld [vmem:[%s2 + $0x28] sm:$0xff]
  %73 = vset.pattern.permute.xlu0 0
  %74 = vperm.xlu0 %73, %v67
  %v75 = vpop.permute.xlu0 %74
  %76 = vset.pattern.permute.xlu0 0
  %77 = vperm.xlu0 %76, %v68
  %v78 = vpop.permute.xlu0 %77
  %79 = vset.pattern.permute.xlu0 0
  %80 = vperm.xlu0 %79, %v69
  %v81 = vpop.permute.xlu0 %80
  %82 = vset.pattern.permute.xlu0 0
  %83 = vperm.xlu0 %82, %v70
  %v84 = vpop.permute.xlu0 %83
  %85 = vset.pattern.permute.xlu0 0
  %86 = vperm.xlu0 %85, %v71
  %v87 = vpop.permute.xlu0 %86
  %88 = vset.pattern.permute.xlu0 0
  %89 = vperm.xlu0 %88, %v72
  %v90 = vpop.permute.xlu0 %89
  %vm91 = vcmp.eq.s32.totalorder %v24, %v75
  %vm92 = vcmp.eq.s32.totalorder %v24, %v78
  %vm93 = vcmp.eq.s32.totalorder %v24, %v81
  %vm94 = vcmp.eq.s32.totalorder %v24, %v84
  %vm95 = vcmp.eq.s32.totalorder %v24, %v87
  %vm96 = vcmp.eq.s32.totalorder %v24, %v90
  %v97 = vsel %vm91, 1, 0
  %v98 = vsel %vm92, 1, 0
  %v99 = vsel %vm93, 1, 0
  %v100 = vsel %vm94, 1, 0
  %v101 = vsel %vm95, 1, 0
  %v102 = vsel %vm96, 1, 0
  %v103 = vcvt.s32.f32 %v97
  %v104 = vcvt.s32.f32 %v98
  %v105 = vcvt.s32.f32 %v99
  %v106 = vcvt.s32.f32 %v100
  %v107 = vcvt.s32.f32 %v101
  %v108 = vcvt.s32.f32 %v102
  %v109 = vadd.f32 %v61, %v103
  %v110 = vadd.f32 %v62, %v104
  %v111 = vadd.f32 %v63, %v105
  %v112 = vadd.f32 %v64, %v106
  %v113 = vadd.f32 %v65, %v107
  %v114 = vadd.f32 %v66, %v108
  %v115 = vld [vmem:[%s3] sm:$0xff]
  %vm116 = vcmask 64512
  %v118 = vsel %vm116, %v109, 0
  %v121 = vsel %vm116, %v110, 0
  %v124 = vsel %vm116, %v111, 0
  %v127 = vsel %vm116, %v112, 0
  %v130 = vsel %vm116, %v113, 0
  %v133 = vsel %vm116, %v114, 0
  %135 = vmatprep.subr.mxu0 0.0
  %136 = vmatpush1.msra.mxu0 %v115
  %137 = vmatprep.subr.mxu0 0.0
  %138 = vmatpush1.msra.mxu0 0.0
  %139 = vmatprep.subr.mxu0 0.0
  %140 = vmatpush1.msra.mxu0 0.0
  %141 = vmatprep.subr.mxu0 0.0
  %142 = vmatpush1.msra.mxu0 0.0
  %143 = vmatprep.subr.mxu0 0.0
  %144 = vmatpush1.msra.mxu0 0.0
  %145 = vmatprep.subr.mxu0 0.0
  %146 = vmatpush1.msra.mxu0 0.0
  %147 = vmatprep.subr.mxu0 0.0
  %148 = vmatpush1.msra.mxu0 0.0
  %149 = vmatprep.subr.mxu0 0.0
  %150 = vmatpush1.msra.mxu0 0.0
  %151 = vmatprep.subr.mxu0 0.0
  %152 = vmatpush1.msra.mxu0 0.0
  %153 = vmatprep.subr.mxu0 0.0
  %154 = vmatpush1.msra.mxu0 0.0
  %155 = vmatprep.subr.mxu0 0.0
  %156 = vmatpush1.msra.mxu0 0.0
  %157 = vmatprep.subr.mxu0 0.0
  %158 = vmatpush1.msra.mxu0 0.0
  %159 = vmatprep.subr.mxu0 0.0
  %160 = vmatpush1.msra.mxu0 0.0
  %161 = vmatprep.subr.mxu0 0.0
  %162 = vmatpush1.msra.mxu0 0.0
  %163 = vmatprep.subr.mxu0 0.0
  %164 = vmatpush1.msra.mxu0 0.0
  %165 = vmatprep.subr.mxu0 0.0
  %166 = vmatpush1.msra.mxu0 0.0
  %167 = vmatprep.subr.mxu0 0.0
  %168 = vmatpush1.msra.mxu0 0.0
  %169 = vmatprep.subr.mxu0 0.0
  %170 = vmatpush1.msra.mxu0 0.0
  %171 = vmatprep.subr.mxu0 0.0
  %172 = vmatpush1.msra.mxu0 0.0
  %173 = vmatprep.subr.mxu0 0.0
  %174 = vmatpush1.msra.mxu0 0.0
  %175 = vmatprep.subr.mxu0 0.0
  %176 = vmatpush1.msra.mxu0 0.0
  %177 = vmatprep.subr.mxu0 0.0
  %178 = vmatpush1.msra.mxu0 0.0
  %179 = vmatprep.subr.mxu0 0.0
  %180 = vmatpush1.msra.mxu0 0.0
  %181 = vmatprep.subr.mxu0 0.0
  %182 = vmatpush1.msra.mxu0 0.0
  %183 = vmatprep.subr.mxu0 0.0
  %184 = vmatpush1.msra.mxu0 0.0
  %185 = vmatprep.subr.mxu0 0.0
  %186 = vmatpush1.msra.mxu0 0.0
  %187 = vmatprep.subr.mxu0 0.0
  %188 = vmatpush1.msra.mxu0 0.0
  %189 = vmatprep.subr.mxu0 0.0
  %190 = vmatpush1.msra.mxu0 0.0
  %191 = vmatprep.subr.mxu0 0.0
  %192 = vmatpush1.msra.mxu0 0.0
  %193 = vmatprep.subr.mxu0 0.0
  %194 = vmatpush1.msra.mxu0 0.0
  %195 = vmatprep.subr.mxu0 0.0
  %196 = vmatpush1.msra.mxu0 0.0
  %197 = vmatprep.subr.mxu0 0.0
  %198 = vmatpush1.msra.mxu0 0.0
  %199 = vmatprep.mubr.f32.mxu0 0.0
  %200 = vmatmul.mubr.f32.gmra.mrb[0].mxu0 %v118
  %v201 = vpop.f32.mrb[0].mxu0
  %v202 = vadd.f32 0.0, %v201
  %v203 = vpop.f32.mrb[0].mxu0
  %204 = vmatprep.mubr.f32.mxu0 0.0
  %205 = vmatmul.mubr.f32.gmra.mrb[0].mxu0 %v121
  %v206 = vpop.f32.mrb[0].mxu0
  %v207 = vadd.f32 0.0, %v206
  %v208 = vpop.f32.mrb[0].mxu0
  %209 = vmatprep.mubr.f32.mxu0 0.0
  %210 = vmatmul.mubr.f32.gmra.mrb[0].mxu0 %v124
  %v211 = vpop.f32.mrb[0].mxu0
  %v212 = vadd.f32 0.0, %v211
  %v213 = vpop.f32.mrb[0].mxu0
  %214 = vmatprep.mubr.f32.mxu0 0.0
  %215 = vmatmul.mubr.f32.gmra.mrb[0].mxu0 %v127
  %v216 = vpop.f32.mrb[0].mxu0
  %v217 = vadd.f32 0.0, %v216
  %v218 = vpop.f32.mrb[0].mxu0
  %219 = vmatprep.mubr.f32.mxu0 0.0
  %220 = vmatmul.mubr.f32.gmra.mrb[0].mxu0 %v130
  %v221 = vpop.f32.mrb[0].mxu0
  %v222 = vadd.f32 0.0, %v221
  %v223 = vpop.f32.mrb[0].mxu0
  %224 = vmatprep.mubr.f32.mxu0 0.0
  %225 = vmatmul.mubr.f32.gmra.mrb[0].mxu0 %v133
  %v226 = vpop.f32.mrb[0].mxu0
  %v227 = vadd.f32 0.0, %v226
  %v228 = vpop.f32.mrb[0].mxu0
  %229 = vdwg.mxu0
  %v230 = vmul.f32 %v202, 0.5
  %v231 = vmul.f32 %v207, 0.5
  %v232 = vmul.f32 %v212, 0.5
  %v233 = vmul.f32 %v217, 0.5
  %v234 = vmul.f32 %v222, 0.5
  %v235 = vmul.f32 %v227, 0.5
  %v236 = vld [vmem:[%s0] sm:$0xff]
  %v237 = vld [vmem:[%s0 + $0x8] sm:$0xff]
  %v238 = vld [vmem:[%s0 + $0x10] sm:$0xff]
  %v239 = vld [vmem:[%s0 + $0x18] sm:$0xff]
  %v240 = vld [vmem:[%s0 + $0x20] sm:$0xff]
  %v241 = vld [vmem:[%s0 + $0x28] sm:$0xff]
  %v242 = vld [vmem:[%s4] sm:$0xff]
  %v243 = vld [vmem:[%s4 + $0x8] sm:$0xff]
  %v244 = vld [vmem:[%s5] sm:$0x1]
  %v246 = vlaneseq
  %v247 = vshrl.u32 %v246, 7
  %v248 = vsub.s32 0, %v247
  %v249 = vrot.slane %v244, %v248
  %vm251 = vcmask 130048
  %v253 = vsel %vm251, %v236, 0
  %v256 = vsel %vm251, %v237, 0
  %v259 = vsel %vm251, %v238, 0
  %v262 = vsel %vm251, %v239, 0
  %v265 = vsel %vm251, %v240, 0
  %v268 = vsel %vm251, %v241, 0
  %270 = vmatprep.subr.mxu0 0.0
  %271 = vmatpush1.msra.mxu0 %v242
  %272 = vmatprep.subr.mxu0 0.0
  %273 = vmatpush1.msra.mxu0 %v243
  %274 = vmatprep.subr.mxu0 0.0
  %275 = vmatpush1.msra.mxu0 0.0
  %276 = vmatprep.subr.mxu0 0.0
  %277 = vmatpush1.msra.mxu0 0.0
  %278 = vmatprep.subr.mxu0 0.0
  %279 = vmatpush1.msra.mxu0 0.0
  %280 = vmatprep.subr.mxu0 0.0
  %281 = vmatpush1.msra.mxu0 0.0
  %282 = vmatprep.subr.mxu0 0.0
  %283 = vmatpush1.msra.mxu0 0.0
  %284 = vmatprep.subr.mxu0 0.0
  %285 = vmatpush1.msra.mxu0 0.0
  %286 = vmatprep.subr.mxu0 0.0
  %287 = vmatpush1.msra.mxu0 0.0
  %288 = vmatprep.subr.mxu0 0.0
  %289 = vmatpush1.msra.mxu0 0.0
  %290 = vmatprep.subr.mxu0 0.0
  %291 = vmatpush1.msra.mxu0 0.0
  %292 = vmatprep.subr.mxu0 0.0
  %293 = vmatpush1.msra.mxu0 0.0
  %294 = vmatprep.subr.mxu0 0.0
  %295 = vmatpush1.msra.mxu0 0.0
  %296 = vmatprep.subr.mxu0 0.0
  %297 = vmatpush1.msra.mxu0 0.0
  %298 = vmatprep.subr.mxu0 0.0
  %299 = vmatpush1.msra.mxu0 0.0
  %300 = vmatprep.subr.mxu0 0.0
  %301 = vmatpush1.msra.mxu0 0.0
  %302 = vmatprep.subr.mxu0 0.0
  %303 = vmatpush1.msra.mxu0 0.0
  %304 = vmatprep.subr.mxu0 0.0
  %305 = vmatpush1.msra.mxu0 0.0
  %306 = vmatprep.subr.mxu0 0.0
  %307 = vmatpush1.msra.mxu0 0.0
  %308 = vmatprep.subr.mxu0 0.0
  %309 = vmatpush1.msra.mxu0 0.0
  %310 = vmatprep.subr.mxu0 0.0
  %311 = vmatpush1.msra.mxu0 0.0
  %312 = vmatprep.subr.mxu0 0.0
  %313 = vmatpush1.msra.mxu0 0.0
  %314 = vmatprep.subr.mxu0 0.0
  %315 = vmatpush1.msra.mxu0 0.0
  %316 = vmatprep.subr.mxu0 0.0
  %317 = vmatpush1.msra.mxu0 0.0
  %318 = vmatprep.subr.mxu0 0.0
  %319 = vmatpush1.msra.mxu0 0.0
  %320 = vmatprep.subr.mxu0 0.0
  %321 = vmatpush1.msra.mxu0 0.0
  %322 = vmatprep.subr.mxu0 0.0
  %323 = vmatpush1.msra.mxu0 0.0
  %324 = vmatprep.subr.mxu0 0.0
  %325 = vmatpush1.msra.mxu0 0.0
  %326 = vmatprep.subr.mxu0 0.0
  %327 = vmatpush1.msra.mxu0 0.0
  %328 = vmatprep.subr.mxu0 0.0
  %329 = vmatpush1.msra.mxu0 0.0
  %330 = vmatprep.subr.mxu0 0.0
  %331 = vmatpush1.msra.mxu0 0.0
  %332 = vmatprep.subr.mxu0 0.0
  %333 = vmatpush1.msra.mxu0 0.0
  %334 = vmatprep.mubr.f32.mxu0 0.0
  %335 = vmatmul.mubr.f32.gmra.mrb[0].mxu0 %v253
  %v336 = vpop.f32.mrb[0].mxu0
  %v337 = vadd.f32 %v249, %v336
  %v338 = vpop.f32.mrb[0].mxu0
  %339 = vmatprep.mubr.f32.mxu0 0.0
  %340 = vmatmul.mubr.f32.gmra.mrb[0].mxu0 %v256
  %v341 = vpop.f32.mrb[0].mxu0
  %v342 = vadd.f32 %v249, %v341
  %v343 = vpop.f32.mrb[0].mxu0
  %344 = vmatprep.mubr.f32.mxu0 0.0
  %345 = vmatmul.mubr.f32.gmra.mrb[0].mxu0 %v259
  %v346 = vpop.f32.mrb[0].mxu0
  %v347 = vadd.f32 %v249, %v346
  %v348 = vpop.f32.mrb[0].mxu0
  %349 = vmatprep.mubr.f32.mxu0 0.0
  %350 = vmatmul.mubr.f32.gmra.mrb[0].mxu0 %v262
  %v351 = vpop.f32.mrb[0].mxu0
  %v352 = vadd.f32 %v249, %v351
  %v353 = vpop.f32.mrb[0].mxu0
  %354 = vmatprep.mubr.f32.mxu0 0.0
  %355 = vmatmul.mubr.f32.gmra.mrb[0].mxu0 %v265
  %v356 = vpop.f32.mrb[0].mxu0
  %v357 = vadd.f32 %v249, %v356
  %v358 = vpop.f32.mrb[0].mxu0
  %359 = vmatprep.mubr.f32.mxu0 0.0
  %360 = vmatmul.mubr.f32.gmra.mrb[0].mxu0 %v268
  %v361 = vpop.f32.mrb[0].mxu0
  %v362 = vadd.f32 %v249, %v361
  %v363 = vpop.f32.mrb[0].mxu0
  %364 = vdwg.mxu0
  %v365 = vmul.f32 %v337, %v230
  %v366 = vmul.f32 %v342, %v231
  %v367 = vmul.f32 %v347, %v232
  %v368 = vmul.f32 %v352, %v233
  %v369 = vmul.f32 %v357, %v234
  %v370 = vmul.f32 %v362, %v235
  %vm371 = vcmask 261120
  %372 = vst.msk [vmem:[%s6] sm:$0xff] %vm371, %v365
  %373 = vst.msk [vmem:[%s6 + $0x8] sm:$0xff] %vm371, %v366
  %374 = vst.msk [vmem:[%s6 + $0x10] sm:$0xff] %vm371, %v367
  %375 = vst.msk [vmem:[%s6 + $0x18] sm:$0xff] %vm371, %v368
  %376 = vst.msk [vmem:[%s6 + $0x20] sm:$0xff] %vm371, %v369
  %377 = vst.msk [vmem:[%s6 + $0x28] sm:$0xff] %vm371, %v370
  // Predicated region
  $region26: #{baseline_forward.11} parent=0 // pred_check
    _
  $region27: #{baseline_forward.11} parent=0 // pred_check_branch
    %379 = sbr.rel (0) target = $region29
  $region28: #{baseline_forward.11} parent=0 // pred_region
    _
  $region29: #{baseline_forward.11} parent=0 // pred_fallthru
    _
  // Predicated region
  $region30: #{baseline_forward.11} parent=0 // pred_check
    _
  $region31: #{baseline_forward.11} parent=0 // pred_check_branch
    %381 = sbr.rel (0) target = $region33
  $region32: #{baseline_forward.11} parent=0 // pred_region
    _
  $region33: #{baseline_forward.11} parent=0 // pred_fallthru
    _

// kernel: baseline_forward.12
$region0: #{baseline_forward.12}
  #allocation0 [shape = 'u32[]', space=smem, size = 0x4, offset = 0x4, fixed_abs, tag = 'smem constant byte address 0x4 - core index']
  #allocation1 [shape = 'u32[144,128]{1,0:T(1,128)}', space=vmem, size = 0x12000, scoped, tag = 'internal scratch']
  #allocation2 [shape = 'f32[8,32]{1,0:T(8,128)}', space=vmem, size = 0x1000, scoped, tag = 'scratch operand']
  #allocation3 [shape = 'f32[8,1]{1,0:T(8,128)}', space=vmem, size = 0x1000, scoped, tag = 'scratch operand']
  %s0 = inlined_call_operand.vmem [shape: s32[1,32], index: 0, kind: input, shape index: {}]
  %s1 = inlined_call_operand.vmem [shape: s32[32,1], index: 1, kind: input, shape index: {}]
  %s2 = inlined_call_operand.vmem [shape: f32[48,16], index: 2, kind: input, shape index: {}]
  %s3 = inlined_call_operand.vmem [shape: f32[8,32], index: 3, kind: input, shape index: {}]
  %s4 = inlined_call_operand.vmem [shape: f32[16,32], index: 4, kind: input, shape index: {}]
  %s5 = inlined_call_operand.vmem [shape: f32[1,32], index: 5, kind: input, shape index: {}]
  %s6 = inlined_call_operand.vmem [shape: f32[1,32], index: 6, kind: input, shape index: {}]
  %s7 = inlined_call_operand.vmem [shape: f32[1,32], index: 7, kind: input, shape index: {}]
  %s8 = inlined_call_operand.vmem [shape: f32[8,32], index: 8, kind: output, shape index: {}]
  %s9 = sld [smem:[#allocation0]]
  $region50: #{baseline_forward.12} parent=0
    _
  %s11 = ssub.s32 1, %s9
  %s12 = scalar_select 0, %s11, %s9
  // Predicated region
  $region2: #{baseline_forward.12} parent=0 // pred_check
    _
  $region3: #{baseline_forward.12} parent=0 // pred_check_branch
    %14 = sbr.rel (0) target = $region5
  $region4: #{baseline_forward.12} parent=0 // pred_region
    _
  $region5: #{baseline_forward.12} parent=0 // pred_fallthru
    _
  // Predicated region
  $region6: #{baseline_forward.12} parent=0 // pred_check
    _
  $region7: #{baseline_forward.12} parent=0 // pred_check_branch
    %16 = sbr.rel (0) target = $region9
  $region8: #{baseline_forward.12} parent=0 // pred_region
    _
  $region9: #{baseline_forward.12} parent=0 // pred_fallthru
    _
  // Predicated region
  $region10: #{baseline_forward.12} parent=0 // pred_check
    _
  $region11: #{baseline_forward.12} parent=0 // pred_check_branch
    %18 = sbr.rel (0) target = $region13
  $region12: #{baseline_forward.12} parent=0 // pred_region
    _
  $region13: #{baseline_forward.12} parent=0 // pred_fallthru
    _
  // Predicated region
  $region14: #{baseline_forward.12} parent=0 // pred_check
    _
  $region15: #{baseline_forward.12} parent=0 // pred_check_branch
    %20 = sbr.rel (0) target = $region17
  $region16: #{baseline_forward.12} parent=0 // pred_region
    _
  $region17: #{baseline_forward.12} parent=0 // pred_fallthru
    _
  // Predicated region
  $region18: #{baseline_forward.12} parent=0 // pred_check
    _
  $region19: #{baseline_forward.12} parent=0 // pred_check_branch
    %22 = sbr.rel (0) target = $region21
  $region20: #{baseline_forward.12} parent=0 // pred_region
    _
  $region21: #{baseline_forward.12} parent=0 // pred_fallthru
    _
  // Predicated region
  $region22: #{baseline_forward.12} parent=0 // pred_check
    _
  $region23: #{baseline_forward.12} parent=0 // pred_check_branch
    %24 = sbr.rel (0) target = $region25
  $region24: #{baseline_forward.12} parent=0 // pred_region
    _
  $region25: #{baseline_forward.12} parent=0 // pred_fallthru
    _
  // Predicated region
  $region26: #{baseline_forward.12} parent=0 // pred_check
    _
  $region27: #{baseline_forward.12} parent=0 // pred_check_branch
    %26 = sbr.rel (0) target = $region29
  $region28: #{baseline_forward.12} parent=0 // pred_region
    _
  $region29: #{baseline_forward.12} parent=0 // pred_fallthru
    _
  // Predicated region
  $region30: #{baseline_forward.12} parent=0 // pred_check
    _
  $region31: #{baseline_forward.12} parent=0 // pred_check_branch
    %28 = sbr.rel (0) target = $region33
  $region32: #{baseline_forward.12} parent=0 // pred_region
    _
  $region33: #{baseline_forward.12} parent=0 // pred_fallthru
    _
  %p29 = scmp.eq.s32.totalorder 0, 0
  // Predicated region
  $region34: #{baseline_forward.12} parent=0 // pred_check
    %p30 = pneg %p29
  $region35: #{baseline_forward.12} parent=0 // pred_check_branch
    %32 = sbr.rel (%p30) target = $region37
  $region36: #{baseline_forward.12} parent=0 // pred_region
    %vm33 = vcmask 261120
    %34 = vst.msk [vmem:[#allocation2] sm:$0xff] %vm33, 0.0
    %vm35 = vcmask 7168
    %36 = vst.msk [vmem:[#allocation3] sm:$0xff] %vm35, 0.0
  $region37: #{baseline_forward.12} parent=0 // pred_fallthru
    _
  %v37 = vlaneseq
  %v38 = vand.u32 %v37, 127
  %v39 = vld [vmem:[%s1] sm:$0xff]
  %v40 = vld [vmem:[%s1 + $0x8] sm:$0xff]
  %v41 = vld [vmem:[%s1 + $0x10] sm:$0xff]
  %v42 = vld [vmem:[%s1 + $0x18] sm:$0xff]
  %43 = vset.pattern.permute.xlu0 0
  %44 = vperm.xlu0 %43, %v39
  %v45 = vpop.permute.xlu0 %44
  %46 = vset.pattern.permute.xlu0 0
  %47 = vperm.xlu0 %46, %v40
  %v48 = vpop.permute.xlu0 %47
  %49 = vset.pattern.permute.xlu0 0
  %50 = vperm.xlu0 %49, %v41
  %v51 = vpop.permute.xlu0 %50
  %52 = vset.pattern.permute.xlu0 0
  %53 = vperm.xlu0 %52, %v42
  %v54 = vpop.permute.xlu0 %53
  %vm55 = vcmp.eq.s32.totalorder %v38, %v45
  %vm56 = vcmp.eq.s32.totalorder %v38, %v48
  %vm57 = vcmp.eq.s32.totalorder %v38, %v51
  %vm58 = vcmp.eq.s32.totalorder %v38, %v54
  %v59 = vsel %vm55, 1, 0
  %v60 = vsel %vm56, 1, 0
  %v61 = vsel %vm57, 1, 0
  %v62 = vsel %vm58, 1, 0
  %v63 = vcvt.s32.f32 %v59
  %v64 = vcvt.s32.f32 %v60
  %v65 = vcvt.s32.f32 %v61
  %v66 = vcvt.s32.f32 %v62
  %v67 = vld [vmem:[%s3] sm:$0xff]
  %vm68 = vcmask 64512
  %v70 = vsel %vm68, %v63, 0
  %v73 = vsel %vm68, %v64, 0
  %v76 = vsel %vm68, %v65, 0
  %v79 = vsel %vm68, %v66, 0
  %81 = vmatprep.subr.mxu0 0.0
  %82 = vmatpush1.msra.mxu0 %v67
  %83 = vmatprep.subr.mxu0 0.0
  %84 = vmatpush1.msra.mxu0 0.0
  %85 = vmatprep.subr.mxu0 0.0
  %86 = vmatpush1.msra.mxu0 0.0
  %87 = vmatprep.subr.mxu0 0.0
  %88 = vmatpush1.msra.mxu0 0.0
  %89 = vmatprep.subr.mxu0 0.0
  %90 = vmatpush1.msra.mxu0 0.0
  %91 = vmatprep.subr.mxu0 0.0
  %92 = vmatpush1.msra.mxu0 0.0
  %93 = vmatprep.subr.mxu0 0.0
  %94 = vmatpush1.msra.mxu0 0.0
  %95 = vmatprep.subr.mxu0 0.0
  %96 = vmatpush1.msra.mxu0 0.0
  %97 = vmatprep.subr.mxu0 0.0
  %98 = vmatpush1.msra.mxu0 0.0
  %99 = vmatprep.subr.mxu0 0.0
  %100 = vmatpush1.msra.mxu0 0.0
  %101 = vmatprep.subr.mxu0 0.0
  %102 = vmatpush1.msra.mxu0 0.0
  %103 = vmatprep.subr.mxu0 0.0
  %104 = vmatpush1.msra.mxu0 0.0
  %105 = vmatprep.subr.mxu0 0.0
  %106 = vmatpush1.msra.mxu0 0.0
  %107 = vmatprep.subr.mxu0 0.0
  %108 = vmatpush1.msra.mxu0 0.0
  %109 = vmatprep.subr.mxu0 0.0
  %110 = vmatpush1.msra.mxu0 0.0
  %111 = vmatprep.subr.mxu0 0.0
  %112 = vmatpush1.msra.mxu0 0.0
  %113 = vmatprep.subr.mxu0 0.0
  %114 = vmatpush1.msra.mxu0 0.0
  %115 = vmatprep.subr.mxu0 0.0
  %116 = vmatpush1.msra.mxu0 0.0
  %117 = vmatprep.subr.mxu0 0.0
  %118 = vmatpush1.msra.mxu0 0.0
  %119 = vmatprep.subr.mxu0 0.0
  %120 = vmatpush1.msra.mxu0 0.0
  %121 = vmatprep.subr.mxu0 0.0
  %122 = vmatpush1.msra.mxu0 0.0
  %123 = vmatprep.subr.mxu0 0.0
  %124 = vmatpush1.msra.mxu0 0.0
  %125 = vmatprep.subr.mxu0 0.0
  %126 = vmatpush1.msra.mxu0 0.0
  %127 = vmatprep.subr.mxu0 0.0
  %128 = vmatpush1.msra.mxu0 0.0
  %129 = vmatprep.subr.mxu0 0.0
  %130 = vmatpush1.msra.mxu0 0.0
  %131 = vmatprep.subr.mxu0 0.0
  %132 = vmatpush1.msra.mxu0 0.0
  %133 = vmatprep.subr.mxu0 0.0
  %134 = vmatpush1.msra.mxu0 0.0
  %135 = vmatprep.subr.mxu0 0.0
  %136 = vmatpush1.msra.mxu0 0.0
  %137 = vmatprep.subr.mxu0 0.0
  %138 = vmatpush1.msra.mxu0 0.0
  %139 = vmatprep.subr.mxu0 0.0
  %140 = vmatpush1.msra.mxu0 0.0
  %141 = vmatprep.subr.mxu0 0.0
  %142 = vmatpush1.msra.mxu0 0.0
  %143 = vmatprep.subr.mxu0 0.0
  %144 = vmatpush1.msra.mxu0 0.0
  %145 = vmatprep.mubr.f32.mxu0 0.0
  %146 = vmatmul.mubr.f32.gmra.mrb[0].mxu0 %v70
  %v147 = vpop.f32.mrb[0].mxu0
  %v148 = vadd.f32 0.0, %v147
  %v149 = vpop.f32.mrb[0].mxu0
  %150 = vmatprep.mubr.f32.mxu0 0.0
  %151 = vmatmul.mubr.f32.gmra.mrb[0].mxu0 %v73
  %v152 = vpop.f32.mrb[0].mxu0
  %v153 = vadd.f32 0.0, %v152
  %v154 = vpop.f32.mrb[0].mxu0
  %155 = vmatprep.mubr.f32.mxu0 0.0
  %156 = vmatmul.mubr.f32.gmra.mrb[0].mxu0 %v76
  %v157 = vpop.f32.mrb[0].mxu0
  %v158 = vadd.f32 0.0, %v157
  %v159 = vpop.f32.mrb[0].mxu0
  %160 = vmatprep.mubr.f32.mxu0 0.0
  %161 = vmatmul.mubr.f32.gmra.mrb[0].mxu0 %v79
  %v162 = vpop.f32.mrb[0].mxu0
  %v163 = vadd.f32 0.0, %v162
  %v164 = vpop.f32.mrb[0].mxu0
  %165 = vdwg.mxu0
  %v166 = vld [vmem:[%s2] sm:$0xff]
  %v167 = vld [vmem:[%s2 + $0x8] sm:$0xff]
  %v168 = vld [vmem:[%s2 + $0x10] sm:$0xff]
  %v169 = vld [vmem:[%s2 + $0x18] sm:$0xff]
  %v170 = vld [vmem:[%s4] sm:$0xff]
  %v171 = vld [vmem:[%s4 + $0x8] sm:$0xff]
  %v172 = vld [vmem:[%s5] sm:$0x1]
  %v174 = vlaneseq
  %v175 = vshrl.u32 %v174, 7
  %v176 = vsub.s32 0, %v175
  %v177 = vrot.slane %v172, %v176
  %vm179 = vcmask 130048
  %v181 = vsel %vm179, %v166, 0
  %v184 = vsel %vm179, %v167, 0
  %v187 = vsel %vm179, %v168, 0
  %v190 = vsel %vm179, %v169, 0
  %192 = vmatprep.subr.mxu0 0.0
  %193 = vmatpush1.msra.mxu0 %v170
  %194 = vmatprep.subr.mxu0 0.0
  %195 = vmatpush1.msra.mxu0 %v171
  %196 = vmatprep.subr.mxu0 0.0
  %197 = vmatpush1.msra.mxu0 0.0
  %198 = vmatprep.subr.mxu0 0.0
  %199 = vmatpush1.msra.mxu0 0.0
  %200 = vmatprep.subr.mxu0 0.0
  %201 = vmatpush1.msra.mxu0 0.0
  %202 = vmatprep.subr.mxu0 0.0
  %203 = vmatpush1.msra.mxu0 0.0
  %204 = vmatprep.subr.mxu0 0.0
  %205 = vmatpush1.msra.mxu0 0.0
  %206 = vmatprep.subr.mxu0 0.0
  %207 = vmatpush1.msra.mxu0 0.0
  %208 = vmatprep.subr.mxu0 0.0
  %209 = vmatpush1.msra.mxu0 0.0
  %210 = vmatprep.subr.mxu0 0.0
  %211 = vmatpush1.msra.mxu0 0.0
  %212 = vmatprep.subr.mxu0 0.0
  %213 = vmatpush1.msra.mxu0 0.0
  %214 = vmatprep.subr.mxu0 0.0
  %215 = vmatpush1.msra.mxu0 0.0
  %216 = vmatprep.subr.mxu0 0.0
  %217 = vmatpush1.msra.mxu0 0.0
  %218 = vmatprep.subr.mxu0 0.0
  %219 = vmatpush1.msra.mxu0 0.0
  %220 = vmatprep.subr.mxu0 0.0
  %221 = vmatpush1.msra.mxu0 0.0
  %222 = vmatprep.subr.mxu0 0.0
  %223 = vmatpush1.msra.mxu0 0.0
  %224 = vmatprep.subr.mxu0 0.0
  %225 = vmatpush1.msra.mxu0 0.0
  %226 = vmatprep.subr.mxu0 0.0
  %227 = vmatpush1.msra.mxu0 0.0
  %228 = vmatprep.subr.mxu0 0.0
  %229 = vmatpush1.msra.mxu0 0.0
  %230 = vmatprep.subr.mxu0 0.0
  %231 = vmatpush1.msra.mxu0 0.0
  %232 = vmatprep.subr.mxu0 0.0
  %233 = vmatpush1.msra.mxu0 0.0
  %234 = vmatprep.subr.mxu0 0.0
  %235 = vmatpush1.msra.mxu0 0.0
  %236 = vmatprep.subr.mxu0 0.0
  %237 = vmatpush1.msra.mxu0 0.0
  %238 = vmatprep.subr.mxu0 0.0
  %239 = vmatpush1.msra.mxu0 0.0
  %240 = vmatprep.subr.mxu0 0.0
  %241 = vmatpush1.msra.mxu0 0.0
  %242 = vmatprep.subr.mxu0 0.0
  %243 = vmatpush1.msra.mxu0 0.0
  %244 = vmatprep.subr.mxu0 0.0
  %245 = vmatpush1.msra.mxu0 0.0
  %246 = vmatprep.subr.mxu0 0.0
  %247 = vmatpush1.msra.mxu0 0.0
  %248 = vmatprep.subr.mxu0 0.0
  %249 = vmatpush1.msra.mxu0 0.0
  %250 = vmatprep.subr.mxu0 0.0
  %251 = vmatpush1.msra.mxu0 0.0
  %252 = vmatprep.subr.mxu0 0.0
  %253 = vmatpush1.msra.mxu0 0.0
  %254 = vmatprep.subr.mxu0 0.0
  %255 = vmatpush1.msra.mxu0 0.0
  %256 = vmatprep.mubr.f32.mxu0 0.0
  %257 = vmatmul.mubr.f32.gmra.mrb[0].mxu0 %v181
  %v258 = vpop.f32.mrb[0].mxu0
  %v259 = vadd.f32 %v177, %v258
  %v260 = vpop.f32.mrb[0].mxu0
  %261 = vmatprep.mubr.f32.mxu0 0.0
  %262 = vmatmul.mubr.f32.gmra.mrb[0].mxu0 %v184
  %v263 = vpop.f32.mrb[0].mxu0
  %v264 = vadd.f32 %v177, %v263
  %v265 = vpop.f32.mrb[0].mxu0
  %266 = vmatprep.mubr.f32.mxu0 0.0
  %267 = vmatmul.mubr.f32.gmra.mrb[0].mxu0 %v187
  %v268 = vpop.f32.mrb[0].mxu0
  %v269 = vadd.f32 %v177, %v268
  %v270 = vpop.f32.mrb[0].mxu0
  %271 = vmatprep.mubr.f32.mxu0 0.0
  %272 = vmatmul.mubr.f32.gmra.mrb[0].mxu0 %v190
  %v273 = vpop.f32.mrb[0].mxu0
  %v274 = vadd.f32 %v177, %v273
  %v275 = vpop.f32.mrb[0].mxu0
  %276 = vdwg.mxu0
  %v277 = vmul.f32 %v259, %v148
  %v278 = vmul.f32 %v264, %v153
  %v279 = vmul.f32 %v269, %v158
  %v280 = vmul.f32 %v274, %v163
  %v281 = vlaneseq
  %v282 = vshrl.u32 %v281, 7
  %v283 = vld [vmem:[%s0] sm:$0x1]
  %v284 = vlaneseq
  %v285 = vshrl.u32 %v284, 7
  %v286 = vsub.s32 0, %v285
  %v287 = vrot.slane %v283, %v286
  %vm288 = vcmp.eq.s32.totalorder %v282, %v287
  %v289 = vsel %vm288, 1, 0
  %v290 = vcvt.s32.f32 %v289
  %v291 = vld [vmem:[#allocation2] sm:$0xff]
  %vm292 = vcmask 261120
  %v294 = vsel %vm292, %v290, 0
  %296 = vmatprep.subr.mxu0 0.0
  %297 = vmatpush1.msra.mxu0 %v277
  %298 = vmatprep.subr.mxu0 0.0
  %299 = vmatpush1.msra.mxu0 %v278
  %300 = vmatprep.subr.mxu0 0.0
  %301 = vmatpush1.msra.mxu0 %v279
  %302 = vmatprep.subr.mxu0 0.0
  %303 = vmatpush1.msra.mxu0 %v280
  %304 = vmatprep.subr.mxu0 0.0
  %305 = vmatpush1.msra.mxu0 0.0
  %306 = vmatprep.subr.mxu0 0.0
  %307 = vmatpush1.msra.mxu0 0.0
  %308 = vmatprep.subr.mxu0 0.0
  %309 = vmatpush1.msra.mxu0 0.0
  %310 = vmatprep.subr.mxu0 0.0
  %311 = vmatpush1.msra.mxu0 0.0
  %312 = vmatprep.subr.mxu0 0.0
  %313 = vmatpush1.msra.mxu0 0.0
  %314 = vmatprep.subr.mxu0 0.0
  %315 = vmatpush1.msra.mxu0 0.0
  %316 = vmatprep.subr.mxu0 0.0
  %317 = vmatpush1.msra.mxu0 0.0
  %318 = vmatprep.subr.mxu0 0.0
  %319 = vmatpush1.msra.mxu0 0.0
  %320 = vmatprep.subr.mxu0 0.0
  %321 = vmatpush1.msra.mxu0 0.0
  %322 = vmatprep.subr.mxu0 0.0
  %323 = vmatpush1.msra.mxu0 0.0
  %324 = vmatprep.subr.mxu0 0.0
  %325 = vmatpush1.msra.mxu0 0.0
  %326 = vmatprep.subr.mxu0 0.0
  %327 = vmatpush1.msra.mxu0 0.0
  %328 = vmatprep.subr.mxu0 0.0
  %329 = vmatpush1.msra.mxu0 0.0
  %330 = vmatprep.subr.mxu0 0.0
  %331 = vmatpush1.msra.mxu0 0.0
  %332 = vmatprep.subr.mxu0 0.0
  %333 = vmatpush1.msra.mxu0 0.0
  %334 = vmatprep.subr.mxu0 0.0
  %335 = vmatpush1.msra.mxu0 0.0
  %336 = vmatprep.subr.mxu0 0.0
  %337 = vmatpush1.msra.mxu0 0.0
  %338 = vmatprep.subr.mxu0 0.0
  %339 = vmatpush1.msra.mxu0 0.0
  %340 = vmatprep.subr.mxu0 0.0
  %341 = vmatpush1.msra.mxu0 0.0
  %342 = vmatprep.subr.mxu0 0.0
  %343 = vmatpush1.msra.mxu0 0.0
  %344 = vmatprep.subr.mxu0 0.0
  %345 = vmatpush1.msra.mxu0 0.0
  %346 = vmatprep.subr.mxu0 0.0
  %347 = vmatpush1.msra.mxu0 0.0
  %348 = vmatprep.subr.mxu0 0.0
  %349 = vmatpush1.msra.mxu0 0.0
  %350 = vmatprep.subr.mxu0 0.0
  %351 = vmatpush1.msra.mxu0 0.0
  %352 = vmatprep.subr.mxu0 0.0
  %353 = vmatpush1.msra.mxu0 0.0
  %354 = vmatprep.subr.mxu0 0.0
  %355 = vmatpush1.msra.mxu0 0.0
  %356 = vmatprep.subr.mxu0 0.0
  %357 = vmatpush1.msra.mxu0 0.0
  %358 = vmatprep.subr.mxu0 0.0
  %359 = vmatpush1.msra.mxu0 0.0
  %360 = vmatprep.mubr.f32.mxu0 0.0
  %361 = vmatmul.mubr.f32.gmra.mrb[0].mxu0 %v294
  %v362 = vpop.f32.mrb[0].mxu0
  %v363 = vadd.f32 0.0, %v362
  %v364 = vpop.f32.mrb[0].mxu0
  %365 = vdwg.mxu0
  %v366 = vadd.f32 %v291, %v363
  %367 = vst.msk [vmem:[#allocation2] sm:$0xff] %vm292, %v366
  %v368 = vld [vmem:[#allocation3] sm:$0xff]
  %v369 = vsel %vm292, %v290, 0.0
  %370 = vadd.xlane.f32.xlu0 %v369
  %v371 = vpop.xlane.xlu0 %370
  %v372 = vadd.f32 %v368, %v371
  %vm373 = vcmask 7168
  %374 = vst.msk [vmem:[#allocation3] sm:$0xff] %vm373, %v372
  // Predicated region
  $region38: #{baseline_forward.12} parent=0 // pred_check
    %p375 = pneg %p29
  $region39: #{baseline_forward.12} parent=0 // pred_check_branch
    %377 = sbr.rel (%p375) target = $region41
  $region40: #{baseline_forward.12} parent=0 // pred_region
    %v378 = vld [vmem:[#allocation2] sm:$0xff]
    %v379 = vld [vmem:[#allocation3] sm:$0xff]
    %v380 = vmax.f32 %v379, 1.0
    %382 = vset.pattern.permute.xlu0 0
    %383 = vperm.xlu0 %382, %v380
    %v384 = vpop.permute.xlu0 %383
    %v386 = vrcp.pop %v384
    %v387 = vmul.f32 %v378, %v386
    %v388 = vld [vmem:[%s3] sm:$0xff]
    %v389 = vmul.f32 %v388, 0.8944272
    %v390 = vld [vmem:[%s6] sm:$0x1]
    %v391 = vld [vmem:[%s7] sm:$0x1]
    %v392 = vsel %vm292, %v387, 0.0
    %393 = vadd.xlane.f32.xlu0 %v392
    %v394 = vpop.xlane.xlu0 %393
    %v395 = vrcp.pop 32.0
    %v396 = vmul.f32 %v394, %v395
    %v397 = vsub.f32 %v387, %v396
    %v398 = vmul.f32 %v397, %v397
    %v399 = vsel %vm292, %v398, 0.0
    %400 = vadd.xlane.f32.xlu0 %v399
    %v401 = vpop.xlane.xlu0 %400
    %v402 = vmul.f32 %v401, %v395
    %v403 = vadd.f32 %v402, 1e-05
    %v404 = vrsqrt.pop %v403
    %v405 = vmul.f32 %v397, %v404
    %v407 = vlaneseq
    %v408 = vshrl.u32 %v407, 7
    %v409 = vsub.s32 0, %v408
    %v410 = vrot.slane %v390, %v409
    %v412 = vmul.f32 %v405, %v410
    %v414 = vlaneseq
    %v415 = vshrl.u32 %v414, 7
    %v416 = vsub.s32 0, %v415
    %v417 = vrot.slane %v391, %v416
    %v419 = vadd.f32 %v412, %v417
    %v420 = vmul.f32 %v419, 0.4472
    %v421 = vadd.f32 %v389, %v420
    %422 = vst.msk [vmem:[%s8] sm:$0xff] %vm292, %v421
  $region41: #{baseline_forward.12} parent=0 // pred_fallthru
    _
  // Predicated region
  $region42: #{baseline_forward.12} parent=0 // pred_check
    _
  $region43: #{baseline_forward.12} parent=0 // pred_check_branch
    %424 = sbr.rel (0) target = $region45
  $region44: #{baseline_forward.12} parent=0 // pred_region
    _
  $region45: #{baseline_forward.12} parent=0 // pred_fallthru
    _
  // Predicated region
  $region46: #{baseline_forward.12} parent=0 // pred_check
    _
  $region47: #{baseline_forward.12} parent=0 // pred_check_branch
    %426 = sbr.rel (0) target = $region49
  $region48: #{baseline_forward.12} parent=0 // pred_region
    _
  $region49: #{baseline_forward.12} parent=0 // pred_fallthru
    _

// kernel: baseline_forward.10
$region0: #{baseline_forward.10}
  #allocation0 [shape = 'u32[]', space=smem, size = 0x4, offset = 0x4, fixed_abs, tag = 'smem constant byte address 0x4 - core index']
  #allocation1 [shape = 'u32[144,128]{1,0:T(1,128)}', space=vmem, size = 0x12000, scoped, tag = 'internal scratch']
  #allocation2 [shape = 'f32[8,8]{1,0:T(8,128)}', space=vmem, size = 0x1000, scoped, tag = 'scratch operand']
  #allocation3 [shape = 'f32[8,8]{1,0:T(8,128)}', space=vmem, size = 0x1000, scoped, tag = 'scratch operand']
  #allocation4 [shape = 'f32[8,8]{1,0:T(8,128)}', space=vmem, size = 0x1000, scoped, tag = 'scratch operand']
  #allocation5 [shape = 'f32[8,1]{1,0:T(8,128)}', space=vmem, size = 0x1000, scoped, tag = 'scratch operand']
  %s0 = inlined_call_operand.vmem [shape: s32[1,32], index: 0, kind: input, shape index: {}]
  %s1 = inlined_call_operand.vmem [shape: f32[48,8], index: 1, kind: input, shape index: {}]
  %s2 = inlined_call_operand.vmem [shape: f32[32,3], index: 2, kind: input, shape index: {}]
  %s3 = inlined_call_operand.vmem [shape: f32[48,1], index: 3, kind: input, shape index: {}]
  %s4 = inlined_call_operand.vmem [shape: f32[1,32], index: 4, kind: input, shape index: {}]
  %s5 = inlined_call_operand.vmem [shape: f32[1,32], index: 5, kind: input, shape index: {}]
  %s6 = inlined_call_operand.vmem [shape: f32[8,32], index: 6, kind: output, shape index: {}]
  %s7 = sld [smem:[#allocation0]]
  $region42: #{baseline_forward.10} parent=0
    _
  %s9 = ssub.s32 1, %s7
  %s10 = scalar_select 0, %s9, %s7
  // Predicated region
  $region2: #{baseline_forward.10} parent=0 // pred_check
    _
  $region3: #{baseline_forward.10} parent=0 // pred_check_branch
    %12 = sbr.rel (0) target = $region5
  $region4: #{baseline_forward.10} parent=0 // pred_region
    _
  $region5: #{baseline_forward.10} parent=0 // pred_fallthru
    _
  // Predicated region
  $region6: #{baseline_forward.10} parent=0 // pred_check
    _
  $region7: #{baseline_forward.10} parent=0 // pred_check_branch
    %14 = sbr.rel (0) target = $region9
  $region8: #{baseline_forward.10} parent=0 // pred_region
    _
  $region9: #{baseline_forward.10} parent=0 // pred_fallthru
    _
  // Predicated region
  $region10: #{baseline_forward.10} parent=0 // pred_check
    _
  $region11: #{baseline_forward.10} parent=0 // pred_check_branch
    %16 = sbr.rel (0) target = $region13
  $region12: #{baseline_forward.10} parent=0 // pred_region
    _
  $region13: #{baseline_forward.10} parent=0 // pred_fallthru
    _
  // Predicated region
  $region14: #{baseline_forward.10} parent=0 // pred_check
    _
  $region15: #{baseline_forward.10} parent=0 // pred_check_branch
    %18 = sbr.rel (0) target = $region17
  $region16: #{baseline_forward.10} parent=0 // pred_region
    _
  $region17: #{baseline_forward.10} parent=0 // pred_fallthru
    _
  // Predicated region
  $region18: #{baseline_forward.10} parent=0 // pred_check
    _
  $region19: #{baseline_forward.10} parent=0 // pred_check_branch
    %20 = sbr.rel (0) target = $region21
  $region20: #{baseline_forward.10} parent=0 // pred_region
    _
  $region21: #{baseline_forward.10} parent=0 // pred_fallthru
    _
  // Predicated region
  $region22: #{baseline_forward.10} parent=0 // pred_check
    _
  $region23: #{baseline_forward.10} parent=0 // pred_check_branch
    %22 = sbr.rel (0) target = $region25
  $region24: #{baseline_forward.10} parent=0 // pred_region
    _
  $region25: #{baseline_forward.10} parent=0 // pred_fallthru
    _
  %p23 = scmp.eq.s32.totalorder 0, 0
  // Predicated region
  $region26: #{baseline_forward.10} parent=0 // pred_check
    %p24 = pneg %p23
  $region27: #{baseline_forward.10} parent=0 // pred_check_branch
    %26 = sbr.rel (%p24) target = $region29
  $region28: #{baseline_forward.10} parent=0 // pred_region
    %vm27 = vcmask 64512
    %28 = vst.msk [vmem:[#allocation2] sm:$0xff] %vm27, 0.0
    %29 = vst.msk [vmem:[#allocation3] sm:$0xff] %vm27, 0.0
    %30 = vst.msk [vmem:[#allocation4] sm:$0xff] %vm27, 0.0
    %vm31 = vcmask 7168
    %32 = vst.msk [vmem:[#allocation5] sm:$0xff] %vm31, 0.0
  $region29: #{baseline_forward.10} parent=0 // pred_fallthru
    _
  %v33 = vld [vmem:[%s0] sm:$0x1]
  %v34 = vlaneseq
  %v35 = vshrl.u32 %v34, 7
  %v36 = vlaneseq
  %v37 = vshrl.u32 %v36, 7
  %v38 = vsub.s32 0, %v37
  %v39 = vrot.slane %v33, %v38
  %vm40 = vcmp.eq.s32.totalorder %v35, %v39
  %v41 = vsel %vm40, 1, 0
  %v42 = vcvt.s32.f32 %v41
  %v43 = vld [vmem:[%s3] sm:$0xff]
  %v44 = vld [vmem:[%s3 + $0x8] sm:$0xff]
  %v45 = vld [vmem:[%s3 + $0x10] sm:$0xff]
  %v46 = vld [vmem:[%s3 + $0x18] sm:$0xff]
  %v47 = vmul.f32 %v43, 0.25
  %v48 = vmul.f32 %v44, 0.25
  %v49 = vmul.f32 %v45, 0.25
  %v50 = vmul.f32 %v46, 0.25
  %v51 = vmul.f32 %v47, %v47
  %v52 = vmul.f32 %v48, %v48
  %v53 = vmul.f32 %v49, %v49
  %v54 = vmul.f32 %v50, %v50
  %v55 = vmul.f32 %v51, %v51
  %v56 = vmul.f32 %v52, %v52
  %v57 = vmul.f32 %v53, %v53
  %v58 = vmul.f32 %v54, %v54
  %v59 = vmul.f32 %v51, %v55
  %v60 = vmul.f32 %v52, %v56
  %v61 = vmul.f32 %v53, %v57
  %v62 = vmul.f32 %v54, %v58
  %v63 = vmul.f32 %v59, %v47
  %v64 = vmul.f32 %v60, %v48
  %v65 = vmul.f32 %v61, %v49
  %v66 = vmul.f32 %v62, %v50
  %v67 = vmul.f32 %v63, %v47
  %v68 = vmul.f32 %v64, %v48
  %v69 = vmul.f32 %v65, %v49
  %v70 = vmul.f32 %v66, %v50
  %v71 = vmul.f32 %v59, 28.0
  %v72 = vmul.f32 %v60, 28.0
  %v73 = vmul.f32 %v61, 28.0
  %v74 = vmul.f32 %v62, 28.0
  %v75 = vsub.f32 1.0, %v71
  %v76 = vsub.f32 1.0, %v72
  %v77 = vsub.f32 1.0, %v73
  %v78 = vsub.f32 1.0, %v74
  %v79 = vmul.f32 %v63, 48.0
  %v80 = vmul.f32 %v64, 48.0
  %v81 = vmul.f32 %v65, 48.0
  %v82 = vmul.f32 %v66, 48.0
  %v83 = vadd.f32 %v75, %v79
  %v84 = vadd.f32 %v76, %v80
  %v85 = vadd.f32 %v77, %v81
  %v86 = vadd.f32 %v78, %v82
  %v87 = vmul.f32 %v67, 21.0
  %v88 = vmul.f32 %v68, 21.0
  %v89 = vmul.f32 %v69, 21.0
  %v90 = vmul.f32 %v70, 21.0
  %v91 = vsub.f32 %v83, %v87
  %v92 = vsub.f32 %v84, %v88
  %v93 = vsub.f32 %v85, %v89
  %v94 = vsub.f32 %v86, %v90
  %vm95 = vcmp.lt.f32.partialorder %v47, 1.0
  %vm96 = vcmp.lt.f32.partialorder %v48, 1.0
  %vm97 = vcmp.lt.f32.partialorder %v49, 1.0
  %vm98 = vcmp.lt.f32.partialorder %v50, 1.0
  %v99 = vsel %vm95, %v91, 0.0
  %v100 = vsel %vm96, %v92, 0.0
  %v101 = vsel %vm97, %v93, 0.0
  %v102 = vsel %vm98, %v94, 0.0
  %v103 = vld [vmem:[%s1] sm:$0xff]
  %v104 = vld [vmem:[%s1 + $0x8] sm:$0xff]
  %v105 = vld [vmem:[%s1 + $0x10] sm:$0xff]
  %v106 = vld [vmem:[%s1 + $0x18] sm:$0xff]
  %v107 = vld [vmem:[%s2] sm:$0xff]
  %v108 = vld [vmem:[%s2 + $0x8] sm:$0xff]
  %v109 = vld [vmem:[%s2 + $0x10] sm:$0xff]
  %v110 = vld [vmem:[%s2 + $0x18] sm:$0xff]
  %112 = vset.pattern.permute.xlu0 0
  %113 = vperm.xlu0 %112, %v99
  %v114 = vpop.permute.xlu0 %113
  %117 = vset.pattern.permute.xlu0 0
  %118 = vperm.xlu0 %117, %v100
  %v119 = vpop.permute.xlu0 %118
  %122 = vset.pattern.permute.xlu0 0
  %123 = vperm.xlu0 %122, %v101
  %v124 = vpop.permute.xlu0 %123
  %127 = vset.pattern.permute.xlu0 0
  %128 = vperm.xlu0 %127, %v102
  %v129 = vpop.permute.xlu0 %128
  %v131 = vmul.f32 %v107, %v114
  %v132 = vmul.f32 %v108, %v119
  %v133 = vmul.f32 %v109, %v124
  %v134 = vmul.f32 %v110, %v129
  %v135 = vld [vmem:[#allocation2] sm:$0xff]
  %137 = vset.pattern.permute.xlu0 0
  %138 = vperm.xlu0 %137, %v131
  %v139 = vpop.permute.xlu0 %138
  %142 = vset.pattern.permute.xlu0 0
  %143 = vperm.xlu0 %142, %v132
  %v144 = vpop.permute.xlu0 %143
  %147 = vset.pattern.permute.xlu0 0
  %148 = vperm.xlu0 %147, %v133
  %v149 = vpop.permute.xlu0 %148
  %152 = vset.pattern.permute.xlu0 0
  %153 = vperm.xlu0 %152, %v134
  %v154 = vpop.permute.xlu0 %153
  %v156 = vmul.f32 %v139, %v103
  %v157 = vmul.f32 %v144, %v104
  %v158 = vmul.f32 %v149, %v105
  %v159 = vmul.f32 %v154, %v106
  %vm160 = vcmask 261120
  %v162 = vsel %vm160, %v42, 0
  %164 = vmatprep.subr.mxu0 0.0
  %165 = vmatpush1.msra.mxu0 %v156
  %166 = vmatprep.subr.mxu0 0.0
  %167 = vmatpush1.msra.mxu0 %v157
  %168 = vmatprep.subr.mxu0 0.0
  %169 = vmatpush1.msra.mxu0 %v158
  %170 = vmatprep.subr.mxu0 0.0
  %171 = vmatpush1.msra.mxu0 %v159
  %172 = vmatprep.subr.mxu0 0.0
  %173 = vmatpush1.msra.mxu0 0.0
  %174 = vmatprep.subr.mxu0 0.0
  %175 = vmatpush1.msra.mxu0 0.0
  %176 = vmatprep.subr.mxu0 0.0
  %177 = vmatpush1.msra.mxu0 0.0
  %178 = vmatprep.subr.mxu0 0.0
  %179 = vmatpush1.msra.mxu0 0.0
  %180 = vmatprep.subr.mxu0 0.0
  %181 = vmatpush1.msra.mxu0 0.0
  %182 = vmatprep.subr.mxu0 0.0
  %183 = vmatpush1.msra.mxu0 0.0
  %184 = vmatprep.subr.mxu0 0.0
  %185 = vmatpush1.msra.mxu0 0.0
  %186 = vmatprep.subr.mxu0 0.0
  %187 = vmatpush1.msra.mxu0 0.0
  %188 = vmatprep.subr.mxu0 0.0
  %189 = vmatpush1.msra.mxu0 0.0
  %190 = vmatprep.subr.mxu0 0.0
  %191 = vmatpush1.msra.mxu0 0.0
  %192 = vmatprep.subr.mxu0 0.0
  %193 = vmatpush1.msra.mxu0 0.0
  %194 = vmatprep.subr.mxu0 0.0
  %195 = vmatpush1.msra.mxu0 0.0
  %196 = vmatprep.subr.mxu0 0.0
  %197 = vmatpush1.msra.mxu0 0.0
  %198 = vmatprep.subr.mxu0 0.0
  %199 = vmatpush1.msra.mxu0 0.0
  %200 = vmatprep.subr.mxu0 0.0
  %201 = vmatpush1.msra.mxu0 0.0
  %202 = vmatprep.subr.mxu0 0.0
  %203 = vmatpush1.msra.mxu0 0.0
  %204 = vmatprep.subr.mxu0 0.0
  %205 = vmatpush1.msra.mxu0 0.0
  %206 = vmatprep.subr.mxu0 0.0
  %207 = vmatpush1.msra.mxu0 0.0
  %208 = vmatprep.subr.mxu0 0.0
  %209 = vmatpush1.msra.mxu0 0.0
  %210 = vmatprep.subr.mxu0 0.0
  %211 = vmatpush1.msra.mxu0 0.0
  %212 = vmatprep.subr.mxu0 0.0
  %213 = vmatpush1.msra.mxu0 0.0
  %214 = vmatprep.subr.mxu0 0.0
  %215 = vmatpush1.msra.mxu0 0.0
  %216 = vmatprep.subr.mxu0 0.0
  %217 = vmatpush1.msra.mxu0 0.0
  %218 = vmatprep.subr.mxu0 0.0
  %219 = vmatpush1.msra.mxu0 0.0
  %220 = vmatprep.subr.mxu0 0.0
  %221 = vmatpush1.msra.mxu0 0.0
  %222 = vmatprep.subr.mxu0 0.0
  %223 = vmatpush1.msra.mxu0 0.0
  %224 = vmatprep.subr.mxu0 0.0
  %225 = vmatpush1.msra.mxu0 0.0
  %226 = vmatprep.subr.mxu0 0.0
  %227 = vmatpush1.msra.mxu0 0.0
  %228 = vmatprep.mubr.f32.mxu0 0.0
  %229 = vmatmul.mubr.f32.gmra.mrb[0].mxu0 %v162
  %v230 = vpop.f32.mrb[0].mxu0
  %v231 = vadd.f32 0.0, %v230
  %v232 = vpop.f32.mrb[0].mxu0
  %233 = vdwg.mxu0
  %v234 = vadd.f32 %v135, %v231
  %vm235 = vcmask 64512
  %236 = vst.msk [vmem:[#allocation2] sm:$0xff] %vm235, %v234
  %v237 = vld [vmem:[#allocation3] sm:$0xff]
  %238 = vset.pattern.permute.xlu0 1
  %239 = vperm.xlu0 %238, %v131
  %v240 = vpop.permute.xlu0 %239
  %242 = vset.pattern.permute.xlu0 1
  %243 = vperm.xlu0 %242, %v132
  %v244 = vpop.permute.xlu0 %243
  %246 = vset.pattern.permute.xlu0 1
  %247 = vperm.xlu0 %246, %v133
  %v248 = vpop.permute.xlu0 %247
  %250 = vset.pattern.permute.xlu0 1
  %251 = vperm.xlu0 %250, %v134
  %v252 = vpop.permute.xlu0 %251
  %v254 = vmul.f32 %v240, %v103
  %v255 = vmul.f32 %v244, %v104
  %v256 = vmul.f32 %v248, %v105
  %v257 = vmul.f32 %v252, %v106
  %258 = vmatprep.subr.mxu0 0.0
  %259 = vmatpush1.msra.mxu0 %v254
  %260 = vmatprep.subr.mxu0 0.0
  %261 = vmatpush1.msra.mxu0 %v255
  %262 = vmatprep.subr.mxu0 0.0
  %263 = vmatpush1.msra.mxu0 %v256
  %264 = vmatprep.subr.mxu0 0.0
  %265 = vmatpush1.msra.mxu0 %v257
  %266 = vmatprep.subr.mxu0 0.0
  %267 = vmatpush1.msra.mxu0 0.0
  %268 = vmatprep.subr.mxu0 0.0
  %269 = vmatpush1.msra.mxu0 0.0
  %270 = vmatprep.subr.mxu0 0.0
  %271 = vmatpush1.msra.mxu0 0.0
  %272 = vmatprep.subr.mxu0 0.0
  %273 = vmatpush1.msra.mxu0 0.0
  %274 = vmatprep.subr.mxu0 0.0
  %275 = vmatpush1.msra.mxu0 0.0
  %276 = vmatprep.subr.mxu0 0.0
  %277 = vmatpush1.msra.mxu0 0.0
  %278 = vmatprep.subr.mxu0 0.0
  %279 = vmatpush1.msra.mxu0 0.0
  %280 = vmatprep.subr.mxu0 0.0
  %281 = vmatpush1.msra.mxu0 0.0
  %282 = vmatprep.subr.mxu0 0.0
  %283 = vmatpush1.msra.mxu0 0.0
  %284 = vmatprep.subr.mxu0 0.0
  %285 = vmatpush1.msra.mxu0 0.0
  %286 = vmatprep.subr.mxu0 0.0
  %287 = vmatpush1.msra.mxu0 0.0
  %288 = vmatprep.subr.mxu0 0.0
  %289 = vmatpush1.msra.mxu0 0.0
  %290 = vmatprep.subr.mxu0 0.0
  %291 = vmatpush1.msra.mxu0 0.0
  %292 = vmatprep.subr.mxu0 0.0
  %293 = vmatpush1.msra.mxu0 0.0
  %294 = vmatprep.subr.mxu0 0.0
  %295 = vmatpush1.msra.mxu0 0.0
  %296 = vmatprep.subr.mxu0 0.0
  %297 = vmatpush1.msra.mxu0 0.0
  %298 = vmatprep.subr.mxu0 0.0
  %299 = vmatpush1.msra.mxu0 0.0
  %300 = vmatprep.subr.mxu0 0.0
  %301 = vmatpush1.msra.mxu0 0.0
  %302 = vmatprep.subr.mxu0 0.0
  %303 = vmatpush1.msra.mxu0 0.0
  %304 = vmatprep.subr.mxu0 0.0
  %305 = vmatpush1.msra.mxu0 0.0
  %306 = vmatprep.subr.mxu0 0.0
  %307 = vmatpush1.msra.mxu0 0.0
  %308 = vmatprep.subr.mxu0 0.0
  %309 = vmatpush1.msra.mxu0 0.0
  %310 = vmatprep.subr.mxu0 0.0
  %311 = vmatpush1.msra.mxu0 0.0
  %312 = vmatprep.subr.mxu0 0.0
  %313 = vmatpush1.msra.mxu0 0.0
  %314 = vmatprep.subr.mxu0 0.0
  %315 = vmatpush1.msra.mxu0 0.0
  %316 = vmatprep.subr.mxu0 0.0
  %317 = vmatpush1.msra.mxu0 0.0
  %318 = vmatprep.subr.mxu0 0.0
  %319 = vmatpush1.msra.mxu0 0.0
  %320 = vmatprep.subr.mxu0 0.0
  %321 = vmatpush1.msra.mxu0 0.0
  %322 = vmatprep.mubr.f32.mxu0 0.0
  %323 = vmatmul.mubr.f32.gmra.mrb[0].mxu0 %v162
  %v324 = vpop.f32.mrb[0].mxu0
  %v325 = vadd.f32 0.0, %v324
  %v326 = vpop.f32.mrb[0].mxu0
  %327 = vdwg.mxu0
  %v328 = vadd.f32 %v237, %v325
  %329 = vst.msk [vmem:[#allocation3] sm:$0xff] %vm235, %v328
  %v330 = vld [vmem:[#allocation4] sm:$0xff]
  %331 = vset.pattern.permute.xlu0 2
  %332 = vperm.xlu0 %331, %v131
  %v333 = vpop.permute.xlu0 %332
  %335 = vset.pattern.permute.xlu0 2
  %336 = vperm.xlu0 %335, %v132
  %v337 = vpop.permute.xlu0 %336
  %339 = vset.pattern.permute.xlu0 2
  %340 = vperm.xlu0 %339, %v133
  %v341 = vpop.permute.xlu0 %340
  %343 = vset.pattern.permute.xlu0 2
  %344 = vperm.xlu0 %343, %v134
  %v345 = vpop.permute.xlu0 %344
  %v347 = vmul.f32 %v333, %v103
  %v348 = vmul.f32 %v337, %v104
  %v349 = vmul.f32 %v341, %v105
  %v350 = vmul.f32 %v345, %v106
  %351 = vmatprep.subr.mxu0 0.0
  %352 = vmatpush1.msra.mxu0 %v347
  %353 = vmatprep.subr.mxu0 0.0
  %354 = vmatpush1.msra.mxu0 %v348
  %355 = vmatprep.subr.mxu0 0.0
  %356 = vmatpush1.msra.mxu0 %v349
  %357 = vmatprep.subr.mxu0 0.0
  %358 = vmatpush1.msra.mxu0 %v350
  %359 = vmatprep.subr.mxu0 0.0
  %360 = vmatpush1.msra.mxu0 0.0
  %361 = vmatprep.subr.mxu0 0.0
  %362 = vmatpush1.msra.mxu0 0.0
  %363 = vmatprep.subr.mxu0 0.0
  %364 = vmatpush1.msra.mxu0 0.0
  %365 = vmatprep.subr.mxu0 0.0
  %366 = vmatpush1.msra.mxu0 0.0
  %367 = vmatprep.subr.mxu0 0.0
  %368 = vmatpush1.msra.mxu0 0.0
  %369 = vmatprep.subr.mxu0 0.0
  %370 = vmatpush1.msra.mxu0 0.0
  %371 = vmatprep.subr.mxu0 0.0
  %372 = vmatpush1.msra.mxu0 0.0
  %373 = vmatprep.subr.mxu0 0.0
  %374 = vmatpush1.msra.mxu0 0.0
  %375 = vmatprep.subr.mxu0 0.0
  %376 = vmatpush1.msra.mxu0 0.0
  %377 = vmatprep.subr.mxu0 0.0
  %378 = vmatpush1.msra.mxu0 0.0
  %379 = vmatprep.subr.mxu0 0.0
  %380 = vmatpush1.msra.mxu0 0.0
  %381 = vmatprep.subr.mxu0 0.0
  %382 = vmatpush1.msra.mxu0 0.0
  %383 = vmatprep.subr.mxu0 0.0
  %384 = vmatpush1.msra.mxu0 0.0
  %385 = vmatprep.subr.mxu0 0.0
  %386 = vmatpush1.msra.mxu0 0.0
  %387 = vmatprep.subr.mxu0 0.0
  %388 = vmatpush1.msra.mxu0 0.0
  %389 = vmatprep.subr.mxu0 0.0
  %390 = vmatpush1.msra.mxu0 0.0
  %391 = vmatprep.subr.mxu0 0.0
  %392 = vmatpush1.msra.mxu0 0.0
  %393 = vmatprep.subr.mxu0 0.0
  %394 = vmatpush1.msra.mxu0 0.0
  %395 = vmatprep.subr.mxu0 0.0
  %396 = vmatpush1.msra.mxu0 0.0
  %397 = vmatprep.subr.mxu0 0.0
  %398 = vmatpush1.msra.mxu0 0.0
  %399 = vmatprep.subr.mxu0 0.0
  %400 = vmatpush1.msra.mxu0 0.0
  %401 = vmatprep.subr.mxu0 0.0
  %402 = vmatpush1.msra.mxu0 0.0
  %403 = vmatprep.subr.mxu0 0.0
  %404 = vmatpush1.msra.mxu0 0.0
  %405 = vmatprep.subr.mxu0 0.0
  %406 = vmatpush1.msra.mxu0 0.0
  %407 = vmatprep.subr.mxu0 0.0
  %408 = vmatpush1.msra.mxu0 0.0
  %409 = vmatprep.subr.mxu0 0.0
  %410 = vmatpush1.msra.mxu0 0.0
  %411 = vmatprep.subr.mxu0 0.0
  %412 = vmatpush1.msra.mxu0 0.0
  %413 = vmatprep.subr.mxu0 0.0
  %414 = vmatpush1.msra.mxu0 0.0
  %415 = vmatprep.mubr.f32.mxu0 0.0
  %416 = vmatmul.mubr.f32.gmra.mrb[0].mxu0 %v162
  %v417 = vpop.f32.mrb[0].mxu0
  %v418 = vadd.f32 0.0, %v417
  %v419 = vpop.f32.mrb[0].mxu0
  %420 = vdwg.mxu0
  %v421 = vadd.f32 %v330, %v418
  %422 = vst.msk [vmem:[#allocation4] sm:$0xff] %vm235, %v421
  %v423 = vld [vmem:[#allocation5] sm:$0xff]
  %v424 = vsel %vm160, %v42, 0.0
  %425 = vadd.xlane.f32.xlu0 %v424
  %v426 = vpop.xlane.xlu0 %425
  %v427 = vadd.f32 %v423, %v426
  %vm428 = vcmask 7168
  %429 = vst.msk [vmem:[#allocation5] sm:$0xff] %vm428, %v427
  // Predicated region
  $region30: #{baseline_forward.10} parent=0 // pred_check
    %p430 = pneg %p23
  $region31: #{baseline_forward.10} parent=0 // pred_check_branch
    %432 = sbr.rel (%p430) target = $region33
  $region32: #{baseline_forward.10} parent=0 // pred_region
    %v433 = vld [vmem:[#allocation5] sm:$0xff]
    %v434 = vmax.f32 %v433, 1.0
    %v435 = vrcp.pop %v434
    %v436 = vmul.f32 1.0, %v435
    %v437 = vld [vmem:[#allocation2] sm:$0xff]
    %439 = vset.pattern.permute.xlu0 0
    %440 = vperm.xlu0 %439, %v436
    %v441 = vpop.permute.xlu0 %440
    %v443 = vmul.f32 %v437, %v441
    %v444 = vld [vmem:[#allocation3] sm:$0xff]
    %v445 = vmul.f32 %v444, %v441
    %v446 = vld [vmem:[#allocation4] sm:$0xff]
    %v447 = vmul.f32 %v446, %v441
    %449 = vset.pattern.permute.xlu0 0
    %450 = vperm.xlu0 %449, %v443
    %v451 = vpop.permute.xlu0 %450
    %v453 = vmul.f32 %v451, %v443
    %455 = vset.pattern.permute.xlu0 0
    %456 = vperm.xlu0 %455, %v445
    %v457 = vpop.permute.xlu0 %456
    %v459 = vmul.f32 %v457, %v445
    %v460 = vadd.f32 %v453, %v459
    %462 = vset.pattern.permute.xlu0 0
    %463 = vperm.xlu0 %462, %v447
    %v464 = vpop.permute.xlu0 %463
    %v466 = vmul.f32 %v464, %v447
    %v467 = vadd.f32 %v460, %v466
    %468 = vset.pattern.permute.xlu0 1
    %469 = vperm.xlu0 %468, %v443
    %v470 = vpop.permute.xlu0 %469
    %v472 = vmul.f32 %v470, %v443
    %473 = vset.pattern.permute.xlu0 1
    %474 = vperm.xlu0 %473, %v445
    %v475 = vpop.permute.xlu0 %474
    %v477 = vmul.f32 %v475, %v445
    %v478 = vadd.f32 %v472, %v477
    %479 = vset.pattern.permute.xlu0 1
    %480 = vperm.xlu0 %479, %v447
    %v481 = vpop.permute.xlu0 %480
    %v483 = vmul.f32 %v481, %v447
    %v484 = vadd.f32 %v478, %v483
    %485 = vset.pattern.permute.xlu0 2
    %486 = vperm.xlu0 %485, %v443
    %v487 = vpop.permute.xlu0 %486
    %v489 = vmul.f32 %v487, %v443
    %490 = vset.pattern.permute.xlu0 2
    %491 = vperm.xlu0 %490, %v445
    %v492 = vpop.permute.xlu0 %491
    %v494 = vmul.f32 %v492, %v445
    %v495 = vadd.f32 %v489, %v494
    %496 = vset.pattern.permute.xlu0 2
    %497 = vperm.xlu0 %496, %v447
    %v498 = vpop.permute.xlu0 %497
    %v500 = vmul.f32 %v498, %v447
    %v501 = vadd.f32 %v495, %v500
    %502 = vset.pattern.permute.xlu0 3
    %503 = vperm.xlu0 %502, %v443
    %v504 = vpop.permute.xlu0 %503
    %v506 = vmul.f32 %v504, %v443
    %507 = vset.pattern.permute.xlu0 3
    %508 = vperm.xlu0 %507, %v445
    %v509 = vpop.permute.xlu0 %508
    %v511 = vmul.f32 %v509, %v445
    %v512 = vadd.f32 %v506, %v511
    %513 = vset.pattern.permute.xlu0 3
    %514 = vperm.xlu0 %513, %v447
    %v515 = vpop.permute.xlu0 %514
    %v517 = vmul.f32 %v515, %v447
    %v518 = vadd.f32 %v512, %v517
    %519 = vset.pattern.permute.xlu0 4
    %520 = vperm.xlu0 %519, %v443
    %v521 = vpop.permute.xlu0 %520
    %v523 = vmul.f32 %v521, %v443
    %524 = vset.pattern.permute.xlu0 4
    %525 = vperm.xlu0 %524, %v445
    %v526 = vpop.permute.xlu0 %525
    %v528 = vmul.f32 %v526, %v445
    %v529 = vadd.f32 %v523, %v528
    %530 = vset.pattern.permute.xlu0 4
    %531 = vperm.xlu0 %530, %v447
    %v532 = vpop.permute.xlu0 %531
    %v534 = vmul.f32 %v532, %v447
    %v535 = vadd.f32 %v529, %v534
    %536 = vset.pattern.permute.xlu0 5
    %537 = vperm.xlu0 %536, %v443
    %v538 = vpop.permute.xlu0 %537
    %v540 = vmul.f32 %v538, %v443
    %541 = vset.pattern.permute.xlu0 5
    %542 = vperm.xlu0 %541, %v445
    %v543 = vpop.permute.xlu0 %542
    %v545 = vmul.f32 %v543, %v445
    %v546 = vadd.f32 %v540, %v545
    %547 = vset.pattern.permute.xlu0 5
    %548 = vperm.xlu0 %547, %v447
    %v549 = vpop.permute.xlu0 %548
    %v551 = vmul.f32 %v549, %v447
    %v552 = vadd.f32 %v546, %v551
    %553 = vset.pattern.permute.xlu0 6
    %554 = vperm.xlu0 %553, %v443
    %v555 = vpop.permute.xlu0 %554
    %v557 = vmul.f32 %v555, %v443
    %558 = vset.pattern.permute.xlu0 6
    %559 = vperm.xlu0 %558, %v445
    %v560 = vpop.permute.xlu0 %559
    %v562 = vmul.f32 %v560, %v445
    %v563 = vadd.f32 %v557, %v562
    %564 = vset.pattern.permute.xlu0 6
    %565 = vperm.xlu0 %564, %v447
    %v566 = vpop.permute.xlu0 %565
    %v568 = vmul.f32 %v566, %v447
    %v569 = vadd.f32 %v563, %v568
    %570 = vset.pattern.permute.xlu0 7
    %571 = vperm.xlu0 %570, %v443
    %v572 = vpop.permute.xlu0 %571
    %v574 = vmul.f32 %v572, %v443
    %575 = vset.pattern.permute.xlu0 7
    %576 = vperm.xlu0 %575, %v445
    %v577 = vpop.permute.xlu0 %576
    %v579 = vmul.f32 %v577, %v445
    %v580 = vadd.f32 %v574, %v579
    %581 = vset.pattern.permute.xlu0 7
    %582 = vperm.xlu0 %581, %v447
    %v583 = vpop.permute.xlu0 %582
    %v585 = vmul.f32 %v583, %v447
    %v586 = vadd.f32 %v580, %v585
    %588 = vrot.lane.b32.xlu0 %v484, 4
    %v589 = vpop.permute.xlu0 %588
    %592 = vrot.lane.b32.xlu0 %v501, 8
    %v593 = vpop.permute.xlu0 %592
    %596 = vrot.lane.b32.xlu0 %v518, 12
    %v597 = vpop.permute.xlu0 %596
    %600 = vrot.lane.b32.xlu0 %v535, 16
    %v601 = vpop.permute.xlu0 %600
    %604 = vrot.lane.b32.xlu0 %v552, 20
    %v605 = vpop.permute.xlu0 %604
    %608 = vrot.lane.b32.xlu0 %v569, 24
    %v609 = vpop.permute.xlu0 %608
    %612 = vrot.lane.b32.xlu0 %v586, 28
    %v613 = vpop.permute.xlu0 %612
    %vm615 = vcmask 31744
    %v616 = vsel %vm615, %v467, %v589
    %v617 = vsel %vm235, %v616, %v593
    %vm618 = vcmask 97280
    %v619 = vsel %vm618, %v617, %v597
    %vm620 = vcmask 130048
    %v621 = vsel %vm620, %v619, %v601
    %vm622 = vcmask 162816
    %v623 = vsel %vm622, %v621, %v605
    %vm624 = vcmask 195584
    %v625 = vsel %vm624, %v623, %v609
    %vm626 = vcmask 228352
    %v627 = vsel %vm626, %v625, %v613
    %v628 = vld [vmem:[%s4] sm:$0x1]
    %v629 = vld [vmem:[%s5] sm:$0x1]
    %v630 = vsel %vm160, %v627, 0.0
    %631 = vadd.xlane.f32.xlu0 %v630
    %v632 = vpop.xlane.xlu0 %631
    %v633 = vrcp.pop 32.0
    %v634 = vmul.f32 %v632, %v633
    %v635 = vsub.f32 %v627, %v634
    %v636 = vmul.f32 %v635, %v635
    %v637 = vsel %vm160, %v636, 0.0
    %638 = vadd.xlane.f32.xlu0 %v637
    %v639 = vpop.xlane.xlu0 %638
    %v640 = vmul.f32 %v639, %v633
    %v641 = vadd.f32 %v640, 1e-05
    %v642 = vrsqrt.pop %v641
    %v643 = vmul.f32 %v635, %v642
    %v645 = vlaneseq
    %v646 = vshrl.u32 %v645, 7
    %v647 = vsub.s32 0, %v646
    %v648 = vrot.slane %v628, %v647
    %v650 = vmul.f32 %v643, %v648
    %v652 = vlaneseq
    %v653 = vshrl.u32 %v652, 7
    %v654 = vsub.s32 0, %v653
    %v655 = vrot.slane %v629, %v654
    %v657 = vadd.f32 %v650, %v655
    %658 = vst.msk [vmem:[%s6] sm:$0xff] %vm160, %v657
  $region33: #{baseline_forward.10} parent=0 // pred_fallthru
    _
  // Predicated region
  $region34: #{baseline_forward.10} parent=0 // pred_check
    _
  $region35: #{baseline_forward.10} parent=0 // pred_check_branch
    %660 = sbr.rel (0) target = $region37
  $region36: #{baseline_forward.10} parent=0 // pred_region
    _
  $region37: #{baseline_forward.10} parent=0 // pred_fallthru
    _
  // Predicated region
  $region38: #{baseline_forward.10} parent=0 // pred_check
    _
  $region39: #{baseline_forward.10} parent=0 // pred_check_branch
    %662 = sbr.rel (0) target = $region41
  $region40: #{baseline_forward.10} parent=0 // pred_region
    _
  $region41: #{baseline_forward.10} parent=0 // pred_fallthru
    _

// kernel: baseline_forward.9
$region0: #{baseline_forward.9}
  #allocation0 [shape = 'u32[]', space=smem, size = 0x4, offset = 0x4, fixed_abs, tag = 'smem constant byte address 0x4 - core index']
  #allocation1 [shape = 'u32[144,128]{1,0:T(1,128)}', space=vmem, size = 0x12000, scoped, tag = 'internal scratch']
  %s0 = inlined_call_operand.vmem [shape: f32[48,4], index: 0, kind: input, shape index: {}]
  %s1 = inlined_call_operand.vmem [shape: f32[48,1], index: 1, kind: input, shape index: {}]
  %s2 = inlined_call_operand.vmem [shape: f32[1,8], index: 2, kind: input, shape index: {}]
  %s3 = inlined_call_operand.vmem [shape: f32[4,32], index: 3, kind: input, shape index: {}]
  %s4 = inlined_call_operand.vmem [shape: f32[8,32], index: 4, kind: input, shape index: {}]
  %s5 = inlined_call_operand.vmem [shape: f32[1,32], index: 5, kind: input, shape index: {}]
  %s6 = inlined_call_operand.vmem [shape: f32[32,16], index: 6, kind: input, shape index: {}]
  %s7 = inlined_call_operand.vmem [shape: f32[1,16], index: 7, kind: input, shape index: {}]
  %s8 = inlined_call_operand.vmem [shape: f32[1,16], index: 8, kind: input, shape index: {}]
  %s9 = inlined_call_operand.vmem [shape: f32[1,16], index: 9, kind: input, shape index: {}]
  %s10 = inlined_call_operand.vmem [shape: f32[4,32], index: 10, kind: input, shape index: {}]
  %s11 = inlined_call_operand.vmem [shape: f32[8,32], index: 11, kind: input, shape index: {}]
  %s12 = inlined_call_operand.vmem [shape: f32[1,32], index: 12, kind: input, shape index: {}]
  %s13 = inlined_call_operand.vmem [shape: f32[32,8], index: 13, kind: input, shape index: {}]
  %s14 = inlined_call_operand.vmem [shape: f32[1,8], index: 14, kind: input, shape index: {}]
  %s15 = inlined_call_operand.vmem [shape: f32[48,16], index: 15, kind: output, shape index: {0}]
  %s16 = inlined_call_operand.vmem [shape: f32[48,8], index: 16, kind: output, shape index: {1}]
  %17 = xla_tuple %s15, %s16
  %s18 = sld [smem:[#allocation0]]
  $region78: #{baseline_forward.9} parent=0
    _
  %s20 = ssub.s32 1, %s18
  %s21 = scalar_select 0, %s20, %s18
  // Predicated region
  $region2: #{baseline_forward.9} parent=0 // pred_check
    _
  $region3: #{baseline_forward.9} parent=0 // pred_check_branch
    %23 = sbr.rel (0) target = $region5
  $region4: #{baseline_forward.9} parent=0 // pred_region
    _
  $region5: #{baseline_forward.9} parent=0 // pred_fallthru
    _
  // Predicated region
  $region6: #{baseline_forward.9} parent=0 // pred_check
    _
  $region7: #{baseline_forward.9} parent=0 // pred_check_branch
    %25 = sbr.rel (0) target = $region9
  $region8: #{baseline_forward.9} parent=0 // pred_region
    _
  $region9: #{baseline_forward.9} parent=0 // pred_fallthru
    _
  // Predicated region
  $region10: #{baseline_forward.9} parent=0 // pred_check
    _
  $region11: #{baseline_forward.9} parent=0 // pred_check_branch
    %27 = sbr.rel (0) target = $region13
  $region12: #{baseline_forward.9} parent=0 // pred_region
    _
  $region13: #{baseline_forward.9} parent=0 // pred_fallthru
    _
  // Predicated region
  $region14: #{baseline_forward.9} parent=0 // pred_check
    _
  $region15: #{baseline_forward.9} parent=0 // pred_check_branch
    %29 = sbr.rel (0) target = $region17
  $region16: #{baseline_forward.9} parent=0 // pred_region
    _
  $region17: #{baseline_forward.9} parent=0 // pred_fallthru
    _
  // Predicated region
  $region18: #{baseline_forward.9} parent=0 // pred_check
    _
  $region19: #{baseline_forward.9} parent=0 // pred_check_branch
    %31 = sbr.rel (0) target = $region21
  $region20: #{baseline_forward.9} parent=0 // pred_region
    _
  $region21: #{baseline_forward.9} parent=0 // pred_fallthru
    _
  // Predicated region
  $region22: #{baseline_forward.9} parent=0 // pred_check
    _
  $region23: #{baseline_forward.9} parent=0 // pred_check_branch
    %33 = sbr.rel (0) target = $region25
  $region24: #{baseline_forward.9} parent=0 // pred_region
    _
  $region25: #{baseline_forward.9} parent=0 // pred_fallthru
    _
  // Predicated region
  $region26: #{baseline_forward.9} parent=0 // pred_check
    _
  $region27: #{baseline_forward.9} parent=0 // pred_check_branch
    %35 = sbr.rel (0) target = $region29
  $region28: #{baseline_forward.9} parent=0 // pred_region
    _
  $region29: #{baseline_forward.9} parent=0 // pred_fallthru
    _
  // Predicated region
  $region30: #{baseline_forward.9} parent=0 // pred_check
    _
  $region31: #{baseline_forward.9} parent=0 // pred_check_branch
    %37 = sbr.rel (0) target = $region33
  $region32: #{baseline_forward.9} parent=0 // pred_region
    _
  $region33: #{baseline_forward.9} parent=0 // pred_fallthru
    _
  // Predicated region
  $region34: #{baseline_forward.9} parent=0 // pred_check
    _
  $region35: #{baseline_forward.9} parent=0 // pred_check_branch
    %39 = sbr.rel (0) target = $region37
  $region36: #{baseline_forward.9} parent=0 // pred_region
    _
  $region37: #{baseline_forward.9} parent=0 // pred_fallthru
    _
  // Predicated region
  $region38: #{baseline_forward.9} parent=0 // pred_check
    _
  $region39: #{baseline_forward.9} parent=0 // pred_check_branch
    %41 = sbr.rel (0) target = $region41
  $region40: #{baseline_forward.9} parent=0 // pred_region
    _
  $region41: #{baseline_forward.9} parent=0 // pred_fallthru
    _
  // Predicated region
  $region42: #{baseline_forward.9} parent=0 // pred_check
    _
  $region43: #{baseline_forward.9} parent=0 // pred_check_branch
    %43 = sbr.rel (0) target = $region45
  $region44: #{baseline_forward.9} parent=0 // pred_region
    _
  $region45: #{baseline_forward.9} parent=0 // pred_fallthru
    _
  // Predicated region
  $region46: #{baseline_forward.9} parent=0 // pred_check
    _
  $region47: #{baseline_forward.9} parent=0 // pred_check_branch
    %45 = sbr.rel (0) target = $region49
  $region48: #{baseline_forward.9} parent=0 // pred_region
    _
  $region49: #{baseline_forward.9} parent=0 // pred_fallthru
    _
  // Predicated region
  $region50: #{baseline_forward.9} parent=0 // pred_check
    _
  $region51: #{baseline_forward.9} parent=0 // pred_check_branch
    %47 = sbr.rel (0) target = $region53
  $region52: #{baseline_forward.9} parent=0 // pred_region
    _
  $region53: #{baseline_forward.9} parent=0 // pred_fallthru
    _
  // Predicated region
  $region54: #{baseline_forward.9} parent=0 // pred_check
    _
  $region55: #{baseline_forward.9} parent=0 // pred_check_branch
    %49 = sbr.rel (0) target = $region57
  $region56: #{baseline_forward.9} parent=0 // pred_region
    _
  $region57: #{baseline_forward.9} parent=0 // pred_fallthru
    _
  // Predicated region
  $region58: #{baseline_forward.9} parent=0 // pred_check
    _
  $region59: #{baseline_forward.9} parent=0 // pred_check_branch
    %51 = sbr.rel (0) target = $region61
  $region60: #{baseline_forward.9} parent=0 // pred_region
    _
  $region61: #{baseline_forward.9} parent=0 // pred_fallthru
    _
  %v52 = vld [vmem:[%s1] sm:$0xff]
  %v53 = vld [vmem:[%s1 + $0x8] sm:$0xff]
  %v54 = vld [vmem:[%s1 + $0x10] sm:$0xff]
  %v55 = vld [vmem:[%s1 + $0x18] sm:$0xff]
  %v56 = vld [vmem:[%s1 + $0x20] sm:$0xff]
  %v57 = vld [vmem:[%s1 + $0x28] sm:$0xff]
  %v58 = vmul.f32 %v52, 0.25
  %v59 = vmul.f32 %v53, 0.25
  %v60 = vmul.f32 %v54, 0.25
  %v61 = vmul.f32 %v55, 0.25
  %v62 = vmul.f32 %v56, 0.25
  %v63 = vmul.f32 %v57, 0.25
  %v64 = vmul.f32 %v58, %v58
  %v65 = vmul.f32 %v59, %v59
  %v66 = vmul.f32 %v60, %v60
  %v67 = vmul.f32 %v61, %v61
  %v68 = vmul.f32 %v62, %v62
  %v69 = vmul.f32 %v63, %v63
  %v70 = vmul.f32 %v64, %v64
  %v71 = vmul.f32 %v65, %v65
  %v72 = vmul.f32 %v66, %v66
  %v73 = vmul.f32 %v67, %v67
  %v74 = vmul.f32 %v68, %v68
  %v75 = vmul.f32 %v69, %v69
  %v76 = vmul.f32 %v64, %v70
  %v77 = vmul.f32 %v65, %v71
  %v78 = vmul.f32 %v66, %v72
  %v79 = vmul.f32 %v67, %v73
  %v80 = vmul.f32 %v68, %v74
  %v81 = vmul.f32 %v69, %v75
  %v82 = vmul.f32 %v76, %v58
  %v83 = vmul.f32 %v77, %v59
  %v84 = vmul.f32 %v78, %v60
  %v85 = vmul.f32 %v79, %v61
  %v86 = vmul.f32 %v80, %v62
  %v87 = vmul.f32 %v81, %v63
  %v88 = vmul.f32 %v82, %v58
  %v89 = vmul.f32 %v83, %v59
  %v90 = vmul.f32 %v84, %v60
  %v91 = vmul.f32 %v85, %v61
  %v92 = vmul.f32 %v86, %v62
  %v93 = vmul.f32 %v87, %v63
  %v94 = vmul.f32 %v76, 28.0
  %v95 = vmul.f32 %v77, 28.0
  %v96 = vmul.f32 %v78, 28.0
  %v97 = vmul.f32 %v79, 28.0
  %v98 = vmul.f32 %v80, 28.0
  %v99 = vmul.f32 %v81, 28.0
  %v100 = vsub.f32 1.0, %v94
  %v101 = vsub.f32 1.0, %v95
  %v102 = vsub.f32 1.0, %v96
  %v103 = vsub.f32 1.0, %v97
  %v104 = vsub.f32 1.0, %v98
  %v105 = vsub.f32 1.0, %v99
  %v106 = vmul.f32 %v82, 48.0
  %v107 = vmul.f32 %v83, 48.0
  %v108 = vmul.f32 %v84, 48.0
  %v109 = vmul.f32 %v85, 48.0
  %v110 = vmul.f32 %v86, 48.0
  %v111 = vmul.f32 %v87, 48.0
  %v112 = vadd.f32 %v100, %v106
  %v113 = vadd.f32 %v101, %v107
  %v114 = vadd.f32 %v102, %v108
  %v115 = vadd.f32 %v103, %v109
  %v116 = vadd.f32 %v104, %v110
  %v117 = vadd.f32 %v105, %v111
  %v118 = vmul.f32 %v88, 21.0
  %v119 = vmul.f32 %v89, 21.0
  %v120 = vmul.f32 %v90, 21.0
  %v121 = vmul.f32 %v91, 21.0
  %v122 = vmul.f32 %v92, 21.0
  %v123 = vmul.f32 %v93, 21.0
  %v124 = vsub.f32 %v112, %v118
  %v125 = vsub.f32 %v113, %v119
  %v126 = vsub.f32 %v114, %v120
  %v127 = vsub.f32 %v115, %v121
  %v128 = vsub.f32 %v116, %v122
  %v129 = vsub.f32 %v117, %v123
  %vm130 = vcmp.lt.f32.partialorder %v58, 1.0
  %vm131 = vcmp.lt.f32.partialorder %v59, 1.0
  %vm132 = vcmp.lt.f32.partialorder %v60, 1.0
  %vm133 = vcmp.lt.f32.partialorder %v61, 1.0
  %vm134 = vcmp.lt.f32.partialorder %v62, 1.0
  %vm135 = vcmp.lt.f32.partialorder %v63, 1.0
  %v136 = vsel %vm130, %v124, 0.0
  %v137 = vsel %vm131, %v125, 0.0
  %v138 = vsel %vm132, %v126, 0.0
  %v139 = vsel %vm133, %v127, 0.0
  %v140 = vsel %vm134, %v128, 0.0
  %v141 = vsel %vm135, %v129, 0.0
  %v142 = vld [vmem:[%s2] sm:$0x1]
  %v144 = vlaneseq
  %v145 = vshrl.u32 %v144, 7
  %v146 = vsub.s32 0, %v145
  %v147 = vrot.slane %v142, %v146
  %150 = vset.pattern.permute.xlu0 0
  %151 = vperm.xlu0 %150, %v58
  %v152 = vpop.permute.xlu0 %151
  %155 = vset.pattern.permute.xlu0 0
  %156 = vperm.xlu0 %155, %v59
  %v157 = vpop.permute.xlu0 %156
  %160 = vset.pattern.permute.xlu0 0
  %161 = vperm.xlu0 %160, %v60
  %v162 = vpop.permute.xlu0 %161
  %165 = vset.pattern.permute.xlu0 0
  %166 = vperm.xlu0 %165, %v61
  %v167 = vpop.permute.xlu0 %166
  %170 = vset.pattern.permute.xlu0 0
  %171 = vperm.xlu0 %170, %v62
  %v172 = vpop.permute.xlu0 %171
  %175 = vset.pattern.permute.xlu0 0
  %176 = vperm.xlu0 %175, %v63
  %v177 = vpop.permute.xlu0 %176
  %v179 = vmul.f32 %v147, %v152
  %v180 = vmul.f32 %v147, %v157
  %v181 = vmul.f32 %v147, %v162
  %v182 = vmul.f32 %v147, %v167
  %v183 = vmul.f32 %v147, %v172
  %v184 = vmul.f32 %v147, %v177
  %v185 = vand.u32 2147483647, %v179
  %vm186 = vcmp.le.f32.partialorder %v185, 0.7853982
  %vm187 = vcmp.lt.s32.totalorder %v179, 0
  %v188 = vand.u32 %v179, 2139095040
  %v189 = vshrl.u32 %v188, 23
  %v190 = vsub.s32 %v189, 127
  %v191 = vand.u32 2147483647, %v179
  %v192 = vand.u32 %v191, 8388607
  %v193 = vor.u32 %v192, 8388608
  %v194 = vsub.s32 0, %v193
  %v195 = vadd.s32 %v190, 1
  %vm196 = vcmp.gt.s32.totalorder %v195, 0
  %v197 = vsel %vm196, %v195, 0
  %v198 = vshrl.u32 %v197, 5
  %v199 = vand.u32 %v197, 31
  %v200 = vsub.s32 32, %v199
  %v201 = vshrl.u32 683565275, %v200
  %v202 = vshll.u32 683565275, %v199
  %v203 = vshrl.u32 2475754826, %v200
  %v204 = vor.u32 %v202, %v203
  %v205 = vshll.u32 2475754826, %v199
  %v206 = vshrl.u32 2131351028, %v200
  %v207 = vor.u32 %v205, %v206
  %v208 = vshll.u32 2131351028, %v199
  %v209 = vshrl.u32 2102212464, %v200
  %v210 = vor.u32 %v208, %v209
  %v211 = vshll.u32 2102212464, %v199
  %v212 = vshrl.u32 920167782, %v200
  %v213 = vor.u32 %v211, %v212
  %v214 = vshll.u32 920167782, %v199
  %v215 = vshrl.u32 1326507024, %v200
  %v216 = vor.u32 %v214, %v215
  %vm217 = vcmp.lt.s32.totalorder %v198, 1
  %vm218 = vcmp.lt.s32.totalorder %v198, 2
  %vm219 = vcmp.lt.s32.totalorder %v198, 3
  %vm220 = vcmp.lt.s32.totalorder %v198, 4
  %v221 = vsel %vm217, %v201, %v204
  %v222 = vsel %vm220, %v210, 2102212464
  %v223 = vsel %vm219, %v207, %v222
  %v224 = vsel %vm218, %v221, %v223
  %v225 = vsel %vm217, %v204, %v207
  %v226 = vsel %vm220, %v213, 920167782
  %v227 = vsel %vm219, %v210, %v226
  %v228 = vsel %vm218, %v225, %v227
  %v229 = vsel %vm217, %v207, %v210
  %v230 = vsel %vm220, %v216, 1326507024
  %v231 = vsel %vm219, %v213, %v230
  %v232 = vsel %vm218, %v229, %v231
  %v233 = vshll.u32 %v193, 8
  %v234 = vmul.u32.u64.compose %v233, %v232
  %v235 = vextract.low.u32 %v234
  %v236 = vextract.high.u32 %v234
  %v237 = vmul.u32.u64.compose %v233, %v228
  %v238 = vextract.low.u32 %v237
  %v239 = vextract.high.u32 %v237
  %v240 = vmul.u32 %v233, %v224
  %v241 = vadd.s32 %v236, %v238
  %vm242 = vc.u32 %v236, %v238
  %v243 = vadd.s32 %v239, 1
  %v244 = vsel %vm242, %v243, %v239
  %v245 = vadd.s32 %v240, %v244
  %v246 = vadd.s32 %v245, 536870912
  %v247 = vshrl.u32 %v246, 30
  %v248 = vshll.u32 %v247, 30
  %v249 = vsub.s32 %v245, %v248
  %vm250 = vcmp.lt.s32.totalorder %v249, 0
  %v251 = vsub.s32 0, %v249
  %v252 = vsel %vm250, %v251, %v249
  %v253 = vclz %v252
  %v254 = vsub.s32 %v253, 2
  %vm255 = vcmp.gt.s32.totalorder 0, %v254
  %v256 = vsel %vm255, 0, %v254
  %v257 = vsub.s32 32, %v256
  %v258 = vshll.u32 %v249, %v256
  %v259 = vshrl.u32 %v241, %v257
  %v260 = vor.u32 %v258, %v259
  %v261 = vsub.s32 4294967266, %v256
  %v262 = vadd.s32 %v261, 127
  %v263 = vshll.u32 %v262, 23
  %v264 = vor.u32 4788187, %v263
  %v265 = vand.u32 2147483647, %v264
  %v267 = vcvt.s32.f32 %v260
  %v268 = vmul.f32 %v267, %v265
  %v269 = vxor.u32 %v268, 2147483648
  %v270 = vsel %vm187, %v269, %v268
  %v271 = vsub.s32 4, %v247
  %v272 = vsel %vm187, %v271, %v247
  %v273 = vsel %vm186, %v179, %v270
  %v274 = vsel %vm186, 0, %v272
  %v275 = vcosq.f32.pop %v273
  %v276 = vsinq.f32.pop %v273
  %vm277 = vweird.f32 %v179
  %v278 = vadd.s32 %v274, 3
  %v279 = vand.u32 %v278, 3
  %vm280 = vcmp.lt.s32.totalorder %v279, 2
  %vm281 = vcmp.eq.s32.totalorder %v279, 0
  %v282 = vxor.u32 %v276, 2147483648
  %v283 = vsel %vm281, %v275, %v282
  %vm284 = vcmp.eq.s32.totalorder %v279, 2
  %v285 = vxor.u32 %v275, 2147483648
  %v286 = vsel %vm284, %v285, %v276
  %v287 = vsel %vm280, %v283, %v286
  %v288 = vsel %vm277, nan, %v287
  %v289 = vand.u32 2147483647, %v180
  %vm290 = vcmp.le.f32.partialorder %v289, 0.7853982
  %vm291 = vcmp.lt.s32.totalorder %v180, 0
  %v292 = vand.u32 %v180, 2139095040
  %v293 = vshrl.u32 %v292, 23
  %v294 = vsub.s32 %v293, 127
  %v295 = vand.u32 2147483647, %v180
  %v296 = vand.u32 %v295, 8388607
  %v297 = vor.u32 %v296, 8388608
  %v298 = vsub.s32 0, %v297
  %v299 = vadd.s32 %v294, 1
  %vm300 = vcmp.gt.s32.totalorder %v299, 0
  %v301 = vsel %vm300, %v299, 0
  %v302 = vshrl.u32 %v301, 5
  %v303 = vand.u32 %v301, 31
  %v304 = vsub.s32 32, %v303
  %v305 = vshrl.u32 683565275, %v304
  %v306 = vshll.u32 683565275, %v303
  %v307 = vshrl.u32 2475754826, %v304
  %v308 = vor.u32 %v306, %v307
  %v309 = vshll.u32 2475754826, %v303
  %v310 = vshrl.u32 2131351028, %v304
  %v311 = vor.u32 %v309, %v310
  %v312 = vshll.u32 2131351028, %v303
  %v313 = vshrl.u32 2102212464, %v304
  %v314 = vor.u32 %v312, %v313
  %v315 = vshll.u32 2102212464, %v303
  %v316 = vshrl.u32 920167782, %v304
  %v317 = vor.u32 %v315, %v316
  %v318 = vshll.u32 920167782, %v303
  %v319 = vshrl.u32 1326507024, %v304
  %v320 = vor.u32 %v318, %v319
  %vm321 = vcmp.lt.s32.totalorder %v302, 1
  %vm322 = vcmp.lt.s32.totalorder %v302, 2
  %vm323 = vcmp.lt.s32.totalorder %v302, 3
  %vm324 = vcmp.lt.s32.totalorder %v302, 4
  %v325 = vsel %vm321, %v305, %v308
  %v326 = vsel %vm324, %v314, 2102212464
  %v327 = vsel %vm323, %v311, %v326
  %v328 = vsel %vm322, %v325, %v327
  %v329 = vsel %vm321, %v308, %v311
  %v330 = vsel %vm324, %v317, 920167782
  %v331 = vsel %vm323, %v314, %v330
  %v332 = vsel %vm322, %v329, %v331
  %v333 = vsel %vm321, %v311, %v314
  %v334 = vsel %vm324, %v320, 1326507024
  %v335 = vsel %vm323, %v317, %v334
  %v336 = vsel %vm322, %v333, %v335
  %v337 = vshll.u32 %v297, 8
  %v338 = vmul.u32.u64.compose %v337, %v336
  %v339 = vextract.low.u32 %v338
  %v340 = vextract.high.u32 %v338
  %v341 = vmul.u32.u64.compose %v337, %v332
  %v342 = vextract.low.u32 %v341
  %v343 = vextract.high.u32 %v341
  %v344 = vmul.u32 %v337, %v328
  %v345 = vadd.s32 %v340, %v342
  %vm346 = vc.u32 %v340, %v342
  %v347 = vadd.s32 %v343, 1
  %v348 = vsel %vm346, %v347, %v343
  %v349 = vadd.s32 %v344, %v348
  %v350 = vadd.s32 %v349, 536870912
  %v351 = vshrl.u32 %v350, 30
  %v352 = vshll.u32 %v351, 30
  %v353 = vsub.s32 %v349, %v352
  %vm354 = vcmp.lt.s32.totalorder %v353, 0
  %v355 = vsub.s32 0, %v353
  %v356 = vsel %vm354, %v355, %v353
  %v357 = vclz %v356
  %v358 = vsub.s32 %v357, 2
  %vm359 = vcmp.gt.s32.totalorder 0, %v358
  %v360 = vsel %vm359, 0, %v358
  %v361 = vsub.s32 32, %v360
  %v362 = vshll.u32 %v353, %v360
  %v363 = vshrl.u32 %v345, %v361
  %v364 = vor.u32 %v362, %v363
  %v365 = vsub.s32 4294967266, %v360
  %v366 = vadd.s32 %v365, 127
  %v367 = vshll.u32 %v366, 23
  %v368 = vor.u32 4788187, %v367
  %v369 = vand.u32 2147483647, %v368
  %v371 = vcvt.s32.f32 %v364
  %v372 = vmul.f32 %v371, %v369
  %v373 = vxor.u32 %v372, 2147483648
  %v374 = vsel %vm291, %v373, %v372
  %v375 = vsub.s32 4, %v351
  %v376 = vsel %vm291, %v375, %v351
  %v377 = vsel %vm290, %v180, %v374
  %v378 = vsel %vm290, 0, %v376
  %v379 = vcosq.f32.pop %v377
  %v380 = vsinq.f32.pop %v377
  %vm381 = vweird.f32 %v180
  %v382 = vadd.s32 %v378, 3
  %v383 = vand.u32 %v382, 3
  %vm384 = vcmp.lt.s32.totalorder %v383, 2
  %vm385 = vcmp.eq.s32.totalorder %v383, 0
  %v386 = vxor.u32 %v380, 2147483648
  %v387 = vsel %vm385, %v379, %v386
  %vm388 = vcmp.eq.s32.totalorder %v383, 2
  %v389 = vxor.u32 %v379, 2147483648
  %v390 = vsel %vm388, %v389, %v380
  %v391 = vsel %vm384, %v387, %v390
  %v392 = vsel %vm381, nan, %v391
  %v393 = vand.u32 2147483647, %v181
  %vm394 = vcmp.le.f32.partialorder %v393, 0.7853982
  %vm395 = vcmp.lt.s32.totalorder %v181, 0
  %v396 = vand.u32 %v181, 2139095040
  %v397 = vshrl.u32 %v396, 23
  %v398 = vsub.s32 %v397, 127
  %v399 = vand.u32 2147483647, %v181
  %v400 = vand.u32 %v399, 8388607
  %v401 = vor.u32 %v400, 8388608
  %v402 = vsub.s32 0, %v401
  %v403 = vadd.s32 %v398, 1
  %vm404 = vcmp.gt.s32.totalorder %v403, 0
  %v405 = vsel %vm404, %v403, 0
  %v406 = vshrl.u32 %v405, 5
  %v407 = vand.u32 %v405, 31
  %v408 = vsub.s32 32, %v407
  %v409 = vshrl.u32 683565275, %v408
  %v410 = vshll.u32 683565275, %v407
  %v411 = vshrl.u32 2475754826, %v408
  %v412 = vor.u32 %v410, %v411
  %v413 = vshll.u32 2475754826, %v407
  %v414 = vshrl.u32 2131351028, %v408
  %v415 = vor.u32 %v413, %v414
  %v416 = vshll.u32 2131351028, %v407
  %v417 = vshrl.u32 2102212464, %v408
  %v418 = vor.u32 %v416, %v417
  %v419 = vshll.u32 2102212464, %v407
  %v420 = vshrl.u32 920167782, %v408
  %v421 = vor.u32 %v419, %v420
  %v422 = vshll.u32 920167782, %v407
  %v423 = vshrl.u32 1326507024, %v408
  %v424 = vor.u32 %v422, %v423
  %vm425 = vcmp.lt.s32.totalorder %v406, 1
  %vm426 = vcmp.lt.s32.totalorder %v406, 2
  %vm427 = vcmp.lt.s32.totalorder %v406, 3
  %vm428 = vcmp.lt.s32.totalorder %v406, 4
  %v429 = vsel %vm425, %v409, %v412
  %v430 = vsel %vm428, %v418, 2102212464
  %v431 = vsel %vm427, %v415, %v430
  %v432 = vsel %vm426, %v429, %v431
  %v433 = vsel %vm425, %v412, %v415
  %v434 = vsel %vm428, %v421, 920167782
  %v435 = vsel %vm427, %v418, %v434
  %v436 = vsel %vm426, %v433, %v435
  %v437 = vsel %vm425, %v415, %v418
  %v438 = vsel %vm428, %v424, 1326507024
  %v439 = vsel %vm427, %v421, %v438
  %v440 = vsel %vm426, %v437, %v439
  %v441 = vshll.u32 %v401, 8
  %v442 = vmul.u32.u64.compose %v441, %v440
  %v443 = vextract.low.u32 %v442
  %v444 = vextract.high.u32 %v442
  %v445 = vmul.u32.u64.compose %v441, %v436
  %v446 = vextract.low.u32 %v445
  %v447 = vextract.high.u32 %v445
  %v448 = vmul.u32 %v441, %v432
  %v449 = vadd.s32 %v444, %v446
  %vm450 = vc.u32 %v444, %v446
  %v451 = vadd.s32 %v447, 1
  %v452 = vsel %vm450, %v451, %v447
  %v453 = vadd.s32 %v448, %v452
  %v454 = vadd.s32 %v453, 536870912
  %v455 = vshrl.u32 %v454, 30
  %v456 = vshll.u32 %v455, 30
  %v457 = vsub.s32 %v453, %v456
  %vm458 = vcmp.lt.s32.totalorder %v457, 0
  %v459 = vsub.s32 0, %v457
  %v460 = vsel %vm458, %v459, %v457
  %v461 = vclz %v460
  %v462 = vsub.s32 %v461, 2
  %vm463 = vcmp.gt.s32.totalorder 0, %v462
  %v464 = vsel %vm463, 0, %v462
  %v465 = vsub.s32 32, %v464
  %v466 = vshll.u32 %v457, %v464
  %v467 = vshrl.u32 %v449, %v465
  %v468 = vor.u32 %v466, %v467
  %v469 = vsub.s32 4294967266, %v464
  %v470 = vadd.s32 %v469, 127
  %v471 = vshll.u32 %v470, 23
  %v472 = vor.u32 4788187, %v471
  %v473 = vand.u32 2147483647, %v472
  %v475 = vcvt.s32.f32 %v468
  %v476 = vmul.f32 %v475, %v473
  %v477 = vxor.u32 %v476, 2147483648
  %v478 = vsel %vm395, %v477, %v476
  %v479 = vsub.s32 4, %v455
  %v480 = vsel %vm395, %v479, %v455
  %v481 = vsel %vm394, %v181, %v478
  %v482 = vsel %vm394, 0, %v480
  %v483 = vcosq.f32.pop %v481
  %v484 = vsinq.f32.pop %v481
  %vm485 = vweird.f32 %v181
  %v486 = vadd.s32 %v482, 3
  %v487 = vand.u32 %v486, 3
  %vm488 = vcmp.lt.s32.totalorder %v487, 2
  %vm489 = vcmp.eq.s32.totalorder %v487, 0
  %v490 = vxor.u32 %v484, 2147483648
  %v491 = vsel %vm489, %v483, %v490
  %vm492 = vcmp.eq.s32.totalorder %v487, 2
  %v493 = vxor.u32 %v483, 2147483648
  %v494 = vsel %vm492, %v493, %v484
  %v495 = vsel %vm488, %v491, %v494
  %v496 = vsel %vm485, nan, %v495
  %v497 = vand.u32 2147483647, %v182
  %vm498 = vcmp.le.f32.partialorder %v497, 0.7853982
  %vm499 = vcmp.lt.s32.totalorder %v182, 0
  %v500 = vand.u32 %v182, 2139095040
  %v501 = vshrl.u32 %v500, 23
  %v502 = vsub.s32 %v501, 127
  %v503 = vand.u32 2147483647, %v182
  %v504 = vand.u32 %v503, 8388607
  %v505 = vor.u32 %v504, 8388608
  %v506 = vsub.s32 0, %v505
  %v507 = vadd.s32 %v502, 1
  %vm508 = vcmp.gt.s32.totalorder %v507, 0
  %v509 = vsel %vm508, %v507, 0
  %v510 = vshrl.u32 %v509, 5
  %v511 = vand.u32 %v509, 31
  %v512 = vsub.s32 32, %v511
  %v513 = vshrl.u32 683565275, %v512
  %v514 = vshll.u32 683565275, %v511
  %v515 = vshrl.u32 2475754826, %v512
  %v516 = vor.u32 %v514, %v515
  %v517 = vshll.u32 2475754826, %v511
  %v518 = vshrl.u32 2131351028, %v512
  %v519 = vor.u32 %v517, %v518
  %v520 = vshll.u32 2131351028, %v511
  %v521 = vshrl.u32 2102212464, %v512
  %v522 = vor.u32 %v520, %v521
  %v523 = vshll.u32 2102212464, %v511
  %v524 = vshrl.u32 920167782, %v512
  %v525 = vor.u32 %v523, %v524
  %v526 = vshll.u32 920167782, %v511
  %v527 = vshrl.u32 1326507024, %v512
  %v528 = vor.u32 %v526, %v527
  %vm529 = vcmp.lt.s32.totalorder %v510, 1
  %vm530 = vcmp.lt.s32.totalorder %v510, 2
  %vm531 = vcmp.lt.s32.totalorder %v510, 3
  %vm532 = vcmp.lt.s32.totalorder %v510, 4
  %v533 = vsel %vm529, %v513, %v516
  %v534 = vsel %vm532, %v522, 2102212464
  %v535 = vsel %vm531, %v519, %v534
  %v536 = vsel %vm530, %v533, %v535
  %v537 = vsel %vm529, %v516, %v519
  %v538 = vsel %vm532, %v525, 920167782
  %v539 = vsel %vm531, %v522, %v538
  %v540 = vsel %vm530, %v537, %v539
  %v541 = vsel %vm529, %v519, %v522
  %v542 = vsel %vm532, %v528, 1326507024
  %v543 = vsel %vm531, %v525, %v542
  %v544 = vsel %vm530, %v541, %v543
  %v545 = vshll.u32 %v505, 8
  %v546 = vmul.u32.u64.compose %v545, %v544
  %v547 = vextract.low.u32 %v546
  %v548 = vextract.high.u32 %v546
  %v549 = vmul.u32.u64.compose %v545, %v540
  %v550 = vextract.low.u32 %v549
  %v551 = vextract.high.u32 %v549
  %v552 = vmul.u32 %v545, %v536
  %v553 = vadd.s32 %v548, %v550
  %vm554 = vc.u32 %v548, %v550
  %v555 = vadd.s32 %v551, 1
  %v556 = vsel %vm554, %v555, %v551
  %v557 = vadd.s32 %v552, %v556
  %v558 = vadd.s32 %v557, 536870912
  %v559 = vshrl.u32 %v558, 30
  %v560 = vshll.u32 %v559, 30
  %v561 = vsub.s32 %v557, %v560
  %vm562 = vcmp.lt.s32.totalorder %v561, 0
  %v563 = vsub.s32 0, %v561
  %v564 = vsel %vm562, %v563, %v561
  %v565 = vclz %v564
  %v566 = vsub.s32 %v565, 2
  %vm567 = vcmp.gt.s32.totalorder 0, %v566
  %v568 = vsel %vm567, 0, %v566
  %v569 = vsub.s32 32, %v568
  %v570 = vshll.u32 %v561, %v568
  %v571 = vshrl.u32 %v553, %v569
  %v572 = vor.u32 %v570, %v571
  %v573 = vsub.s32 4294967266, %v568
  %v574 = vadd.s32 %v573, 127
  %v575 = vshll.u32 %v574, 23
  %v576 = vor.u32 4788187, %v575
  %v577 = vand.u32 2147483647, %v576
  %v579 = vcvt.s32.f32 %v572
  %v580 = vmul.f32 %v579, %v577
  %v581 = vxor.u32 %v580, 2147483648
  %v582 = vsel %vm499, %v581, %v580
  %v583 = vsub.s32 4, %v559
  %v584 = vsel %vm499, %v583, %v559
  %v585 = vsel %vm498, %v182, %v582
  %v586 = vsel %vm498, 0, %v584
  %v587 = vcosq.f32.pop %v585
  %v588 = vsinq.f32.pop %v585
  %vm589 = vweird.f32 %v182
  %v590 = vadd.s32 %v586, 3
  %v591 = vand.u32 %v590, 3
  %vm592 = vcmp.lt.s32.totalorder %v591, 2
  %vm593 = vcmp.eq.s32.totalorder %v591, 0
  %v594 = vxor.u32 %v588, 2147483648
  %v595 = vsel %vm593, %v587, %v594
  %vm596 = vcmp.eq.s32.totalorder %v591, 2
  %v597 = vxor.u32 %v587, 2147483648
  %v598 = vsel %vm596, %v597, %v588
  %v599 = vsel %vm592, %v595, %v598
  %v600 = vsel %vm589, nan, %v599
  %v601 = vand.u32 2147483647, %v183
  %vm602 = vcmp.le.f32.partialorder %v601, 0.7853982
  %vm603 = vcmp.lt.s32.totalorder %v183, 0
  %v604 = vand.u32 %v183, 2139095040
  %v605 = vshrl.u32 %v604, 23
  %v606 = vsub.s32 %v605, 127
  %v607 = vand.u32 2147483647, %v183
  %v608 = vand.u32 %v607, 8388607
  %v609 = vor.u32 %v608, 8388608
  %v610 = vsub.s32 0, %v609
  %v611 = vadd.s32 %v606, 1
  %vm612 = vcmp.gt.s32.totalorder %v611, 0
  %v613 = vsel %vm612, %v611, 0
  %v614 = vshrl.u32 %v613, 5
  %v615 = vand.u32 %v613, 31
  %v616 = vsub.s32 32, %v615
  %v617 = vshrl.u32 683565275, %v616
  %v618 = vshll.u32 683565275, %v615
  %v619 = vshrl.u32 2475754826, %v616
  %v620 = vor.u32 %v618, %v619
  %v621 = vshll.u32 2475754826, %v615
  %v622 = vshrl.u32 2131351028, %v616
  %v623 = vor.u32 %v621, %v622
  %v624 = vshll.u32 2131351028, %v615
  %v625 = vshrl.u32 2102212464, %v616
  %v626 = vor.u32 %v624, %v625
  %v627 = vshll.u32 2102212464, %v615
  %v628 = vshrl.u32 920167782, %v616
  %v629 = vor.u32 %v627, %v628
  %v630 = vshll.u32 920167782, %v615
  %v631 = vshrl.u32 1326507024, %v616
  %v632 = vor.u32 %v630, %v631
  %vm633 = vcmp.lt.s32.totalorder %v614, 1
  %vm634 = vcmp.lt.s32.totalorder %v614, 2
  %vm635 = vcmp.lt.s32.totalorder %v614, 3
  %vm636 = vcmp.lt.s32.totalorder %v614, 4
  %v637 = vsel %vm633, %v617, %v620
  %v638 = vsel %vm636, %v626, 2102212464
  %v639 = vsel %vm635, %v623, %v638
  %v640 = vsel %vm634, %v637, %v639
  %v641 = vsel %vm633, %v620, %v623
  %v642 = vsel %vm636, %v629, 920167782
  %v643 = vsel %vm635, %v626, %v642
  %v644 = vsel %vm634, %v641, %v643
  %v645 = vsel %vm633, %v623, %v626
  %v646 = vsel %vm636, %v632, 1326507024
  %v647 = vsel %vm635, %v629, %v646
  %v648 = vsel %vm634, %v645, %v647
  %v649 = vshll.u32 %v609, 8
  %v650 = vmul.u32.u64.compose %v649, %v648
  %v651 = vextract.low.u32 %v650
  %v652 = vextract.high.u32 %v650
  %v653 = vmul.u32.u64.compose %v649, %v644
  %v654 = vextract.low.u32 %v653
  %v655 = vextract.high.u32 %v653
  %v656 = vmul.u32 %v649, %v640
  %v657 = vadd.s32 %v652, %v654
  %vm658 = vc.u32 %v652, %v654
  %v659 = vadd.s32 %v655, 1
  %v660 = vsel %vm658, %v659, %v655
  %v661 = vadd.s32 %v656, %v660
  %v662 = vadd.s32 %v661, 536870912
  %v663 = vshrl.u32 %v662, 30
  %v664 = vshll.u32 %v663, 30
  %v665 = vsub.s32 %v661, %v664
  %vm666 = vcmp.lt.s32.totalorder %v665, 0
  %v667 = vsub.s32 0, %v665
  %v668 = vsel %vm666, %v667, %v665
  %v669 = vclz %v668
  %v670 = vsub.s32 %v669, 2
  %vm671 = vcmp.gt.s32.totalorder 0, %v670
  %v672 = vsel %vm671, 0, %v670
  %v673 = vsub.s32 32, %v672
  %v674 = vshll.u32 %v665, %v672
  %v675 = vshrl.u32 %v657, %v673
  %v676 = vor.u32 %v674, %v675
  %v677 = vsub.s32 4294967266, %v672
  %v678 = vadd.s32 %v677, 127
  %v679 = vshll.u32 %v678, 23
  %v680 = vor.u32 4788187, %v679
  %v681 = vand.u32 2147483647, %v680
  %v683 = vcvt.s32.f32 %v676
  %v684 = vmul.f32 %v683, %v681
  %v685 = vxor.u32 %v684, 2147483648
  %v686 = vsel %vm603, %v685, %v684
  %v687 = vsub.s32 4, %v663
  %v688 = vsel %vm603, %v687, %v663
  %v689 = vsel %vm602, %v183, %v686
  %v690 = vsel %vm602, 0, %v688
  %v691 = vcosq.f32.pop %v689
  %v692 = vsinq.f32.pop %v689
  %vm693 = vweird.f32 %v183
  %v694 = vadd.s32 %v690, 3
  %v695 = vand.u32 %v694, 3
  %vm696 = vcmp.lt.s32.totalorder %v695, 2
  %vm697 = vcmp.eq.s32.totalorder %v695, 0
  %v698 = vxor.u32 %v692, 2147483648
  %v699 = vsel %vm697, %v691, %v698
  %vm700 = vcmp.eq.s32.totalorder %v695, 2
  %v701 = vxor.u32 %v691, 2147483648
  %v702 = vsel %vm700, %v701, %v692
  %v703 = vsel %vm696, %v699, %v702
  %v704 = vsel %vm693, nan, %v703
  %v705 = vand.u32 2147483647, %v184
  %vm706 = vcmp.le.f32.partialorder %v705, 0.7853982
  %vm707 = vcmp.lt.s32.totalorder %v184, 0
  %v708 = vand.u32 %v184, 2139095040
  %v709 = vshrl.u32 %v708, 23
  %v710 = vsub.s32 %v709, 127
  %v711 = vand.u32 2147483647, %v184
  %v712 = vand.u32 %v711, 8388607
  %v713 = vor.u32 %v712, 8388608
  %v714 = vsub.s32 0, %v713
  %v715 = vadd.s32 %v710, 1
  %vm716 = vcmp.gt.s32.totalorder %v715, 0
  %v717 = vsel %vm716, %v715, 0
  %v718 = vshrl.u32 %v717, 5
  %v719 = vand.u32 %v717, 31
  %v720 = vsub.s32 32, %v719
  %v721 = vshrl.u32 683565275, %v720
  %v722 = vshll.u32 683565275, %v719
  %v723 = vshrl.u32 2475754826, %v720
  %v724 = vor.u32 %v722, %v723
  %v725 = vshll.u32 2475754826, %v719
  %v726 = vshrl.u32 2131351028, %v720
  %v727 = vor.u32 %v725, %v726
  %v728 = vshll.u32 2131351028, %v719
  %v729 = vshrl.u32 2102212464, %v720
  %v730 = vor.u32 %v728, %v729
  %v731 = vshll.u32 2102212464, %v719
  %v732 = vshrl.u32 920167782, %v720
  %v733 = vor.u32 %v731, %v732
  %v734 = vshll.u32 920167782, %v719
  %v735 = vshrl.u32 1326507024, %v720
  %v736 = vor.u32 %v734, %v735
  %vm737 = vcmp.lt.s32.totalorder %v718, 1
  %vm738 = vcmp.lt.s32.totalorder %v718, 2
  %vm739 = vcmp.lt.s32.totalorder %v718, 3
  %vm740 = vcmp.lt.s32.totalorder %v718, 4
  %v741 = vsel %vm737, %v721, %v724
  %v742 = vsel %vm740, %v730, 2102212464
  %v743 = vsel %vm739, %v727, %v742
  %v744 = vsel %vm738, %v741, %v743
  %v745 = vsel %vm737, %v724, %v727
  %v746 = vsel %vm740, %v733, 920167782
  %v747 = vsel %vm739, %v730, %v746
  %v748 = vsel %vm738, %v745, %v747
  %v749 = vsel %vm737, %v727, %v730
  %v750 = vsel %vm740, %v736, 1326507024
  %v751 = vsel %vm739, %v733, %v750
  %v752 = vsel %vm738, %v749, %v751
  %v753 = vshll.u32 %v713, 8
  %v754 = vmul.u32.u64.compose %v753, %v752
  %v755 = vextract.low.u32 %v754
  %v756 = vextract.high.u32 %v754
  %v757 = vmul.u32.u64.compose %v753, %v748
  %v758 = vextract.low.u32 %v757
  %v759 = vextract.high.u32 %v757
  %v760 = vmul.u32 %v753, %v744
  %v761 = vadd.s32 %v756, %v758
  %vm762 = vc.u32 %v756, %v758
  %v763 = vadd.s32 %v759, 1
  %v764 = vsel %vm762, %v763, %v759
  %v765 = vadd.s32 %v760, %v764
  %v766 = vadd.s32 %v765, 536870912
  %v767 = vshrl.u32 %v766, 30
  %v768 = vshll.u32 %v767, 30
  %v769 = vsub.s32 %v765, %v768
  %vm770 = vcmp.lt.s32.totalorder %v769, 0
  %v771 = vsub.s32 0, %v769
  %v772 = vsel %vm770, %v771, %v769
  %v773 = vclz %v772
  %v774 = vsub.s32 %v773, 2
  %vm775 = vcmp.gt.s32.totalorder 0, %v774
  %v776 = vsel %vm775, 0, %v774
  %v777 = vsub.s32 32, %v776
  %v778 = vshll.u32 %v769, %v776
  %v779 = vshrl.u32 %v761, %v777
  %v780 = vor.u32 %v778, %v779
  %v781 = vsub.s32 4294967266, %v776
  %v782 = vadd.s32 %v781, 127
  %v783 = vshll.u32 %v782, 23
  %v784 = vor.u32 4788187, %v783
  %v785 = vand.u32 2147483647, %v784
  %v787 = vcvt.s32.f32 %v780
  %v788 = vmul.f32 %v787, %v785
  %v789 = vxor.u32 %v788, 2147483648
  %v790 = vsel %vm707, %v789, %v788
  %v791 = vsub.s32 4, %v767
  %v792 = vsel %vm707, %v791, %v767
  %v793 = vsel %vm706, %v184, %v790
  %v794 = vsel %vm706, 0, %v792
  %v795 = vcosq.f32.pop %v793
  %v796 = vsinq.f32.pop %v793
  %vm797 = vweird.f32 %v184
  %v798 = vadd.s32 %v794, 3
  %v799 = vand.u32 %v798, 3
  %vm800 = vcmp.lt.s32.totalorder %v799, 2
  %vm801 = vcmp.eq.s32.totalorder %v799, 0
  %v802 = vxor.u32 %v796, 2147483648
  %v803 = vsel %vm801, %v795, %v802
  %vm804 = vcmp.eq.s32.totalorder %v799, 2
  %v805 = vxor.u32 %v795, 2147483648
  %v806 = vsel %vm804, %v805, %v796
  %v807 = vsel %vm800, %v803, %v806
  %v808 = vsel %vm797, nan, %v807
  %v809 = vmul.f32 %v288, 0.5
  %v810 = vmul.f32 %v392, 0.5
  %v811 = vmul.f32 %v496, 0.5
  %v812 = vmul.f32 %v600, 0.5
  %v813 = vmul.f32 %v704, 0.5
  %v814 = vmul.f32 %v808, 0.5
  %816 = vset.pattern.permute.xlu0 0
  %817 = vperm.xlu0 %816, %v52
  %v818 = vpop.permute.xlu0 %817
  %821 = vset.pattern.permute.xlu0 0
  %822 = vperm.xlu0 %821, %v53
  %v823 = vpop.permute.xlu0 %822
  %826 = vset.pattern.permute.xlu0 0
  %827 = vperm.xlu0 %826, %v54
  %v828 = vpop.permute.xlu0 %827
  %831 = vset.pattern.permute.xlu0 0
  %832 = vperm.xlu0 %831, %v55
  %v833 = vpop.permute.xlu0 %832
  %836 = vset.pattern.permute.xlu0 0
  %837 = vperm.xlu0 %836, %v56
  %v838 = vpop.permute.xlu0 %837
  %841 = vset.pattern.permute.xlu0 0
  %842 = vperm.xlu0 %841, %v57
  %v843 = vpop.permute.xlu0 %842
  %v845 = vrcp.pop %v818
  %v846 = vmul.f32 %v809, %v845
  %v847 = vrcp.pop %v823
  %v848 = vmul.f32 %v810, %v847
  %v849 = vrcp.pop %v828
  %v850 = vmul.f32 %v811, %v849
  %v851 = vrcp.pop %v833
  %v852 = vmul.f32 %v812, %v851
  %v853 = vrcp.pop %v838
  %v854 = vmul.f32 %v813, %v853
  %v855 = vrcp.pop %v843
  %v856 = vmul.f32 %v814, %v855
  %858 = vset.pattern.permute.xlu0 0
  %859 = vperm.xlu0 %858, %v136
  %v860 = vpop.permute.xlu0 %859
  %863 = vset.pattern.permute.xlu0 0
  %864 = vperm.xlu0 %863, %v137
  %v865 = vpop.permute.xlu0 %864
  %868 = vset.pattern.permute.xlu0 0
  %869 = vperm.xlu0 %868, %v138
  %v870 = vpop.permute.xlu0 %869
  %873 = vset.pattern.permute.xlu0 0
  %874 = vperm.xlu0 %873, %v139
  %v875 = vpop.permute.xlu0 %874
  %878 = vset.pattern.permute.xlu0 0
  %879 = vperm.xlu0 %878, %v140
  %v880 = vpop.permute.xlu0 %879
  %883 = vset.pattern.permute.xlu0 0
  %884 = vperm.xlu0 %883, %v141
  %v885 = vpop.permute.xlu0 %884
  %v887 = vmul.f32 %v860, %v846
  %v888 = vmul.f32 %v865, %v848
  %v889 = vmul.f32 %v870, %v850
  %v890 = vmul.f32 %v875, %v852
  %v891 = vmul.f32 %v880, %v854
  %v892 = vmul.f32 %v885, %v856
  %v893 = vld [vmem:[%s0] sm:$0xff]
  %v894 = vld [vmem:[%s0 + $0x8] sm:$0xff]
  %v895 = vld [vmem:[%s0 + $0x10] sm:$0xff]
  %v896 = vld [vmem:[%s0 + $0x18] sm:$0xff]
  %v897 = vld [vmem:[%s0 + $0x20] sm:$0xff]
  %v898 = vld [vmem:[%s0 + $0x28] sm:$0xff]
  %v899 = vld [vmem:[%s3] sm:$0xf]
  %v900 = vld [vmem:[%s4] sm:$0xff]
  %vm901 = vcmask 64512
  %v903 = vsel %vm901, %v887, 0
  %v906 = vsel %vm901, %v888, 0
  %v909 = vsel %vm901, %v889, 0
  %v912 = vsel %vm901, %v890, 0
  %v915 = vsel %vm901, %v891, 0
  %v918 = vsel %vm901, %v892, 0
  %920 = vmatprep.subr.mxu0 0.0
  %921 = vmatpush1.msra.mxu0 %v900
  %922 = vmatprep.subr.mxu0 0.0
  %923 = vmatpush1.msra.mxu0 0.0
  %924 = vmatprep.subr.mxu0 0.0
  %925 = vmatpush1.msra.mxu0 0.0
  %926 = vmatprep.subr.mxu0 0.0
  %927 = vmatpush1.msra.mxu0 0.0
  %928 = vmatprep.subr.mxu0 0.0
  %929 = vmatpush1.msra.mxu0 0.0
  %930 = vmatprep.subr.mxu0 0.0
  %931 = vmatpush1.msra.mxu0 0.0
  %932 = vmatprep.subr.mxu0 0.0
  %933 = vmatpush1.msra.mxu0 0.0
  %934 = vmatprep.subr.mxu0 0.0
  %935 = vmatpush1.msra.mxu0 0.0
  %936 = vmatprep.subr.mxu0 0.0
  %937 = vmatpush1.msra.mxu0 0.0
  %938 = vmatprep.subr.mxu0 0.0
  %939 = vmatpush1.msra.mxu0 0.0
  %940 = vmatprep.subr.mxu0 0.0
  %941 = vmatpush1.msra.mxu0 0.0
  %942 = vmatprep.subr.mxu0 0.0
  %943 = vmatpush1.msra.mxu0 0.0
  %944 = vmatprep.subr.mxu0 0.0
  %945 = vmatpush1.msra.mxu0 0.0
  %946 = vmatprep.subr.mxu0 0.0
  %947 = vmatpush1.msra.mxu0 0.0
  %948 = vmatprep.subr.mxu0 0.0
  %949 = vmatpush1.msra.mxu0 0.0
  %950 = vmatprep.subr.mxu0 0.0
  %951 = vmatpush1.msra.mxu0 0.0
  %952 = vmatprep.subr.mxu0 0.0
  %953 = vmatpush1.msra.mxu0 0.0
  %954 = vmatprep.subr.mxu0 0.0
  %955 = vmatpush1.msra.mxu0 0.0
  %956 = vmatprep.subr.mxu0 0.0
  %957 = vmatpush1.msra.mxu0 0.0
  %958 = vmatprep.subr.mxu0 0.0
  %959 = vmatpush1.msra.mxu0 0.0
  %960 = vmatprep.subr.mxu0 0.0
  %961 = vmatpush1.msra.mxu0 0.0
  %962 = vmatprep.subr.mxu0 0.0
  %963 = vmatpush1.msra.mxu0 0.0
  %964 = vmatprep.subr.mxu0 0.0
  %965 = vmatpush1.msra.mxu0 0.0
  %966 = vmatprep.subr.mxu0 0.0
  %967 = vmatpush1.msra.mxu0 0.0
  %968 = vmatprep.subr.mxu0 0.0
  %969 = vmatpush1.msra.mxu0 0.0
  %970 = vmatprep.subr.mxu0 0.0
  %971 = vmatpush1.msra.mxu0 0.0
  %972 = vmatprep.subr.mxu0 0.0
  %973 = vmatpush1.msra.mxu0 0.0
  %974 = vmatprep.subr.mxu0 0.0
  %975 = vmatpush1.msra.mxu0 0.0
  %976 = vmatprep.subr.mxu0 0.0
  %977 = vmatpush1.msra.mxu0 0.0
  %978 = vmatprep.subr.mxu0 0.0
  %979 = vmatpush1.msra.mxu0 0.0
  %980 = vmatprep.subr.mxu0 0.0
  %981 = vmatpush1.msra.mxu0 0.0
  %982 = vmatprep.subr.mxu0 0.0
  %983 = vmatpush1.msra.mxu0 0.0
  %984 = vmatprep.mubr.f32.mxu0 0.0
  %985 = vmatmul.mubr.f32.gmra.mrb[0].mxu0 %v903
  %v986 = vpop.f32.mrb[0].mxu0
  %v987 = vadd.f32 0.0, %v986
  %v988 = vpop.f32.mrb[0].mxu0
  %989 = vmatprep.mubr.f32.mxu0 0.0
  %990 = vmatmul.mubr.f32.gmra.mrb[0].mxu0 %v906
  %v991 = vpop.f32.mrb[0].mxu0
  %v992 = vadd.f32 0.0, %v991
  %v993 = vpop.f32.mrb[0].mxu0
  %994 = vmatprep.mubr.f32.mxu0 0.0
  %995 = vmatmul.mubr.f32.gmra.mrb[0].mxu0 %v909
  %v996 = vpop.f32.mrb[0].mxu0
  %v997 = vadd.f32 0.0, %v996
  %v998 = vpop.f32.mrb[0].mxu0
  %999 = vmatprep.mubr.f32.mxu0 0.0
  %1000 = vmatmul.mubr.f32.gmra.mrb[0].mxu0 %v912
  %v1001 = vpop.f32.mrb[0].mxu0
  %v1002 = vadd.f32 0.0, %v1001
  %v1003 = vpop.f32.mrb[0].mxu0
  %1004 = vmatprep.mubr.f32.mxu0 0.0
  %1005 = vmatmul.mubr.f32.gmra.mrb[0].mxu0 %v915
  %v1006 = vpop.f32.mrb[0].mxu0
  %v1007 = vadd.f32 0.0, %v1006
  %v1008 = vpop.f32.mrb[0].mxu0
  %1009 = vmatprep.mubr.f32.mxu0 0.0
  %1010 = vmatmul.mubr.f32.gmra.mrb[0].mxu0 %v918
  %v1011 = vpop.f32.mrb[0].mxu0
  %v1012 = vadd.f32 0.0, %v1011
  %v1013 = vpop.f32.mrb[0].mxu0
  %1014 = vdwg.mxu0
  %vm1015 = vcmask 31744
  %v1017 = vsel %vm1015, %v893, 0
  %v1020 = vsel %vm1015, %v894, 0
  %v1023 = vsel %vm1015, %v895, 0
  %v1026 = vsel %vm1015, %v896, 0
  %v1029 = vsel %vm1015, %v897, 0
  %v1032 = vsel %vm1015, %v898, 0
  %vm1034 = vcmask 1043456
  %v1036 = vsel %vm1034, %v899, 0
  %1038 = vmatprep.subr.mxu0 0.0
  %1039 = vmatpush1.msra.mxu0 %v1036
  %1040 = vmatprep.subr.mxu0 0.0
  %1041 = vmatpush1.msra.mxu0 0.0
  %1042 = vmatprep.subr.mxu0 0.0
  %1043 = vmatpush1.msra.mxu0 0.0
  %1044 = vmatprep.subr.mxu0 0.0
  %1045 = vmatpush1.msra.mxu0 0.0
  %1046 = vmatprep.subr.mxu0 0.0
  %1047 = vmatpush1.msra.mxu0 0.0
  %1048 = vmatprep.subr.mxu0 0.0
  %1049 = vmatpush1.msra.mxu0 0.0
  %1050 = vmatprep.subr.mxu0 0.0
  %1051 = vmatpush1.msra.mxu0 0.0
  %1052 = vmatprep.subr.mxu0 0.0
  %1053 = vmatpush1.msra.mxu0 0.0
  %1054 = vmatprep.subr.mxu0 0.0
  %1055 = vmatpush1.msra.mxu0 0.0
  %1056 = vmatprep.subr.mxu0 0.0
  %1057 = vmatpush1.msra.mxu0 0.0
  %1058 = vmatprep.subr.mxu0 0.0
  %1059 = vmatpush1.msra.mxu0 0.0
  %1060 = vmatprep.subr.mxu0 0.0
  %1061 = vmatpush1.msra.mxu0 0.0
  %1062 = vmatprep.subr.mxu0 0.0
  %1063 = vmatpush1.msra.mxu0 0.0
  %1064 = vmatprep.subr.mxu0 0.0
  %1065 = vmatpush1.msra.mxu0 0.0
  %1066 = vmatprep.subr.mxu0 0.0
  %1067 = vmatpush1.msra.mxu0 0.0
  %1068 = vmatprep.subr.mxu0 0.0
  %1069 = vmatpush1.msra.mxu0 0.0
  %1070 = vmatprep.subr.mxu0 0.0
  %1071 = vmatpush1.msra.mxu0 0.0
  %1072 = vmatprep.subr.mxu0 0.0
  %1073 = vmatpush1.msra.mxu0 0.0
  %1074 = vmatprep.subr.mxu0 0.0
  %1075 = vmatpush1.msra.mxu0 0.0
  %1076 = vmatprep.subr.mxu0 0.0
  %1077 = vmatpush1.msra.mxu0 0.0
  %1078 = vmatprep.subr.mxu0 0.0
  %1079 = vmatpush1.msra.mxu0 0.0
  %1080 = vmatprep.subr.mxu0 0.0
  %1081 = vmatpush1.msra.mxu0 0.0
  %1082 = vmatprep.subr.mxu0 0.0
  %1083 = vmatpush1.msra.mxu0 0.0
  %1084 = vmatprep.subr.mxu0 0.0
  %1085 = vmatpush1.msra.mxu0 0.0
  %1086 = vmatprep.subr.mxu0 0.0
  %1087 = vmatpush1.msra.mxu0 0.0
  %1088 = vmatprep.subr.mxu0 0.0
  %1089 = vmatpush1.msra.mxu0 0.0
  %1090 = vmatprep.subr.mxu0 0.0
  %1091 = vmatpush1.msra.mxu0 0.0
  %1092 = vmatprep.subr.mxu0 0.0
  %1093 = vmatpush1.msra.mxu0 0.0
  %1094 = vmatprep.subr.mxu0 0.0
  %1095 = vmatpush1.msra.mxu0 0.0
  %1096 = vmatprep.subr.mxu0 0.0
  %1097 = vmatpush1.msra.mxu0 0.0
  %1098 = vmatprep.subr.mxu0 0.0
  %1099 = vmatpush1.msra.mxu0 0.0
  %1100 = vmatprep.subr.mxu0 0.0
  %1101 = vmatpush1.msra.mxu0 0.0
  %1102 = vmatprep.mubr.f32.mxu0 0.0
  %1103 = vmatmul.mubr.f32.gmra.mrb[0].mxu0 %v1017
  %v1104 = vpop.f32.mrb[0].mxu0
  %v1105 = vadd.f32 %v987, %v1104
  %v1106 = vpop.f32.mrb[0].mxu0
  %1107 = vmatprep.mubr.f32.mxu0 0.0
  %1108 = vmatmul.mubr.f32.gmra.mrb[0].mxu0 %v1020
  %v1109 = vpop.f32.mrb[0].mxu0
  %v1110 = vadd.f32 %v992, %v1109
  %v1111 = vpop.f32.mrb[0].mxu0
  %1112 = vmatprep.mubr.f32.mxu0 0.0
  %1113 = vmatmul.mubr.f32.gmra.mrb[0].mxu0 %v1023
  %v1114 = vpop.f32.mrb[0].mxu0
  %v1115 = vadd.f32 %v997, %v1114
  %v1116 = vpop.f32.mrb[0].mxu0
  %1117 = vmatprep.mubr.f32.mxu0 0.0
  %1118 = vmatmul.mubr.f32.gmra.mrb[0].mxu0 %v1026
  %v1119 = vpop.f32.mrb[0].mxu0
  %v1120 = vadd.f32 %v1002, %v1119
  %v1121 = vpop.f32.mrb[0].mxu0
  %1122 = vmatprep.mubr.f32.mxu0 0.0
  %1123 = vmatmul.mubr.f32.gmra.mrb[0].mxu0 %v1029
  %v1124 = vpop.f32.mrb[0].mxu0
  %v1125 = vadd.f32 %v1007, %v1124
  %v1126 = vpop.f32.mrb[0].mxu0
  %1127 = vmatprep.mubr.f32.mxu0 0.0
  %1128 = vmatmul.mubr.f32.gmra.mrb[0].mxu0 %v1032
  %v1129 = vpop.f32.mrb[0].mxu0
  %v1130 = vadd.f32 %v1012, %v1129
  %v1131 = vpop.f32.mrb[0].mxu0
  %1132 = vdwg.mxu0
  %v1133 = vld [vmem:[%s5] sm:$0x1]
  %v1135 = vlaneseq
  %v1136 = vshrl.u32 %v1135, 7
  %v1137 = vsub.s32 0, %v1136
  %v1138 = vrot.slane %v1133, %v1137
  %v1140 = vadd.f32 %v1105, %v1138
  %v1141 = vadd.f32 %v1110, %v1138
  %v1142 = vadd.f32 %v1115, %v1138
  %v1143 = vadd.f32 %v1120, %v1138
  %v1144 = vadd.f32 %v1125, %v1138
  %v1145 = vadd.f32 %v1130, %v1138
  %v1146 = vtanh.pop %v1140
  %v1147 = vtanh.pop %v1141
  %v1148 = vtanh.pop %v1142
  %v1149 = vtanh.pop %v1143
  %v1150 = vtanh.pop %v1144
  %v1151 = vtanh.pop %v1145
  %v1152 = vld [vmem:[%s6] sm:$0xff]
  %v1153 = vld [vmem:[%s6 + $0x8] sm:$0xff]
  %v1154 = vld [vmem:[%s6 + $0x10] sm:$0xff]
  %v1155 = vld [vmem:[%s6 + $0x18] sm:$0xff]
  %v1156 = vld [vmem:[%s7] sm:$0x1]
  %v1158 = vlaneseq
  %v1159 = vshrl.u32 %v1158, 7
  %v1160 = vsub.s32 0, %v1159
  %v1161 = vrot.slane %v1156, %v1160
  %vm1163 = vcmask 261120
  %v1165 = vsel %vm1163, %v1146, 0
  %v1168 = vsel %vm1163, %v1147, 0
  %v1171 = vsel %vm1163, %v1148, 0
  %v1174 = vsel %vm1163, %v1149, 0
  %v1177 = vsel %vm1163, %v1150, 0
  %v1180 = vsel %vm1163, %v1151, 0
  %1182 = vmatprep.subr.mxu0 0.0
  %1183 = vmatpush1.msra.mxu0 %v1152
  %1184 = vmatprep.subr.mxu0 0.0
  %1185 = vmatpush1.msra.mxu0 %v1153
  %1186 = vmatprep.subr.mxu0 0.0
  %1187 = vmatpush1.msra.mxu0 %v1154
  %1188 = vmatprep.subr.mxu0 0.0
  %1189 = vmatpush1.msra.mxu0 %v1155
  %1190 = vmatprep.subr.mxu0 0.0
  %1191 = vmatpush1.msra.mxu0 0.0
  %1192 = vmatprep.subr.mxu0 0.0
  %1193 = vmatpush1.msra.mxu0 0.0
  %1194 = vmatprep.subr.mxu0 0.0
  %1195 = vmatpush1.msra.mxu0 0.0
  %1196 = vmatprep.subr.mxu0 0.0
  %1197 = vmatpush1.msra.mxu0 0.0
  %1198 = vmatprep.subr.mxu0 0.0
  %1199 = vmatpush1.msra.mxu0 0.0
  %1200 = vmatprep.subr.mxu0 0.0
  %1201 = vmatpush1.msra.mxu0 0.0
  %1202 = vmatprep.subr.mxu0 0.0
  %1203 = vmatpush1.msra.mxu0 0.0
  %1204 = vmatprep.subr.mxu0 0.0
  %1205 = vmatpush1.msra.mxu0 0.0
  %1206 = vmatprep.subr.mxu0 0.0
  %1207 = vmatpush1.msra.mxu0 0.0
  %1208 = vmatprep.subr.mxu0 0.0
  %1209 = vmatpush1.msra.mxu0 0.0
  %1210 = vmatprep.subr.mxu0 0.0
  %1211 = vmatpush1.msra.mxu0 0.0
  %1212 = vmatprep.subr.mxu0 0.0
  %1213 = vmatpush1.msra.mxu0 0.0
  %1214 = vmatprep.subr.mxu0 0.0
  %1215 = vmatpush1.msra.mxu0 0.0
  %1216 = vmatprep.subr.mxu0 0.0
  %1217 = vmatpush1.msra.mxu0 0.0
  %1218 = vmatprep.subr.mxu0 0.0
  %1219 = vmatpush1.msra.mxu0 0.0
  %1220 = vmatprep.subr.mxu0 0.0
  %1221 = vmatpush1.msra.mxu0 0.0
  %1222 = vmatprep.subr.mxu0 0.0
  %1223 = vmatpush1.msra.mxu0 0.0
  %1224 = vmatprep.subr.mxu0 0.0
  %1225 = vmatpush1.msra.mxu0 0.0
  %1226 = vmatprep.subr.mxu0 0.0
  %1227 = vmatpush1.msra.mxu0 0.0
  %1228 = vmatprep.subr.mxu0 0.0
  %1229 = vmatpush1.msra.mxu0 0.0
  %1230 = vmatprep.subr.mxu0 0.0
  %1231 = vmatpush1.msra.mxu0 0.0
  %1232 = vmatprep.subr.mxu0 0.0
  %1233 = vmatpush1.msra.mxu0 0.0
  %1234 = vmatprep.subr.mxu0 0.0
  %1235 = vmatpush1.msra.mxu0 0.0
  %1236 = vmatprep.subr.mxu0 0.0
  %1237 = vmatpush1.msra.mxu0 0.0
  %1238 = vmatprep.subr.mxu0 0.0
  %1239 = vmatpush1.msra.mxu0 0.0
  %1240 = vmatprep.subr.mxu0 0.0
  %1241 = vmatpush1.msra.mxu0 0.0
  %1242 = vmatprep.subr.mxu0 0.0
  %1243 = vmatpush1.msra.mxu0 0.0
  %1244 = vmatprep.subr.mxu0 0.0
  %1245 = vmatpush1.msra.mxu0 0.0
  %1246 = vmatprep.mubr.f32.mxu0 0.0
  %1247 = vmatmul.mubr.f32.gmra.mrb[0].mxu0 %v1165
  %v1248 = vpop.f32.mrb[0].mxu0
  %v1249 = vadd.f32 %v1161, %v1248
  %v1250 = vpop.f32.mrb[0].mxu0
  %1251 = vmatprep.mubr.f32.mxu0 0.0
  %1252 = vmatmul.mubr.f32.gmra.mrb[0].mxu0 %v1168
  %v1253 = vpop.f32.mrb[0].mxu0
  %v1254 = vadd.f32 %v1161, %v1253
  %v1255 = vpop.f32.mrb[0].mxu0
  %1256 = vmatprep.mubr.f32.mxu0 0.0
  %1257 = vmatmul.mubr.f32.gmra.mrb[0].mxu0 %v1171
  %v1258 = vpop.f32.mrb[0].mxu0
  %v1259 = vadd.f32 %v1161, %v1258
  %v1260 = vpop.f32.mrb[0].mxu0
  %1261 = vmatprep.mubr.f32.mxu0 0.0
  %1262 = vmatmul.mubr.f32.gmra.mrb[0].mxu0 %v1174
  %v1263 = vpop.f32.mrb[0].mxu0
  %v1264 = vadd.f32 %v1161, %v1263
  %v1265 = vpop.f32.mrb[0].mxu0
  %1266 = vmatprep.mubr.f32.mxu0 0.0
  %1267 = vmatmul.mubr.f32.gmra.mrb[0].mxu0 %v1177
  %v1268 = vpop.f32.mrb[0].mxu0
  %v1269 = vadd.f32 %v1161, %v1268
  %v1270 = vpop.f32.mrb[0].mxu0
  %1271 = vmatprep.mubr.f32.mxu0 0.0
  %1272 = vmatmul.mubr.f32.gmra.mrb[0].mxu0 %v1180
  %v1273 = vpop.f32.mrb[0].mxu0
  %v1274 = vadd.f32 %v1161, %v1273
  %v1275 = vpop.f32.mrb[0].mxu0
  %1276 = vdwg.mxu0
  %v1277 = vld [vmem:[%s8] sm:$0x1]
  %v1278 = vld [vmem:[%s9] sm:$0x1]
  %vm1279 = vcmask 130048
  %v1280 = vsel %vm1279, %v1249, 0.0
  %1281 = vadd.xlane.f32.xlu0 %v1280
  %v1282 = vpop.xlane.xlu0 %1281
  %v1283 = vsel %vm1279, %v1254, 0.0
  %1284 = vadd.xlane.f32.xlu0 %v1283
  %v1285 = vpop.xlane.xlu0 %1284
  %v1286 = vsel %vm1279, %v1259, 0.0
  %1287 = vadd.xlane.f32.xlu0 %v1286
  %v1288 = vpop.xlane.xlu0 %1287
  %v1289 = vsel %vm1279, %v1264, 0.0
  %1290 = vadd.xlane.f32.xlu0 %v1289
  %v1291 = vpop.xlane.xlu0 %1290
  %v1292 = vsel %vm1279, %v1269, 0.0
  %1293 = vadd.xlane.f32.xlu0 %v1292
  %v1294 = vpop.xlane.xlu0 %1293
  %v1295 = vsel %vm1279, %v1274, 0.0
  %1296 = vadd.xlane.f32.xlu0 %v1295
  %v1297 = vpop.xlane.xlu0 %1296
  %v1298 = vrcp.pop 16.0
  %v1299 = vmul.f32 %v1282, %v1298
  %v1300 = vmul.f32 %v1285, %v1298
  %v1301 = vmul.f32 %v1288, %v1298
  %v1302 = vmul.f32 %v1291, %v1298
  %v1303 = vmul.f32 %v1294, %v1298
  %v1304 = vmul.f32 %v1297, %v1298
  %v1305 = vsub.f32 %v1249, %v1299
  %v1306 = vsub.f32 %v1254, %v1300
  %v1307 = vsub.f32 %v1259, %v1301
  %v1308 = vsub.f32 %v1264, %v1302
  %v1309 = vsub.f32 %v1269, %v1303
  %v1310 = vsub.f32 %v1274, %v1304
  %v1311 = vmul.f32 %v1305, %v1305
  %v1312 = vmul.f32 %v1306, %v1306
  %v1313 = vmul.f32 %v1307, %v1307
  %v1314 = vmul.f32 %v1308, %v1308
  %v1315 = vmul.f32 %v1309, %v1309
  %v1316 = vmul.f32 %v1310, %v1310
  %v1317 = vsel %vm1279, %v1311, 0.0
  %1318 = vadd.xlane.f32.xlu0 %v1317
  %v1319 = vpop.xlane.xlu0 %1318
  %v1320 = vsel %vm1279, %v1312, 0.0
  %1321 = vadd.xlane.f32.xlu0 %v1320
  %v1322 = vpop.xlane.xlu0 %1321
  %v1323 = vsel %vm1279, %v1313, 0.0
  %1324 = vadd.xlane.f32.xlu0 %v1323
  %v1325 = vpop.xlane.xlu0 %1324
  %v1326 = vsel %vm1279, %v1314, 0.0
  %1327 = vadd.xlane.f32.xlu0 %v1326
  %v1328 = vpop.xlane.xlu0 %1327
  %v1329 = vsel %vm1279, %v1315, 0.0
  %1330 = vadd.xlane.f32.xlu0 %v1329
  %v1331 = vpop.xlane.xlu0 %1330
  %v1332 = vsel %vm1279, %v1316, 0.0
  %1333 = vadd.xlane.f32.xlu0 %v1332
  %v1334 = vpop.xlane.xlu0 %1333
  %v1335 = vmul.f32 %v1319, %v1298
  %v1336 = vmul.f32 %v1322, %v1298
  %v1337 = vmul.f32 %v1325, %v1298
  %v1338 = vmul.f32 %v1328, %v1298
  %v1339 = vmul.f32 %v1331, %v1298
  %v1340 = vmul.f32 %v1334, %v1298
  %v1341 = vadd.f32 %v1335, 1e-05
  %v1342 = vadd.f32 %v1336, 1e-05
  %v1343 = vadd.f32 %v1337, 1e-05
  %v1344 = vadd.f32 %v1338, 1e-05
  %v1345 = vadd.f32 %v1339, 1e-05
  %v1346 = vadd.f32 %v1340, 1e-05
  %v1347 = vrsqrt.pop %v1341
  %v1348 = vrsqrt.pop %v1342
  %v1349 = vrsqrt.pop %v1343
  %v1350 = vrsqrt.pop %v1344
  %v1351 = vrsqrt.pop %v1345
  %v1352 = vrsqrt.pop %v1346
  %v1353 = vmul.f32 %v1305, %v1347
  %v1354 = vmul.f32 %v1306, %v1348
  %v1355 = vmul.f32 %v1307, %v1349
  %v1356 = vmul.f32 %v1308, %v1350
  %v1357 = vmul.f32 %v1309, %v1351
  %v1358 = vmul.f32 %v1310, %v1352
  %v1360 = vlaneseq
  %v1361 = vshrl.u32 %v1360, 7
  %v1362 = vsub.s32 0, %v1361
  %v1363 = vrot.slane %v1277, %v1362
  %v1365 = vmul.f32 %v1353, %v1363
  %v1366 = vmul.f32 %v1354, %v1363
  %v1367 = vmul.f32 %v1355, %v1363
  %v1368 = vmul.f32 %v1356, %v1363
  %v1369 = vmul.f32 %v1357, %v1363
  %v1370 = vmul.f32 %v1358, %v1363
  %v1372 = vlaneseq
  %v1373 = vshrl.u32 %v1372, 7
  %v1374 = vsub.s32 0, %v1373
  %v1375 = vrot.slane %v1278, %v1374
  %v1377 = vadd.f32 %v1365, %v1375
  %v1378 = vadd.f32 %v1366, %v1375
  %v1379 = vadd.f32 %v1367, %v1375
  %v1380 = vadd.f32 %v1368, %v1375
  %v1381 = vadd.f32 %v1369, %v1375
  %v1382 = vadd.f32 %v1370, %v1375
  %v1383 = vmul.f32 %v1377, %v860
  %v1384 = vmul.f32 %v1378, %v865
  %v1385 = vmul.f32 %v1379, %v870
  %v1386 = vmul.f32 %v1380, %v875
  %v1387 = vmul.f32 %v1381, %v880
  %v1388 = vmul.f32 %v1382, %v885
  %1389 = vst.msk [vmem:[%s15] sm:$0xff] %vm1279, %v1383
  %1390 = vst.msk [vmem:[%s15 + $0x8] sm:$0xff] %vm1279, %v1384
  %1391 = vst.msk [vmem:[%s15 + $0x10] sm:$0xff] %vm1279, %v1385
  %1392 = vst.msk [vmem:[%s15 + $0x18] sm:$0xff] %vm1279, %v1386
  %1393 = vst.msk [vmem:[%s15 + $0x20] sm:$0xff] %vm1279, %v1387
  %1394 = vst.msk [vmem:[%s15 + $0x28] sm:$0xff] %vm1279, %v1388
  %v1395 = vld [vmem:[%s10] sm:$0xf]
  %v1396 = vld [vmem:[%s11] sm:$0xff]
  %1397 = vmatprep.subr.mxu0 0.0
  %1398 = vmatpush1.msra.mxu0 %v1396
  %1399 = vmatprep.subr.mxu0 0.0
  %1400 = vmatpush1.msra.mxu0 0.0
  %1401 = vmatprep.subr.mxu0 0.0
  %1402 = vmatpush1.msra.mxu0 0.0
  %1403 = vmatprep.subr.mxu0 0.0
  %1404 = vmatpush1.msra.mxu0 0.0
  %1405 = vmatprep.subr.mxu0 0.0
  %1406 = vmatpush1.msra.mxu0 0.0
  %1407 = vmatprep.subr.mxu0 0.0
  %1408 = vmatpush1.msra.mxu0 0.0
  %1409 = vmatprep.subr.mxu0 0.0
  %1410 = vmatpush1.msra.mxu0 0.0
  %1411 = vmatprep.subr.mxu0 0.0
  %1412 = vmatpush1.msra.mxu0 0.0
  %1413 = vmatprep.subr.mxu0 0.0
  %1414 = vmatpush1.msra.mxu0 0.0
  %1415 = vmatprep.subr.mxu0 0.0
  %1416 = vmatpush1.msra.mxu0 0.0
  %1417 = vmatprep.subr.mxu0 0.0
  %1418 = vmatpush1.msra.mxu0 0.0
  %1419 = vmatprep.subr.mxu0 0.0
  %1420 = vmatpush1.msra.mxu0 0.0
  %1421 = vmatprep.subr.mxu0 0.0
  %1422 = vmatpush1.msra.mxu0 0.0
  %1423 = vmatprep.subr.mxu0 0.0
  %1424 = vmatpush1.msra.mxu0 0.0
  %1425 = vmatprep.subr.mxu0 0.0
  %1426 = vmatpush1.msra.mxu0 0.0
  %1427 = vmatprep.subr.mxu0 0.0
  %1428 = vmatpush1.msra.mxu0 0.0
  %1429 = vmatprep.subr.mxu0 0.0
  %1430 = vmatpush1.msra.mxu0 0.0
  %1431 = vmatprep.subr.mxu0 0.0
  %1432 = vmatpush1.msra.mxu0 0.0
  %1433 = vmatprep.subr.mxu0 0.0
  %1434 = vmatpush1.msra.mxu0 0.0
  %1435 = vmatprep.subr.mxu0 0.0
  %1436 = vmatpush1.msra.mxu0 0.0
  %1437 = vmatprep.subr.mxu0 0.0
  %1438 = vmatpush1.msra.mxu0 0.0
  %1439 = vmatprep.subr.mxu0 0.0
  %1440 = vmatpush1.msra.mxu0 0.0
  %1441 = vmatprep.subr.mxu0 0.0
  %1442 = vmatpush1.msra.mxu0 0.0
  %1443 = vmatprep.subr.mxu0 0.0
  %1444 = vmatpush1.msra.mxu0 0.0
  %1445 = vmatprep.subr.mxu0 0.0
  %1446 = vmatpush1.msra.mxu0 0.0
  %1447 = vmatprep.subr.mxu0 0.0
  %1448 = vmatpush1.msra.mxu0 0.0
  %1449 = vmatprep.subr.mxu0 0.0
  %1450 = vmatpush1.msra.mxu0 0.0
  %1451 = vmatprep.subr.mxu0 0.0
  %1452 = vmatpush1.msra.mxu0 0.0
  %1453 = vmatprep.subr.mxu0 0.0
  %1454 = vmatpush1.msra.mxu0 0.0
  %1455 = vmatprep.subr.mxu0 0.0
  %1456 = vmatpush1.msra.mxu0 0.0
  %1457 = vmatprep.subr.mxu0 0.0
  %1458 = vmatpush1.msra.mxu0 0.0
  %1459 = vmatprep.subr.mxu0 0.0
  %1460 = vmatpush1.msra.mxu0 0.0
  %1461 = vmatprep.mubr.f32.mxu0 0.0
  %1462 = vmatmul.mubr.f32.gmra.mrb[0].mxu0 %v903
  %v1463 = vpop.f32.mrb[0].mxu0
  %v1464 = vadd.f32 0.0, %v1463
  %v1465 = vpop.f32.mrb[0].mxu0
  %1466 = vmatprep.mubr.f32.mxu0 0.0
  %1467 = vmatmul.mubr.f32.gmra.mrb[0].mxu0 %v906
  %v1468 = vpop.f32.mrb[0].mxu0
  %v1469 = vadd.f32 0.0, %v1468
  %v1470 = vpop.f32.mrb[0].mxu0
  %1471 = vmatprep.mubr.f32.mxu0 0.0
  %1472 = vmatmul.mubr.f32.gmra.mrb[0].mxu0 %v909
  %v1473 = vpop.f32.mrb[0].mxu0
  %v1474 = vadd.f32 0.0, %v1473
  %v1475 = vpop.f32.mrb[0].mxu0
  %1476 = vmatprep.mubr.f32.mxu0 0.0
  %1477 = vmatmul.mubr.f32.gmra.mrb[0].mxu0 %v912
  %v1478 = vpop.f32.mrb[0].mxu0
  %v1479 = vadd.f32 0.0, %v1478
  %v1480 = vpop.f32.mrb[0].mxu0
  %1481 = vmatprep.mubr.f32.mxu0 0.0
  %1482 = vmatmul.mubr.f32.gmra.mrb[0].mxu0 %v915
  %v1483 = vpop.f32.mrb[0].mxu0
  %v1484 = vadd.f32 0.0, %v1483
  %v1485 = vpop.f32.mrb[0].mxu0
  %1486 = vmatprep.mubr.f32.mxu0 0.0
  %1487 = vmatmul.mubr.f32.gmra.mrb[0].mxu0 %v918
  %v1488 = vpop.f32.mrb[0].mxu0
  %v1489 = vadd.f32 0.0, %v1488
  %v1490 = vpop.f32.mrb[0].mxu0
  %1491 = vdwg.mxu0
  %v1493 = vsel %vm1034, %v1395, 0
  %1495 = vmatprep.subr.mxu0 0.0
  %1496 = vmatpush1.msra.mxu0 %v1493
  %1497 = vmatprep.subr.mxu0 0.0
  %1498 = vmatpush1.msra.mxu0 0.0
  %1499 = vmatprep.subr.mxu0 0.0
  %1500 = vmatpush1.msra.mxu0 0.0
  %1501 = vmatprep.subr.mxu0 0.0
  %1502 = vmatpush1.msra.mxu0 0.0
  %1503 = vmatprep.subr.mxu0 0.0
  %1504 = vmatpush1.msra.mxu0 0.0
  %1505 = vmatprep.subr.mxu0 0.0
  %1506 = vmatpush1.msra.mxu0 0.0
  %1507 = vmatprep.subr.mxu0 0.0
  %1508 = vmatpush1.msra.mxu0 0.0
  %1509 = vmatprep.subr.mxu0 0.0
  %1510 = vmatpush1.msra.mxu0 0.0
  %1511 = vmatprep.subr.mxu0 0.0
  %1512 = vmatpush1.msra.mxu0 0.0
  %1513 = vmatprep.subr.mxu0 0.0
  %1514 = vmatpush1.msra.mxu0 0.0
  %1515 = vmatprep.subr.mxu0 0.0
  %1516 = vmatpush1.msra.mxu0 0.0
  %1517 = vmatprep.subr.mxu0 0.0
  %1518 = vmatpush1.msra.mxu0 0.0
  %1519 = vmatprep.subr.mxu0 0.0
  %1520 = vmatpush1.msra.mxu0 0.0
  %1521 = vmatprep.subr.mxu0 0.0
  %1522 = vmatpush1.msra.mxu0 0.0
  %1523 = vmatprep.subr.mxu0 0.0
  %1524 = vmatpush1.msra.mxu0 0.0
  %1525 = vmatprep.subr.mxu0 0.0
  %1526 = vmatpush1.msra.mxu0 0.0
  %1527 = vmatprep.subr.mxu0 0.0
  %1528 = vmatpush1.msra.mxu0 0.0
  %1529 = vmatprep.subr.mxu0 0.0
  %1530 = vmatpush1.msra.mxu0 0.0
  %1531 = vmatprep.subr.mxu0 0.0
  %1532 = vmatpush1.msra.mxu0 0.0
  %1533 = vmatprep.subr.mxu0 0.0
  %1534 = vmatpush1.msra.mxu0 0.0
  %1535 = vmatprep.subr.mxu0 0.0
  %1536 = vmatpush1.msra.mxu0 0.0
  %1537 = vmatprep.subr.mxu0 0.0
  %1538 = vmatpush1.msra.mxu0 0.0
  %1539 = vmatprep.subr.mxu0 0.0
  %1540 = vmatpush1.msra.mxu0 0.0
  %1541 = vmatprep.subr.mxu0 0.0
  %1542 = vmatpush1.msra.mxu0 0.0
  %1543 = vmatprep.subr.mxu0 0.0
  %1544 = vmatpush1.msra.mxu0 0.0
  %1545 = vmatprep.subr.mxu0 0.0
  %1546 = vmatpush1.msra.mxu0 0.0
  %1547 = vmatprep.subr.mxu0 0.0
  %1548 = vmatpush1.msra.mxu0 0.0
  %1549 = vmatprep.subr.mxu0 0.0
  %1550 = vmatpush1.msra.mxu0 0.0
  %1551 = vmatprep.subr.mxu0 0.0
  %1552 = vmatpush1.msra.mxu0 0.0
  %1553 = vmatprep.subr.mxu0 0.0
  %1554 = vmatpush1.msra.mxu0 0.0
  %1555 = vmatprep.subr.mxu0 0.0
  %1556 = vmatpush1.msra.mxu0 0.0
  %1557 = vmatprep.subr.mxu0 0.0
  %1558 = vmatpush1.msra.mxu0 0.0
  %1559 = vmatprep.mubr.f32.mxu0 0.0
  %1560 = vmatmul.mubr.f32.gmra.mrb[0].mxu0 %v1017
  %v1561 = vpop.f32.mrb[0].mxu0
  %v1562 = vadd.f32 %v1464, %v1561
  %v1563 = vpop.f32.mrb[0].mxu0
  %1564 = vmatprep.mubr.f32.mxu0 0.0
  %1565 = vmatmul.mubr.f32.gmra.mrb[0].mxu0 %v1020
  %v1566 = vpop.f32.mrb[0].mxu0
  %v1567 = vadd.f32 %v1469, %v1566
  %v1568 = vpop.f32.mrb[0].mxu0
  %1569 = vmatprep.mubr.f32.mxu0 0.0
  %1570 = vmatmul.mubr.f32.gmra.mrb[0].mxu0 %v1023
  %v1571 = vpop.f32.mrb[0].mxu0
  %v1572 = vadd.f32 %v1474, %v1571
  %v1573 = vpop.f32.mrb[0].mxu0
  %1574 = vmatprep.mubr.f32.mxu0 0.0
  %1575 = vmatmul.mubr.f32.gmra.mrb[0].mxu0 %v1026
  %v1576 = vpop.f32.mrb[0].mxu0
  %v1577 = vadd.f32 %v1479, %v1576
  %v1578 = vpop.f32.mrb[0].mxu0
  %1579 = vmatprep.mubr.f32.mxu0 0.0
  %1580 = vmatmul.mubr.f32.gmra.mrb[0].mxu0 %v1029
  %v1581 = vpop.f32.mrb[0].mxu0
  %v1582 = vadd.f32 %v1484, %v1581
  %v1583 = vpop.f32.mrb[0].mxu0
  %1584 = vmatprep.mubr.f32.mxu0 0.0
  %1585 = vmatmul.mubr.f32.gmra.mrb[0].mxu0 %v1032
  %v1586 = vpop.f32.mrb[0].mxu0
  %v1587 = vadd.f32 %v1489, %v1586
  %v1588 = vpop.f32.mrb[0].mxu0
  %1589 = vdwg.mxu0
  %v1590 = vld [vmem:[%s12] sm:$0x1]
  %v1592 = vlaneseq
  %v1593 = vshrl.u32 %v1592, 7
  %v1594 = vsub.s32 0, %v1593
  %v1595 = vrot.slane %v1590, %v1594
  %v1597 = vadd.f32 %v1562, %v1595
  %v1598 = vadd.f32 %v1567, %v1595
  %v1599 = vadd.f32 %v1572, %v1595
  %v1600 = vadd.f32 %v1577, %v1595
  %v1601 = vadd.f32 %v1582, %v1595
  %v1602 = vadd.f32 %v1587, %v1595
  %v1603 = vtanh.pop %v1597
  %v1604 = vtanh.pop %v1598
  %v1605 = vtanh.pop %v1599
  %v1606 = vtanh.pop %v1600
  %v1607 = vtanh.pop %v1601
  %v1608 = vtanh.pop %v1602
  %v1609 = vld [vmem:[%s13] sm:$0xff]
  %v1610 = vld [vmem:[%s13 + $0x8] sm:$0xff]
  %v1611 = vld [vmem:[%s13 + $0x10] sm:$0xff]
  %v1612 = vld [vmem:[%s13 + $0x18] sm:$0xff]
  %v1613 = vld [vmem:[%s14] sm:$0x1]
  %v1615 = vlaneseq
  %v1616 = vshrl.u32 %v1615, 7
  %v1617 = vsub.s32 0, %v1616
  %v1618 = vrot.slane %v1613, %v1617
  %v1621 = vsel %vm1163, %v1603, 0
  %v1624 = vsel %vm1163, %v1604, 0
  %v1627 = vsel %vm1163, %v1605, 0
  %v1630 = vsel %vm1163, %v1606, 0
  %v1633 = vsel %vm1163, %v1607, 0
  %v1636 = vsel %vm1163, %v1608, 0
  %1638 = vmatprep.subr.mxu0 0.0
  %1639 = vmatpush1.msra.mxu0 %v1609
  %1640 = vmatprep.subr.mxu0 0.0
  %1641 = vmatpush1.msra.mxu0 %v1610
  %1642 = vmatprep.subr.mxu0 0.0
  %1643 = vmatpush1.msra.mxu0 %v1611
  %1644 = vmatprep.subr.mxu0 0.0
  %1645 = vmatpush1.msra.mxu0 %v1612
  %1646 = vmatprep.subr.mxu0 0.0
  %1647 = vmatpush1.msra.mxu0 0.0
  %1648 = vmatprep.subr.mxu0 0.0
  %1649 = vmatpush1.msra.mxu0 0.0
  %1650 = vmatprep.subr.mxu0 0.0
  %1651 = vmatpush1.msra.mxu0 0.0
  %1652 = vmatprep.subr.mxu0 0.0
  %1653 = vmatpush1.msra.mxu0 0.0
  %1654 = vmatprep.subr.mxu0 0.0
  %1655 = vmatpush1.msra.mxu0 0.0
  %1656 = vmatprep.subr.mxu0 0.0
  %1657 = vmatpush1.msra.mxu0 0.0
  %1658 = vmatprep.subr.mxu0 0.0
  %1659 = vmatpush1.msra.mxu0 0.0
  %1660 = vmatprep.subr.mxu0 0.0
  %1661 = vmatpush1.msra.mxu0 0.0
  %1662 = vmatprep.subr.mxu0 0.0
  %1663 = vmatpush1.msra.mxu0 0.0
  %1664 = vmatprep.subr.mxu0 0.0
  %1665 = vmatpush1.msra.mxu0 0.0
  %1666 = vmatprep.subr.mxu0 0.0
  %1667 = vmatpush1.msra.mxu0 0.0
  %1668 = vmatprep.subr.mxu0 0.0
  %1669 = vmatpush1.msra.mxu0 0.0
  %1670 = vmatprep.subr.mxu0 0.0
  %1671 = vmatpush1.msra.mxu0 0.0
  %1672 = vmatprep.subr.mxu0 0.0
  %1673 = vmatpush1.msra.mxu0 0.0
  %1674 = vmatprep.subr.mxu0 0.0
  %1675 = vmatpush1.msra.mxu0 0.0
  %1676 = vmatprep.subr.mxu0 0.0
  %1677 = vmatpush1.msra.mxu0 0.0
  %1678 = vmatprep.subr.mxu0 0.0
  %1679 = vmatpush1.msra.mxu0 0.0
  %1680 = vmatprep.subr.mxu0 0.0
  %1681 = vmatpush1.msra.mxu0 0.0
  %1682 = vmatprep.subr.mxu0 0.0
  %1683 = vmatpush1.msra.mxu0 0.0
  %1684 = vmatprep.subr.mxu0 0.0
  %1685 = vmatpush1.msra.mxu0 0.0
  %1686 = vmatprep.subr.mxu0 0.0
  %1687 = vmatpush1.msra.mxu0 0.0
  %1688 = vmatprep.subr.mxu0 0.0
  %1689 = vmatpush1.msra.mxu0 0.0
  %1690 = vmatprep.subr.mxu0 0.0
  %1691 = vmatpush1.msra.mxu0 0.0
  %1692 = vmatprep.subr.mxu0 0.0
  %1693 = vmatpush1.msra.mxu0 0.0
  %1694 = vmatprep.subr.mxu0 0.0
  %1695 = vmatpush1.msra.mxu0 0.0
  %1696 = vmatprep.subr.mxu0 0.0
  %1697 = vmatpush1.msra.mxu0 0.0
  %1698 = vmatprep.subr.mxu0 0.0
  %1699 = vmatpush1.msra.mxu0 0.0
  %1700 = vmatprep.subr.mxu0 0.0
  %1701 = vmatpush1.msra.mxu0 0.0
  %1702 = vmatprep.mubr.f32.mxu0 0.0
  %1703 = vmatmul.mubr.f32.gmra.mrb[0].mxu0 %v1621
  %v1704 = vpop.f32.mrb[0].mxu0
  %v1705 = vadd.f32 %v1618, %v1704
  %v1706 = vpop.f32.mrb[0].mxu0
  %1707 = vmatprep.mubr.f32.mxu0 0.0
  %1708 = vmatmul.mubr.f32.gmra.mrb[0].mxu0 %v1624
  %v1709 = vpop.f32.mrb[0].mxu0
  %v1710 = vadd.f32 %v1618, %v1709
  %v1711 = vpop.f32.mrb[0].mxu0
  %1712 = vmatprep.mubr.f32.mxu0 0.0
  %1713 = vmatmul.mubr.f32.gmra.mrb[0].mxu0 %v1627
  %v1714 = vpop.f32.mrb[0].mxu0
  %v1715 = vadd.f32 %v1618, %v1714
  %v1716 = vpop.f32.mrb[0].mxu0
  %1717 = vmatprep.mubr.f32.mxu0 0.0
  %1718 = vmatmul.mubr.f32.gmra.mrb[0].mxu0 %v1630
  %v1719 = vpop.f32.mrb[0].mxu0
  %v1720 = vadd.f32 %v1618, %v1719
  %v1721 = vpop.f32.mrb[0].mxu0
  %1722 = vmatprep.mubr.f32.mxu0 0.0
  %1723 = vmatmul.mubr.f32.gmra.mrb[0].mxu0 %v1633
  %v1724 = vpop.f32.mrb[0].mxu0
  %v1725 = vadd.f32 %v1618, %v1724
  %v1726 = vpop.f32.mrb[0].mxu0
  %1727 = vmatprep.mubr.f32.mxu0 0.0
  %1728 = vmatmul.mubr.f32.gmra.mrb[0].mxu0 %v1636
  %v1729 = vpop.f32.mrb[0].mxu0
  %v1730 = vadd.f32 %v1618, %v1729
  %v1731 = vpop.f32.mrb[0].mxu0
  %1732 = vdwg.mxu0
  %v1733 = vmul.f32 %v1705, %v860
  %v1734 = vmul.f32 %v1710, %v865
  %v1735 = vmul.f32 %v1715, %v870
  %v1736 = vmul.f32 %v1720, %v875
  %v1737 = vmul.f32 %v1725, %v880
  %v1738 = vmul.f32 %v1730, %v885
  %1739 = vst.msk [vmem:[%s16] sm:$0xff] %vm901, %v1733
  %1740 = vst.msk [vmem:[%s16 + $0x8] sm:$0xff] %vm901, %v1734
  %1741 = vst.msk [vmem:[%s16 + $0x10] sm:$0xff] %vm901, %v1735
  %1742 = vst.msk [vmem:[%s16 + $0x18] sm:$0xff] %vm901, %v1736
  %1743 = vst.msk [vmem:[%s16 + $0x20] sm:$0xff] %vm901, %v1737
  %1744 = vst.msk [vmem:[%s16 + $0x28] sm:$0xff] %vm901, %v1738
  // Predicated region
  $region62: #{baseline_forward.9} parent=0 // pred_check
    _
  $region63: #{baseline_forward.9} parent=0 // pred_check_branch
    %1746 = sbr.rel (0) target = $region65
  $region64: #{baseline_forward.9} parent=0 // pred_region
    _
  $region65: #{baseline_forward.9} parent=0 // pred_fallthru
    _
  // Predicated region
  $region66: #{baseline_forward.9} parent=0 // pred_check
    _
  $region67: #{baseline_forward.9} parent=0 // pred_check_branch
    %1748 = sbr.rel (0) target = $region69
  $region68: #{baseline_forward.9} parent=0 // pred_region
    _
  $region69: #{baseline_forward.9} parent=0 // pred_fallthru
    _
  // Predicated region
  $region70: #{baseline_forward.9} parent=0 // pred_check
    _
  $region71: #{baseline_forward.9} parent=0 // pred_check_branch
    %1750 = sbr.rel (0) target = $region73
  $region72: #{baseline_forward.9} parent=0 // pred_region
    _
  $region73: #{baseline_forward.9} parent=0 // pred_fallthru
    _
  // Predicated region
  $region74: #{baseline_forward.9} parent=0 // pred_check
    _
  $region75: #{baseline_forward.9} parent=0 // pred_check_branch
    %1752 = sbr.rel (0) target = $region77
  $region76: #{baseline_forward.9} parent=0 // pred_region
    _
  $region77: #{baseline_forward.9} parent=0 // pred_fallthru
    _

// kernel: baseline_forward.13
$region0: #{baseline_forward.13}
  #allocation0 [shape = 'u32[]', space=smem, size = 0x4, offset = 0x4, fixed_abs, tag = 'smem constant byte address 0x4 - core index']
  #allocation1 [shape = 'u32[144,128]{1,0:T(1,128)}', space=vmem, size = 0x12000, scoped, tag = 'internal scratch']
  %s0 = inlined_call_operand.vmem [shape: s32[48,1], index: 0, kind: input, shape index: {}]
  %s1 = inlined_call_operand.vmem [shape: f32[8,32], index: 1, kind: input, shape index: {}]
  %s2 = inlined_call_operand.vmem [shape: f32[48,32], index: 2, kind: input, shape index: {}]
  %s3 = inlined_call_operand.vmem [shape: f32[32,32], index: 3, kind: input, shape index: {}]
  %s4 = inlined_call_operand.vmem [shape: f32[32,32], index: 4, kind: input, shape index: {}]
  %s5 = inlined_call_operand.vmem [shape: f32[1,32], index: 5, kind: input, shape index: {}]
  %s6 = inlined_call_operand.vmem [shape: f32[32,32], index: 6, kind: input, shape index: {}]
  %s7 = inlined_call_operand.vmem [shape: f32[1,32], index: 7, kind: input, shape index: {}]
  %s8 = inlined_call_operand.vmem [shape: f32[48,32], index: 8, kind: output, shape index: {}]
  %s9 = sld [smem:[#allocation0]]
  $region42: #{baseline_forward.13} parent=0
    _
  %s11 = ssub.s32 1, %s9
  %s12 = scalar_select 0, %s11, %s9
  // Predicated region
  $region2: #{baseline_forward.13} parent=0 // pred_check
    _
  $region3: #{baseline_forward.13} parent=0 // pred_check_branch
    %14 = sbr.rel (0) target = $region5
  $region4: #{baseline_forward.13} parent=0 // pred_region
    _
  $region5: #{baseline_forward.13} parent=0 // pred_fallthru
    _
  // Predicated region
  $region6: #{baseline_forward.13} parent=0 // pred_check
    _
  $region7: #{baseline_forward.13} parent=0 // pred_check_branch
    %16 = sbr.rel (0) target = $region9
  $region8: #{baseline_forward.13} parent=0 // pred_region
    _
  $region9: #{baseline_forward.13} parent=0 // pred_fallthru
    _
  // Predicated region
  $region10: #{baseline_forward.13} parent=0 // pred_check
    _
  $region11: #{baseline_forward.13} parent=0 // pred_check_branch
    %18 = sbr.rel (0) target = $region13
  $region12: #{baseline_forward.13} parent=0 // pred_region
    _
  $region13: #{baseline_forward.13} parent=0 // pred_fallthru
    _
  // Predicated region
  $region14: #{baseline_forward.13} parent=0 // pred_check
    _
  $region15: #{baseline_forward.13} parent=0 // pred_check_branch
    %20 = sbr.rel (0) target = $region17
  $region16: #{baseline_forward.13} parent=0 // pred_region
    _
  $region17: #{baseline_forward.13} parent=0 // pred_fallthru
    _
  // Predicated region
  $region18: #{baseline_forward.13} parent=0 // pred_check
    _
  $region19: #{baseline_forward.13} parent=0 // pred_check_branch
    %22 = sbr.rel (0) target = $region21
  $region20: #{baseline_forward.13} parent=0 // pred_region
    _
  $region21: #{baseline_forward.13} parent=0 // pred_fallthru
    _
  // Predicated region
  $region22: #{baseline_forward.13} parent=0 // pred_check
    _
  $region23: #{baseline_forward.13} parent=0 // pred_check_branch
    %24 = sbr.rel (0) target = $region25
  $region24: #{baseline_forward.13} parent=0 // pred_region
    _
  $region25: #{baseline_forward.13} parent=0 // pred_fallthru
    _
  // Predicated region
  $region26: #{baseline_forward.13} parent=0 // pred_check
    _
  $region27: #{baseline_forward.13} parent=0 // pred_check_branch
    %26 = sbr.rel (0) target = $region29
  $region28: #{baseline_forward.13} parent=0 // pred_region
    _
  $region29: #{baseline_forward.13} parent=0 // pred_fallthru
    _
  // Predicated region
  $region30: #{baseline_forward.13} parent=0 // pred_check
    _
  $region31: #{baseline_forward.13} parent=0 // pred_check_branch
    %28 = sbr.rel (0) target = $region33
  $region32: #{baseline_forward.13} parent=0 // pred_region
    _
  $region33: #{baseline_forward.13} parent=0 // pred_fallthru
    _
  %v29 = vlaneseq
  %v30 = vand.u32 %v29, 127
  %v31 = vld [vmem:[%s0] sm:$0xff]
  %v32 = vld [vmem:[%s0 + $0x8] sm:$0xff]
  %v33 = vld [vmem:[%s0 + $0x10] sm:$0xff]
  %v34 = vld [vmem:[%s0 + $0x18] sm:$0xff]
  %v35 = vld [vmem:[%s0 + $0x20] sm:$0xff]
  %v36 = vld [vmem:[%s0 + $0x28] sm:$0xff]
  %37 = vset.pattern.permute.xlu0 0
  %38 = vperm.xlu0 %37, %v31
  %v39 = vpop.permute.xlu0 %38
  %40 = vset.pattern.permute.xlu0 0
  %41 = vperm.xlu0 %40, %v32
  %v42 = vpop.permute.xlu0 %41
  %43 = vset.pattern.permute.xlu0 0
  %44 = vperm.xlu0 %43, %v33
  %v45 = vpop.permute.xlu0 %44
  %46 = vset.pattern.permute.xlu0 0
  %47 = vperm.xlu0 %46, %v34
  %v48 = vpop.permute.xlu0 %47
  %49 = vset.pattern.permute.xlu0 0
  %50 = vperm.xlu0 %49, %v35
  %v51 = vpop.permute.xlu0 %50
  %52 = vset.pattern.permute.xlu0 0
  %53 = vperm.xlu0 %52, %v36
  %v54 = vpop.permute.xlu0 %53
  %vm55 = vcmp.eq.s32.totalorder %v30, %v39
  %vm56 = vcmp.eq.s32.totalorder %v30, %v42
  %vm57 = vcmp.eq.s32.totalorder %v30, %v45
  %vm58 = vcmp.eq.s32.totalorder %v30, %v48
  %vm59 = vcmp.eq.s32.totalorder %v30, %v51
  %vm60 = vcmp.eq.s32.totalorder %v30, %v54
  %v61 = vsel %vm55, 1, 0
  %v62 = vsel %vm56, 1, 0
  %v63 = vsel %vm57, 1, 0
  %v64 = vsel %vm58, 1, 0
  %v65 = vsel %vm59, 1, 0
  %v66 = vsel %vm60, 1, 0
  %v67 = vcvt.s32.f32 %v61
  %v68 = vcvt.s32.f32 %v62
  %v69 = vcvt.s32.f32 %v63
  %v70 = vcvt.s32.f32 %v64
  %v71 = vcvt.s32.f32 %v65
  %v72 = vcvt.s32.f32 %v66
  %v73 = vld [vmem:[%s1] sm:$0xff]
  %vm74 = vcmask 64512
  %v76 = vsel %vm74, %v67, 0
  %v79 = vsel %vm74, %v68, 0
  %v82 = vsel %vm74, %v69, 0
  %v85 = vsel %vm74, %v70, 0
  %v88 = vsel %vm74, %v71, 0
  %v91 = vsel %vm74, %v72, 0
  %93 = vmatprep.subr.mxu0 0.0
  %94 = vmatpush1.msra.mxu0 %v73
  %95 = vmatprep.subr.mxu0 0.0
  %96 = vmatpush1.msra.mxu0 0.0
  %97 = vmatprep.subr.mxu0 0.0
  %98 = vmatpush1.msra.mxu0 0.0
  %99 = vmatprep.subr.mxu0 0.0
  %100 = vmatpush1.msra.mxu0 0.0
  %101 = vmatprep.subr.mxu0 0.0
  %102 = vmatpush1.msra.mxu0 0.0
  %103 = vmatprep.subr.mxu0 0.0
  %104 = vmatpush1.msra.mxu0 0.0
  %105 = vmatprep.subr.mxu0 0.0
  %106 = vmatpush1.msra.mxu0 0.0
  %107 = vmatprep.subr.mxu0 0.0
  %108 = vmatpush1.msra.mxu0 0.0
  %109 = vmatprep.subr.mxu0 0.0
  %110 = vmatpush1.msra.mxu0 0.0
  %111 = vmatprep.subr.mxu0 0.0
  %112 = vmatpush1.msra.mxu0 0.0
  %113 = vmatprep.subr.mxu0 0.0
  %114 = vmatpush1.msra.mxu0 0.0
  %115 = vmatprep.subr.mxu0 0.0
  %116 = vmatpush1.msra.mxu0 0.0
  %117 = vmatprep.subr.mxu0 0.0
  %118 = vmatpush1.msra.mxu0 0.0
  %119 = vmatprep.subr.mxu0 0.0
  %120 = vmatpush1.msra.mxu0 0.0
  %121 = vmatprep.subr.mxu0 0.0
  %122 = vmatpush1.msra.mxu0 0.0
  %123 = vmatprep.subr.mxu0 0.0
  %124 = vmatpush1.msra.mxu0 0.0
  %125 = vmatprep.subr.mxu0 0.0
  %126 = vmatpush1.msra.mxu0 0.0
  %127 = vmatprep.subr.mxu0 0.0
  %128 = vmatpush1.msra.mxu0 0.0
  %129 = vmatprep.subr.mxu0 0.0
  %130 = vmatpush1.msra.mxu0 0.0
  %131 = vmatprep.subr.mxu0 0.0
  %132 = vmatpush1.msra.mxu0 0.0
  %133 = vmatprep.subr.mxu0 0.0
  %134 = vmatpush1.msra.mxu0 0.0
  %135 = vmatprep.subr.mxu0 0.0
  %136 = vmatpush1.msra.mxu0 0.0
  %137 = vmatprep.subr.mxu0 0.0
  %138 = vmatpush1.msra.mxu0 0.0
  %139 = vmatprep.subr.mxu0 0.0
  %140 = vmatpush1.msra.mxu0 0.0
  %141 = vmatprep.subr.mxu0 0.0
  %142 = vmatpush1.msra.mxu0 0.0
  %143 = vmatprep.subr.mxu0 0.0
  %144 = vmatpush1.msra.mxu0 0.0
  %145 = vmatprep.subr.mxu0 0.0
  %146 = vmatpush1.msra.mxu0 0.0
  %147 = vmatprep.subr.mxu0 0.0
  %148 = vmatpush1.msra.mxu0 0.0
  %149 = vmatprep.subr.mxu0 0.0
  %150 = vmatpush1.msra.mxu0 0.0
  %151 = vmatprep.subr.mxu0 0.0
  %152 = vmatpush1.msra.mxu0 0.0
  %153 = vmatprep.subr.mxu0 0.0
  %154 = vmatpush1.msra.mxu0 0.0
  %155 = vmatprep.subr.mxu0 0.0
  %156 = vmatpush1.msra.mxu0 0.0
  %157 = vmatprep.mubr.f32.mxu0 0.0
  %158 = vmatmul.mubr.f32.gmra.mrb[0].mxu0 %v76
  %v159 = vpop.f32.mrb[0].mxu0
  %v160 = vadd.f32 0.0, %v159
  %v161 = vpop.f32.mrb[0].mxu0
  %162 = vmatprep.mubr.f32.mxu0 0.0
  %163 = vmatmul.mubr.f32.gmra.mrb[0].mxu0 %v79
  %v164 = vpop.f32.mrb[0].mxu0
  %v165 = vadd.f32 0.0, %v164
  %v166 = vpop.f32.mrb[0].mxu0
  %167 = vmatprep.mubr.f32.mxu0 0.0
  %168 = vmatmul.mubr.f32.gmra.mrb[0].mxu0 %v82
  %v169 = vpop.f32.mrb[0].mxu0
  %v170 = vadd.f32 0.0, %v169
  %v171 = vpop.f32.mrb[0].mxu0
  %172 = vmatprep.mubr.f32.mxu0 0.0
  %173 = vmatmul.mubr.f32.gmra.mrb[0].mxu0 %v85
  %v174 = vpop.f32.mrb[0].mxu0
  %v175 = vadd.f32 0.0, %v174
  %v176 = vpop.f32.mrb[0].mxu0
  %177 = vmatprep.mubr.f32.mxu0 0.0
  %178 = vmatmul.mubr.f32.gmra.mrb[0].mxu0 %v88
  %v179 = vpop.f32.mrb[0].mxu0
  %v180 = vadd.f32 0.0, %v179
  %v181 = vpop.f32.mrb[0].mxu0
  %182 = vmatprep.mubr.f32.mxu0 0.0
  %183 = vmatmul.mubr.f32.gmra.mrb[0].mxu0 %v91
  %v184 = vpop.f32.mrb[0].mxu0
  %v185 = vadd.f32 0.0, %v184
  %v186 = vpop.f32.mrb[0].mxu0
  %187 = vdwg.mxu0
  %v188 = vld [vmem:[%s3] sm:$0xff]
  %v189 = vld [vmem:[%s3 + $0x8] sm:$0xff]
  %v190 = vld [vmem:[%s3 + $0x10] sm:$0xff]
  %v191 = vld [vmem:[%s3 + $0x18] sm:$0xff]
  %v192 = vld [vmem:[%s2] sm:$0xff]
  %v193 = vld [vmem:[%s2 + $0x8] sm:$0xff]
  %v194 = vld [vmem:[%s2 + $0x10] sm:$0xff]
  %v195 = vld [vmem:[%s2 + $0x18] sm:$0xff]
  %v196 = vld [vmem:[%s2 + $0x20] sm:$0xff]
  %v197 = vld [vmem:[%s2 + $0x28] sm:$0xff]
  %v198 = vld [vmem:[%s4] sm:$0xff]
  %v199 = vld [vmem:[%s4 + $0x8] sm:$0xff]
  %v200 = vld [vmem:[%s4 + $0x10] sm:$0xff]
  %v201 = vld [vmem:[%s4 + $0x18] sm:$0xff]
  %vm202 = vcmask 261120
  %v204 = vsel %vm202, %v192, 0
  %v207 = vsel %vm202, %v193, 0
  %v210 = vsel %vm202, %v194, 0
  %v213 = vsel %vm202, %v195, 0
  %v216 = vsel %vm202, %v196, 0
  %v219 = vsel %vm202, %v197, 0
  %221 = vmatprep.subr.mxu0 0.0
  %222 = vmatpush1.msra.mxu0 %v198
  %223 = vmatprep.subr.mxu0 0.0
  %224 = vmatpush1.msra.mxu0 %v199
  %225 = vmatprep.subr.mxu0 0.0
  %226 = vmatpush1.msra.mxu0 %v200
  %227 = vmatprep.subr.mxu0 0.0
  %228 = vmatpush1.msra.mxu0 %v201
  %229 = vmatprep.subr.mxu0 0.0
  %230 = vmatpush1.msra.mxu0 0.0
  %231 = vmatprep.subr.mxu0 0.0
  %232 = vmatpush1.msra.mxu0 0.0
  %233 = vmatprep.subr.mxu0 0.0
  %234 = vmatpush1.msra.mxu0 0.0
  %235 = vmatprep.subr.mxu0 0.0
  %236 = vmatpush1.msra.mxu0 0.0
  %237 = vmatprep.subr.mxu0 0.0
  %238 = vmatpush1.msra.mxu0 0.0
  %239 = vmatprep.subr.mxu0 0.0
  %240 = vmatpush1.msra.mxu0 0.0
  %241 = vmatprep.subr.mxu0 0.0
  %242 = vmatpush1.msra.mxu0 0.0
  %243 = vmatprep.subr.mxu0 0.0
  %244 = vmatpush1.msra.mxu0 0.0
  %245 = vmatprep.subr.mxu0 0.0
  %246 = vmatpush1.msra.mxu0 0.0
  %247 = vmatprep.subr.mxu0 0.0
  %248 = vmatpush1.msra.mxu0 0.0
  %249 = vmatprep.subr.mxu0 0.0
  %250 = vmatpush1.msra.mxu0 0.0
  %251 = vmatprep.subr.mxu0 0.0
  %252 = vmatpush1.msra.mxu0 0.0
  %253 = vmatprep.subr.mxu0 0.0
  %254 = vmatpush1.msra.mxu0 0.0
  %255 = vmatprep.subr.mxu0 0.0
  %256 = vmatpush1.msra.mxu0 0.0
  %257 = vmatprep.subr.mxu0 0.0
  %258 = vmatpush1.msra.mxu0 0.0
  %259 = vmatprep.subr.mxu0 0.0
  %260 = vmatpush1.msra.mxu0 0.0
  %261 = vmatprep.subr.mxu0 0.0
  %262 = vmatpush1.msra.mxu0 0.0
  %263 = vmatprep.subr.mxu0 0.0
  %264 = vmatpush1.msra.mxu0 0.0
  %265 = vmatprep.subr.mxu0 0.0
  %266 = vmatpush1.msra.mxu0 0.0
  %267 = vmatprep.subr.mxu0 0.0
  %268 = vmatpush1.msra.mxu0 0.0
  %269 = vmatprep.subr.mxu0 0.0
  %270 = vmatpush1.msra.mxu0 0.0
  %271 = vmatprep.subr.mxu0 0.0
  %272 = vmatpush1.msra.mxu0 0.0
  %273 = vmatprep.subr.mxu0 0.0
  %274 = vmatpush1.msra.mxu0 0.0
  %275 = vmatprep.subr.mxu0 0.0
  %276 = vmatpush1.msra.mxu0 0.0
  %277 = vmatprep.subr.mxu0 0.0
  %278 = vmatpush1.msra.mxu0 0.0
  %279 = vmatprep.subr.mxu0 0.0
  %280 = vmatpush1.msra.mxu0 0.0
  %281 = vmatprep.subr.mxu0 0.0
  %282 = vmatpush1.msra.mxu0 0.0
  %283 = vmatprep.subr.mxu0 0.0
  %284 = vmatpush1.msra.mxu0 0.0
  %285 = vmatprep.mubr.f32.mxu0 0.0
  %286 = vmatmul.mubr.f32.gmra.mrb[0].mxu0 %v204
  %v287 = vpop.f32.mrb[0].mxu0
  %v288 = vadd.f32 0.0, %v287
  %v289 = vpop.f32.mrb[0].mxu0
  %290 = vmatprep.mubr.f32.mxu0 0.0
  %291 = vmatmul.mubr.f32.gmra.mrb[0].mxu0 %v207
  %v292 = vpop.f32.mrb[0].mxu0
  %v293 = vadd.f32 0.0, %v292
  %v294 = vpop.f32.mrb[0].mxu0
  %295 = vmatprep.mubr.f32.mxu0 0.0
  %296 = vmatmul.mubr.f32.gmra.mrb[0].mxu0 %v210
  %v297 = vpop.f32.mrb[0].mxu0
  %v298 = vadd.f32 0.0, %v297
  %v299 = vpop.f32.mrb[0].mxu0
  %300 = vmatprep.mubr.f32.mxu0 0.0
  %301 = vmatmul.mubr.f32.gmra.mrb[0].mxu0 %v213
  %v302 = vpop.f32.mrb[0].mxu0
  %v303 = vadd.f32 0.0, %v302
  %v304 = vpop.f32.mrb[0].mxu0
  %305 = vmatprep.mubr.f32.mxu0 0.0
  %306 = vmatmul.mubr.f32.gmra.mrb[0].mxu0 %v216
  %v307 = vpop.f32.mrb[0].mxu0
  %v308 = vadd.f32 0.0, %v307
  %v309 = vpop.f32.mrb[0].mxu0
  %310 = vmatprep.mubr.f32.mxu0 0.0
  %311 = vmatmul.mubr.f32.gmra.mrb[0].mxu0 %v219
  %v312 = vpop.f32.mrb[0].mxu0
  %v313 = vadd.f32 0.0, %v312
  %v314 = vpop.f32.mrb[0].mxu0
  %315 = vdwg.mxu0
  %v317 = vsel %vm202, %v160, 0
  %v320 = vsel %vm202, %v165, 0
  %v323 = vsel %vm202, %v170, 0
  %v326 = vsel %vm202, %v175, 0
  %v329 = vsel %vm202, %v180, 0
  %v332 = vsel %vm202, %v185, 0
  %334 = vmatprep.subr.mxu0 0.0
  %335 = vmatpush1.msra.mxu0 %v188
  %336 = vmatprep.subr.mxu0 0.0
  %337 = vmatpush1.msra.mxu0 %v189
  %338 = vmatprep.subr.mxu0 0.0
  %339 = vmatpush1.msra.mxu0 %v190
  %340 = vmatprep.subr.mxu0 0.0
  %341 = vmatpush1.msra.mxu0 %v191
  %342 = vmatprep.subr.mxu0 0.0
  %343 = vmatpush1.msra.mxu0 0.0
  %344 = vmatprep.subr.mxu0 0.0
  %345 = vmatpush1.msra.mxu0 0.0
  %346 = vmatprep.subr.mxu0 0.0
  %347 = vmatpush1.msra.mxu0 0.0
  %348 = vmatprep.subr.mxu0 0.0
  %349 = vmatpush1.msra.mxu0 0.0
  %350 = vmatprep.subr.mxu0 0.0
  %351 = vmatpush1.msra.mxu0 0.0
  %352 = vmatprep.subr.mxu0 0.0
  %353 = vmatpush1.msra.mxu0 0.0
  %354 = vmatprep.subr.mxu0 0.0
  %355 = vmatpush1.msra.mxu0 0.0
  %356 = vmatprep.subr.mxu0 0.0
  %357 = vmatpush1.msra.mxu0 0.0
  %358 = vmatprep.subr.mxu0 0.0
  %359 = vmatpush1.msra.mxu0 0.0
  %360 = vmatprep.subr.mxu0 0.0
  %361 = vmatpush1.msra.mxu0 0.0
  %362 = vmatprep.subr.mxu0 0.0
  %363 = vmatpush1.msra.mxu0 0.0
  %364 = vmatprep.subr.mxu0 0.0
  %365 = vmatpush1.msra.mxu0 0.0
  %366 = vmatprep.subr.mxu0 0.0
  %367 = vmatpush1.msra.mxu0 0.0
  %368 = vmatprep.subr.mxu0 0.0
  %369 = vmatpush1.msra.mxu0 0.0
  %370 = vmatprep.subr.mxu0 0.0
  %371 = vmatpush1.msra.mxu0 0.0
  %372 = vmatprep.subr.mxu0 0.0
  %373 = vmatpush1.msra.mxu0 0.0
  %374 = vmatprep.subr.mxu0 0.0
  %375 = vmatpush1.msra.mxu0 0.0
  %376 = vmatprep.subr.mxu0 0.0
  %377 = vmatpush1.msra.mxu0 0.0
  %378 = vmatprep.subr.mxu0 0.0
  %379 = vmatpush1.msra.mxu0 0.0
  %380 = vmatprep.subr.mxu0 0.0
  %381 = vmatpush1.msra.mxu0 0.0
  %382 = vmatprep.subr.mxu0 0.0
  %383 = vmatpush1.msra.mxu0 0.0
  %384 = vmatprep.subr.mxu0 0.0
  %385 = vmatpush1.msra.mxu0 0.0
  %386 = vmatprep.subr.mxu0 0.0
  %387 = vmatpush1.msra.mxu0 0.0
  %388 = vmatprep.subr.mxu0 0.0
  %389 = vmatpush1.msra.mxu0 0.0
  %390 = vmatprep.subr.mxu0 0.0
  %391 = vmatpush1.msra.mxu0 0.0
  %392 = vmatprep.subr.mxu0 0.0
  %393 = vmatpush1.msra.mxu0 0.0
  %394 = vmatprep.subr.mxu0 0.0
  %395 = vmatpush1.msra.mxu0 0.0
  %396 = vmatprep.subr.mxu0 0.0
  %397 = vmatpush1.msra.mxu0 0.0
  %398 = vmatprep.mubr.f32.mxu0 0.0
  %399 = vmatmul.mubr.f32.gmra.mrb[0].mxu0 %v317
  %v400 = vpop.f32.mrb[0].mxu0
  %v401 = vadd.f32 %v288, %v400
  %v402 = vpop.f32.mrb[0].mxu0
  %403 = vmatprep.mubr.f32.mxu0 0.0
  %404 = vmatmul.mubr.f32.gmra.mrb[0].mxu0 %v320
  %v405 = vpop.f32.mrb[0].mxu0
  %v406 = vadd.f32 %v293, %v405
  %v407 = vpop.f32.mrb[0].mxu0
  %408 = vmatprep.mubr.f32.mxu0 0.0
  %409 = vmatmul.mubr.f32.gmra.mrb[0].mxu0 %v323
  %v410 = vpop.f32.mrb[0].mxu0
  %v411 = vadd.f32 %v298, %v410
  %v412 = vpop.f32.mrb[0].mxu0
  %413 = vmatprep.mubr.f32.mxu0 0.0
  %414 = vmatmul.mubr.f32.gmra.mrb[0].mxu0 %v326
  %v415 = vpop.f32.mrb[0].mxu0
  %v416 = vadd.f32 %v303, %v415
  %v417 = vpop.f32.mrb[0].mxu0
  %418 = vmatprep.mubr.f32.mxu0 0.0
  %419 = vmatmul.mubr.f32.gmra.mrb[0].mxu0 %v329
  %v420 = vpop.f32.mrb[0].mxu0
  %v421 = vadd.f32 %v308, %v420
  %v422 = vpop.f32.mrb[0].mxu0
  %423 = vmatprep.mubr.f32.mxu0 0.0
  %424 = vmatmul.mubr.f32.gmra.mrb[0].mxu0 %v332
  %v425 = vpop.f32.mrb[0].mxu0
  %v426 = vadd.f32 %v313, %v425
  %v427 = vpop.f32.mrb[0].mxu0
  %428 = vdwg.mxu0
  %v429 = vld [vmem:[%s5] sm:$0x1]
  %v431 = vlaneseq
  %v432 = vshrl.u32 %v431, 7
  %v433 = vsub.s32 0, %v432
  %v434 = vrot.slane %v429, %v433
  %v436 = vadd.f32 %v401, %v434
  %v437 = vadd.f32 %v406, %v434
  %v438 = vadd.f32 %v411, %v434
  %v439 = vadd.f32 %v416, %v434
  %v440 = vadd.f32 %v421, %v434
  %v441 = vadd.f32 %v426, %v434
  %v442 = vtanh.pop %v436
  %v443 = vtanh.pop %v437
  %v444 = vtanh.pop %v438
  %v445 = vtanh.pop %v439
  %v446 = vtanh.pop %v440
  %v447 = vtanh.pop %v441
  %v448 = vld [vmem:[%s6] sm:$0xff]
  %v449 = vld [vmem:[%s6 + $0x8] sm:$0xff]
  %v450 = vld [vmem:[%s6 + $0x10] sm:$0xff]
  %v451 = vld [vmem:[%s6 + $0x18] sm:$0xff]
  %v452 = vld [vmem:[%s7] sm:$0x1]
  %v454 = vlaneseq
  %v455 = vshrl.u32 %v454, 7
  %v456 = vsub.s32 0, %v455
  %v457 = vrot.slane %v452, %v456
  %v460 = vsel %vm202, %v442, 0
  %v463 = vsel %vm202, %v443, 0
  %v466 = vsel %vm202, %v444, 0
  %v469 = vsel %vm202, %v445, 0
  %v472 = vsel %vm202, %v446, 0
  %v475 = vsel %vm202, %v447, 0
  %477 = vmatprep.subr.mxu0 0.0
  %478 = vmatpush1.msra.mxu0 %v448
  %479 = vmatprep.subr.mxu0 0.0
  %480 = vmatpush1.msra.mxu0 %v449
  %481 = vmatprep.subr.mxu0 0.0
  %482 = vmatpush1.msra.mxu0 %v450
  %483 = vmatprep.subr.mxu0 0.0
  %484 = vmatpush1.msra.mxu0 %v451
  %485 = vmatprep.subr.mxu0 0.0
  %486 = vmatpush1.msra.mxu0 0.0
  %487 = vmatprep.subr.mxu0 0.0
  %488 = vmatpush1.msra.mxu0 0.0
  %489 = vmatprep.subr.mxu0 0.0
  %490 = vmatpush1.msra.mxu0 0.0
  %491 = vmatprep.subr.mxu0 0.0
  %492 = vmatpush1.msra.mxu0 0.0
  %493 = vmatprep.subr.mxu0 0.0
  %494 = vmatpush1.msra.mxu0 0.0
  %495 = vmatprep.subr.mxu0 0.0
  %496 = vmatpush1.msra.mxu0 0.0
  %497 = vmatprep.subr.mxu0 0.0
  %498 = vmatpush1.msra.mxu0 0.0
  %499 = vmatprep.subr.mxu0 0.0
  %500 = vmatpush1.msra.mxu0 0.0
  %501 = vmatprep.subr.mxu0 0.0
  %502 = vmatpush1.msra.mxu0 0.0
  %503 = vmatprep.subr.mxu0 0.0
  %504 = vmatpush1.msra.mxu0 0.0
  %505 = vmatprep.subr.mxu0 0.0
  %506 = vmatpush1.msra.mxu0 0.0
  %507 = vmatprep.subr.mxu0 0.0
  %508 = vmatpush1.msra.mxu0 0.0
  %509 = vmatprep.subr.mxu0 0.0
  %510 = vmatpush1.msra.mxu0 0.0
  %511 = vmatprep.subr.mxu0 0.0
  %512 = vmatpush1.msra.mxu0 0.0
  %513 = vmatprep.subr.mxu0 0.0
  %514 = vmatpush1.msra.mxu0 0.0
  %515 = vmatprep.subr.mxu0 0.0
  %516 = vmatpush1.msra.mxu0 0.0
  %517 = vmatprep.subr.mxu0 0.0
  %518 = vmatpush1.msra.mxu0 0.0
  %519 = vmatprep.subr.mxu0 0.0
  %520 = vmatpush1.msra.mxu0 0.0
  %521 = vmatprep.subr.mxu0 0.0
  %522 = vmatpush1.msra.mxu0 0.0
  %523 = vmatprep.subr.mxu0 0.0
  %524 = vmatpush1.msra.mxu0 0.0
  %525 = vmatprep.subr.mxu0 0.0
  %526 = vmatpush1.msra.mxu0 0.0
  %527 = vmatprep.subr.mxu0 0.0
  %528 = vmatpush1.msra.mxu0 0.0
  %529 = vmatprep.subr.mxu0 0.0
  %530 = vmatpush1.msra.mxu0 0.0
  %531 = vmatprep.subr.mxu0 0.0
  %532 = vmatpush1.msra.mxu0 0.0
  %533 = vmatprep.subr.mxu0 0.0
  %534 = vmatpush1.msra.mxu0 0.0
  %535 = vmatprep.subr.mxu0 0.0
  %536 = vmatpush1.msra.mxu0 0.0
  %537 = vmatprep.subr.mxu0 0.0
  %538 = vmatpush1.msra.mxu0 0.0
  %539 = vmatprep.subr.mxu0 0.0
  %540 = vmatpush1.msra.mxu0 0.0
  %541 = vmatprep.mubr.f32.mxu0 0.0
  %542 = vmatmul.mubr.f32.gmra.mrb[0].mxu0 %v460
  %v543 = vpop.f32.mrb[0].mxu0
  %v544 = vadd.f32 %v457, %v543
  %v545 = vpop.f32.mrb[0].mxu0
  %546 = vmatprep.mubr.f32.mxu0 0.0
  %547 = vmatmul.mubr.f32.gmra.mrb[0].mxu0 %v463
  %v548 = vpop.f32.mrb[0].mxu0
  %v549 = vadd.f32 %v457, %v548
  %v550 = vpop.f32.mrb[0].mxu0
  %551 = vmatprep.mubr.f32.mxu0 0.0
  %552 = vmatmul.mubr.f32.gmra.mrb[0].mxu0 %v466
  %v553 = vpop.f32.mrb[0].mxu0
  %v554 = vadd.f32 %v457, %v553
  %v555 = vpop.f32.mrb[0].mxu0
  %556 = vmatprep.mubr.f32.mxu0 0.0
  %557 = vmatmul.mubr.f32.gmra.mrb[0].mxu0 %v469
  %v558 = vpop.f32.mrb[0].mxu0
  %v559 = vadd.f32 %v457, %v558
  %v560 = vpop.f32.mrb[0].mxu0
  %561 = vmatprep.mubr.f32.mxu0 0.0
  %562 = vmatmul.mubr.f32.gmra.mrb[0].mxu0 %v472
  %v563 = vpop.f32.mrb[0].mxu0
  %v564 = vadd.f32 %v457, %v563
  %v565 = vpop.f32.mrb[0].mxu0
  %566 = vmatprep.mubr.f32.mxu0 0.0
  %567 = vmatmul.mubr.f32.gmra.mrb[0].mxu0 %v475
  %v568 = vpop.f32.mrb[0].mxu0
  %v569 = vadd.f32 %v457, %v568
  %v570 = vpop.f32.mrb[0].mxu0
  %571 = vdwg.mxu0
  %572 = vst.msk [vmem:[%s8] sm:$0xff] %vm202, %v544
  %573 = vst.msk [vmem:[%s8 + $0x8] sm:$0xff] %vm202, %v549
  %574 = vst.msk [vmem:[%s8 + $0x10] sm:$0xff] %vm202, %v554
  %575 = vst.msk [vmem:[%s8 + $0x18] sm:$0xff] %vm202, %v559
  %576 = vst.msk [vmem:[%s8 + $0x20] sm:$0xff] %vm202, %v564
  %577 = vst.msk [vmem:[%s8 + $0x28] sm:$0xff] %vm202, %v569
  // Predicated region
  $region34: #{baseline_forward.13} parent=0 // pred_check
    _
  $region35: #{baseline_forward.13} parent=0 // pred_check_branch
    %579 = sbr.rel (0) target = $region37
  $region36: #{baseline_forward.13} parent=0 // pred_region
    _
  $region37: #{baseline_forward.13} parent=0 // pred_fallthru
    _
  // Predicated region
  $region38: #{baseline_forward.13} parent=0 // pred_check
    _
  $region39: #{baseline_forward.13} parent=0 // pred_check_branch
    %581 = sbr.rel (0) target = $region41
  $region40: #{baseline_forward.13} parent=0 // pred_region
    _
  $region41: #{baseline_forward.13} parent=0 // pred_fallthru
    _

// kernel: baseline_forward.14
$region0: #{baseline_forward.14}
  #allocation0 [shape = 'u32[]', space=smem, size = 0x4, offset = 0x4, fixed_abs, tag = 'smem constant byte address 0x4 - core index']
  #allocation1 [shape = 'u32[144,128]{1,0:T(1,128)}', space=vmem, size = 0x12000, scoped, tag = 'internal scratch']
  %s0 = inlined_call_operand.vmem [shape: f32[48,16], index: 0, kind: input, shape index: {}]
  %s1 = inlined_call_operand.vmem [shape: f32[48,32], index: 1, kind: input, shape index: {}]
  %s2 = inlined_call_operand.vmem [shape: f32[48,1], index: 2, kind: input, shape index: {}]
  %s3 = inlined_call_operand.vmem [shape: f32[16,32], index: 3, kind: input, shape index: {}]
  %s4 = inlined_call_operand.vmem [shape: f32[32,32], index: 4, kind: input, shape index: {}]
  %s5 = inlined_call_operand.vmem [shape: f32[1,32], index: 5, kind: input, shape index: {}]
  %s6 = inlined_call_operand.vmem [shape: f32[32,16], index: 6, kind: input, shape index: {}]
  %s7 = inlined_call_operand.vmem [shape: f32[1,16], index: 7, kind: input, shape index: {}]
  %s8 = inlined_call_operand.vmem [shape: f32[1,16], index: 8, kind: input, shape index: {}]
  %s9 = inlined_call_operand.vmem [shape: f32[1,16], index: 9, kind: input, shape index: {}]
  %s10 = inlined_call_operand.vmem [shape: f32[48,16], index: 10, kind: output, shape index: {}]
  %s11 = sld [smem:[#allocation0]]
  $region50: #{baseline_forward.14} parent=0
    _
  %s13 = ssub.s32 1, %s11
  %s14 = scalar_select 0, %s13, %s11
  // Predicated region
  $region2: #{baseline_forward.14} parent=0 // pred_check
    _
  $region3: #{baseline_forward.14} parent=0 // pred_check_branch
    %16 = sbr.rel (0) target = $region5
  $region4: #{baseline_forward.14} parent=0 // pred_region
    _
  $region5: #{baseline_forward.14} parent=0 // pred_fallthru
    _
  // Predicated region
  $region6: #{baseline_forward.14} parent=0 // pred_check
    _
  $region7: #{baseline_forward.14} parent=0 // pred_check_branch
    %18 = sbr.rel (0) target = $region9
  $region8: #{baseline_forward.14} parent=0 // pred_region
    _
  $region9: #{baseline_forward.14} parent=0 // pred_fallthru
    _
  // Predicated region
  $region10: #{baseline_forward.14} parent=0 // pred_check
    _
  $region11: #{baseline_forward.14} parent=0 // pred_check_branch
    %20 = sbr.rel (0) target = $region13
  $region12: #{baseline_forward.14} parent=0 // pred_region
    _
  $region13: #{baseline_forward.14} parent=0 // pred_fallthru
    _
  // Predicated region
  $region14: #{baseline_forward.14} parent=0 // pred_check
    _
  $region15: #{baseline_forward.14} parent=0 // pred_check_branch
    %22 = sbr.rel (0) target = $region17
  $region16: #{baseline_forward.14} parent=0 // pred_region
    _
  $region17: #{baseline_forward.14} parent=0 // pred_fallthru
    _
  // Predicated region
  $region18: #{baseline_forward.14} parent=0 // pred_check
    _
  $region19: #{baseline_forward.14} parent=0 // pred_check_branch
    %24 = sbr.rel (0) target = $region21
  $region20: #{baseline_forward.14} parent=0 // pred_region
    _
  $region21: #{baseline_forward.14} parent=0 // pred_fallthru
    _
  // Predicated region
  $region22: #{baseline_forward.14} parent=0 // pred_check
    _
  $region23: #{baseline_forward.14} parent=0 // pred_check_branch
    %26 = sbr.rel (0) target = $region25
  $region24: #{baseline_forward.14} parent=0 // pred_region
    _
  $region25: #{baseline_forward.14} parent=0 // pred_fallthru
    _
  // Predicated region
  $region26: #{baseline_forward.14} parent=0 // pred_check
    _
  $region27: #{baseline_forward.14} parent=0 // pred_check_branch
    %28 = sbr.rel (0) target = $region29
  $region28: #{baseline_forward.14} parent=0 // pred_region
    _
  $region29: #{baseline_forward.14} parent=0 // pred_fallthru
    _
  // Predicated region
  $region30: #{baseline_forward.14} parent=0 // pred_check
    _
  $region31: #{baseline_forward.14} parent=0 // pred_check_branch
    %30 = sbr.rel (0) target = $region33
  $region32: #{baseline_forward.14} parent=0 // pred_region
    _
  $region33: #{baseline_forward.14} parent=0 // pred_fallthru
    _
  // Predicated region
  $region34: #{baseline_forward.14} parent=0 // pred_check
    _
  $region35: #{baseline_forward.14} parent=0 // pred_check_branch
    %32 = sbr.rel (0) target = $region37
  $region36: #{baseline_forward.14} parent=0 // pred_region
    _
  $region37: #{baseline_forward.14} parent=0 // pred_fallthru
    _
  // Predicated region
  $region38: #{baseline_forward.14} parent=0 // pred_check
    _
  $region39: #{baseline_forward.14} parent=0 // pred_check_branch
    %34 = sbr.rel (0) target = $region41
  $region40: #{baseline_forward.14} parent=0 // pred_region
    _
  $region41: #{baseline_forward.14} parent=0 // pred_fallthru
    _
  %v35 = vld [vmem:[%s0] sm:$0xff]
  %v36 = vld [vmem:[%s0 + $0x8] sm:$0xff]
  %v37 = vld [vmem:[%s0 + $0x10] sm:$0xff]
  %v38 = vld [vmem:[%s0 + $0x18] sm:$0xff]
  %v39 = vld [vmem:[%s0 + $0x20] sm:$0xff]
  %v40 = vld [vmem:[%s0 + $0x28] sm:$0xff]
  %v41 = vld [vmem:[%s2] sm:$0xff]
  %v42 = vld [vmem:[%s2 + $0x8] sm:$0xff]
  %v43 = vld [vmem:[%s2 + $0x10] sm:$0xff]
  %v44 = vld [vmem:[%s2 + $0x18] sm:$0xff]
  %v45 = vld [vmem:[%s2 + $0x20] sm:$0xff]
  %v46 = vld [vmem:[%s2 + $0x28] sm:$0xff]
  %v47 = vmul.f32 %v41, 0.25
  %v48 = vmul.f32 %v42, 0.25
  %v49 = vmul.f32 %v43, 0.25
  %v50 = vmul.f32 %v44, 0.25
  %v51 = vmul.f32 %v45, 0.25
  %v52 = vmul.f32 %v46, 0.25
  %v53 = vmul.f32 %v47, %v47
  %v54 = vmul.f32 %v48, %v48
  %v55 = vmul.f32 %v49, %v49
  %v56 = vmul.f32 %v50, %v50
  %v57 = vmul.f32 %v51, %v51
  %v58 = vmul.f32 %v52, %v52
  %v59 = vmul.f32 %v53, %v53
  %v60 = vmul.f32 %v54, %v54
  %v61 = vmul.f32 %v55, %v55
  %v62 = vmul.f32 %v56, %v56
  %v63 = vmul.f32 %v57, %v57
  %v64 = vmul.f32 %v58, %v58
  %v65 = vmul.f32 %v53, %v59
  %v66 = vmul.f32 %v54, %v60
  %v67 = vmul.f32 %v55, %v61
  %v68 = vmul.f32 %v56, %v62
  %v69 = vmul.f32 %v57, %v63
  %v70 = vmul.f32 %v58, %v64
  %v71 = vmul.f32 %v65, %v47
  %v72 = vmul.f32 %v66, %v48
  %v73 = vmul.f32 %v67, %v49
  %v74 = vmul.f32 %v68, %v50
  %v75 = vmul.f32 %v69, %v51
  %v76 = vmul.f32 %v70, %v52
  %v77 = vmul.f32 %v71, %v47
  %v78 = vmul.f32 %v72, %v48
  %v79 = vmul.f32 %v73, %v49
  %v80 = vmul.f32 %v74, %v50
  %v81 = vmul.f32 %v75, %v51
  %v82 = vmul.f32 %v76, %v52
  %v83 = vmul.f32 %v65, 28.0
  %v84 = vmul.f32 %v66, 28.0
  %v85 = vmul.f32 %v67, 28.0
  %v86 = vmul.f32 %v68, 28.0
  %v87 = vmul.f32 %v69, 28.0
  %v88 = vmul.f32 %v70, 28.0
  %v89 = vsub.f32 1.0, %v83
  %v90 = vsub.f32 1.0, %v84
  %v91 = vsub.f32 1.0, %v85
  %v92 = vsub.f32 1.0, %v86
  %v93 = vsub.f32 1.0, %v87
  %v94 = vsub.f32 1.0, %v88
  %v95 = vmul.f32 %v71, 48.0
  %v96 = vmul.f32 %v72, 48.0
  %v97 = vmul.f32 %v73, 48.0
  %v98 = vmul.f32 %v74, 48.0
  %v99 = vmul.f32 %v75, 48.0
  %v100 = vmul.f32 %v76, 48.0
  %v101 = vadd.f32 %v89, %v95
  %v102 = vadd.f32 %v90, %v96
  %v103 = vadd.f32 %v91, %v97
  %v104 = vadd.f32 %v92, %v98
  %v105 = vadd.f32 %v93, %v99
  %v106 = vadd.f32 %v94, %v100
  %v107 = vmul.f32 %v77, 21.0
  %v108 = vmul.f32 %v78, 21.0
  %v109 = vmul.f32 %v79, 21.0
  %v110 = vmul.f32 %v80, 21.0
  %v111 = vmul.f32 %v81, 21.0
  %v112 = vmul.f32 %v82, 21.0
  %v113 = vsub.f32 %v101, %v107
  %v114 = vsub.f32 %v102, %v108
  %v115 = vsub.f32 %v103, %v109
  %v116 = vsub.f32 %v104, %v110
  %v117 = vsub.f32 %v105, %v111
  %v118 = vsub.f32 %v106, %v112
  %vm119 = vcmp.lt.f32.partialorder %v47, 1.0
  %vm120 = vcmp.lt.f32.partialorder %v48, 1.0
  %vm121 = vcmp.lt.f32.partialorder %v49, 1.0
  %vm122 = vcmp.lt.f32.partialorder %v50, 1.0
  %vm123 = vcmp.lt.f32.partialorder %v51, 1.0
  %vm124 = vcmp.lt.f32.partialorder %v52, 1.0
  %v125 = vsel %vm119, %v113, 0.0
  %v126 = vsel %vm120, %v114, 0.0
  %v127 = vsel %vm121, %v115, 0.0
  %v128 = vsel %vm122, %v116, 0.0
  %v129 = vsel %vm123, %v117, 0.0
  %v130 = vsel %vm124, %v118, 0.0
  %v131 = vld [vmem:[%s3] sm:$0xff]
  %v132 = vld [vmem:[%s3 + $0x8] sm:$0xff]
  %v133 = vld [vmem:[%s1] sm:$0xff]
  %v134 = vld [vmem:[%s1 + $0x8] sm:$0xff]
  %v135 = vld [vmem:[%s1 + $0x10] sm:$0xff]
  %v136 = vld [vmem:[%s1 + $0x18] sm:$0xff]
  %v137 = vld [vmem:[%s1 + $0x20] sm:$0xff]
  %v138 = vld [vmem:[%s1 + $0x28] sm:$0xff]
  %v139 = vld [vmem:[%s4] sm:$0xff]
  %v140 = vld [vmem:[%s4 + $0x8] sm:$0xff]
  %v141 = vld [vmem:[%s4 + $0x10] sm:$0xff]
  %v142 = vld [vmem:[%s4 + $0x18] sm:$0xff]
  %vm143 = vcmask 261120
  %v145 = vsel %vm143, %v133, 0
  %v148 = vsel %vm143, %v134, 0
  %v151 = vsel %vm143, %v135, 0
  %v154 = vsel %vm143, %v136, 0
  %v157 = vsel %vm143, %v137, 0
  %v160 = vsel %vm143, %v138, 0
  %162 = vmatprep.subr.mxu0 0.0
  %163 = vmatpush1.msra.mxu0 %v139
  %164 = vmatprep.subr.mxu0 0.0
  %165 = vmatpush1.msra.mxu0 %v140
  %166 = vmatprep.subr.mxu0 0.0
  %167 = vmatpush1.msra.mxu0 %v141
  %168 = vmatprep.subr.mxu0 0.0
  %169 = vmatpush1.msra.mxu0 %v142
  %170 = vmatprep.subr.mxu0 0.0
  %171 = vmatpush1.msra.mxu0 0.0
  %172 = vmatprep.subr.mxu0 0.0
  %173 = vmatpush1.msra.mxu0 0.0
  %174 = vmatprep.subr.mxu0 0.0
  %175 = vmatpush1.msra.mxu0 0.0
  %176 = vmatprep.subr.mxu0 0.0
  %177 = vmatpush1.msra.mxu0 0.0
  %178 = vmatprep.subr.mxu0 0.0
  %179 = vmatpush1.msra.mxu0 0.0
  %180 = vmatprep.subr.mxu0 0.0
  %181 = vmatpush1.msra.mxu0 0.0
  %182 = vmatprep.subr.mxu0 0.0
  %183 = vmatpush1.msra.mxu0 0.0
  %184 = vmatprep.subr.mxu0 0.0
  %185 = vmatpush1.msra.mxu0 0.0
  %186 = vmatprep.subr.mxu0 0.0
  %187 = vmatpush1.msra.mxu0 0.0
  %188 = vmatprep.subr.mxu0 0.0
  %189 = vmatpush1.msra.mxu0 0.0
  %190 = vmatprep.subr.mxu0 0.0
  %191 = vmatpush1.msra.mxu0 0.0
  %192 = vmatprep.subr.mxu0 0.0
  %193 = vmatpush1.msra.mxu0 0.0
  %194 = vmatprep.subr.mxu0 0.0
  %195 = vmatpush1.msra.mxu0 0.0
  %196 = vmatprep.subr.mxu0 0.0
  %197 = vmatpush1.msra.mxu0 0.0
  %198 = vmatprep.subr.mxu0 0.0
  %199 = vmatpush1.msra.mxu0 0.0
  %200 = vmatprep.subr.mxu0 0.0
  %201 = vmatpush1.msra.mxu0 0.0
  %202 = vmatprep.subr.mxu0 0.0
  %203 = vmatpush1.msra.mxu0 0.0
  %204 = vmatprep.subr.mxu0 0.0
  %205 = vmatpush1.msra.mxu0 0.0
  %206 = vmatprep.subr.mxu0 0.0
  %207 = vmatpush1.msra.mxu0 0.0
  %208 = vmatprep.subr.mxu0 0.0
  %209 = vmatpush1.msra.mxu0 0.0
  %210 = vmatprep.subr.mxu0 0.0
  %211 = vmatpush1.msra.mxu0 0.0
  %212 = vmatprep.subr.mxu0 0.0
  %213 = vmatpush1.msra.mxu0 0.0
  %214 = vmatprep.subr.mxu0 0.0
  %215 = vmatpush1.msra.mxu0 0.0
  %216 = vmatprep.subr.mxu0 0.0
  %217 = vmatpush1.msra.mxu0 0.0
  %218 = vmatprep.subr.mxu0 0.0
  %219 = vmatpush1.msra.mxu0 0.0
  %220 = vmatprep.subr.mxu0 0.0
  %221 = vmatpush1.msra.mxu0 0.0
  %222 = vmatprep.subr.mxu0 0.0
  %223 = vmatpush1.msra.mxu0 0.0
  %224 = vmatprep.subr.mxu0 0.0
  %225 = vmatpush1.msra.mxu0 0.0
  %226 = vmatprep.mubr.f32.mxu0 0.0
  %227 = vmatmul.mubr.f32.gmra.mrb[0].mxu0 %v145
  %v228 = vpop.f32.mrb[0].mxu0
  %v229 = vadd.f32 0.0, %v228
  %v230 = vpop.f32.mrb[0].mxu0
  %231 = vmatprep.mubr.f32.mxu0 0.0
  %232 = vmatmul.mubr.f32.gmra.mrb[0].mxu0 %v148
  %v233 = vpop.f32.mrb[0].mxu0
  %v234 = vadd.f32 0.0, %v233
  %v235 = vpop.f32.mrb[0].mxu0
  %236 = vmatprep.mubr.f32.mxu0 0.0
  %237 = vmatmul.mubr.f32.gmra.mrb[0].mxu0 %v151
  %v238 = vpop.f32.mrb[0].mxu0
  %v239 = vadd.f32 0.0, %v238
  %v240 = vpop.f32.mrb[0].mxu0
  %241 = vmatprep.mubr.f32.mxu0 0.0
  %242 = vmatmul.mubr.f32.gmra.mrb[0].mxu0 %v154
  %v243 = vpop.f32.mrb[0].mxu0
  %v244 = vadd.f32 0.0, %v243
  %v245 = vpop.f32.mrb[0].mxu0
  %246 = vmatprep.mubr.f32.mxu0 0.0
  %247 = vmatmul.mubr.f32.gmra.mrb[0].mxu0 %v157
  %v248 = vpop.f32.mrb[0].mxu0
  %v249 = vadd.f32 0.0, %v248
  %v250 = vpop.f32.mrb[0].mxu0
  %251 = vmatprep.mubr.f32.mxu0 0.0
  %252 = vmatmul.mubr.f32.gmra.mrb[0].mxu0 %v160
  %v253 = vpop.f32.mrb[0].mxu0
  %v254 = vadd.f32 0.0, %v253
  %v255 = vpop.f32.mrb[0].mxu0
  %256 = vdwg.mxu0
  %vm257 = vcmask 130048
  %v259 = vsel %vm257, %v35, 0
  %v262 = vsel %vm257, %v36, 0
  %v265 = vsel %vm257, %v37, 0
  %v268 = vsel %vm257, %v38, 0
  %v271 = vsel %vm257, %v39, 0
  %v274 = vsel %vm257, %v40, 0
  %276 = vmatprep.subr.mxu0 0.0
  %277 = vmatpush1.msra.mxu0 %v131
  %278 = vmatprep.subr.mxu0 0.0
  %279 = vmatpush1.msra.mxu0 %v132
  %280 = vmatprep.subr.mxu0 0.0
  %281 = vmatpush1.msra.mxu0 0.0
  %282 = vmatprep.subr.mxu0 0.0
  %283 = vmatpush1.msra.mxu0 0.0
  %284 = vmatprep.subr.mxu0 0.0
  %285 = vmatpush1.msra.mxu0 0.0
  %286 = vmatprep.subr.mxu0 0.0
  %287 = vmatpush1.msra.mxu0 0.0
  %288 = vmatprep.subr.mxu0 0.0
  %289 = vmatpush1.msra.mxu0 0.0
  %290 = vmatprep.subr.mxu0 0.0
  %291 = vmatpush1.msra.mxu0 0.0
  %292 = vmatprep.subr.mxu0 0.0
  %293 = vmatpush1.msra.mxu0 0.0
  %294 = vmatprep.subr.mxu0 0.0
  %295 = vmatpush1.msra.mxu0 0.0
  %296 = vmatprep.subr.mxu0 0.0
  %297 = vmatpush1.msra.mxu0 0.0
  %298 = vmatprep.subr.mxu0 0.0
  %299 = vmatpush1.msra.mxu0 0.0
  %300 = vmatprep.subr.mxu0 0.0
  %301 = vmatpush1.msra.mxu0 0.0
  %302 = vmatprep.subr.mxu0 0.0
  %303 = vmatpush1.msra.mxu0 0.0
  %304 = vmatprep.subr.mxu0 0.0
  %305 = vmatpush1.msra.mxu0 0.0
  %306 = vmatprep.subr.mxu0 0.0
  %307 = vmatpush1.msra.mxu0 0.0
  %308 = vmatprep.subr.mxu0 0.0
  %309 = vmatpush1.msra.mxu0 0.0
  %310 = vmatprep.subr.mxu0 0.0
  %311 = vmatpush1.msra.mxu0 0.0
  %312 = vmatprep.subr.mxu0 0.0
  %313 = vmatpush1.msra.mxu0 0.0
  %314 = vmatprep.subr.mxu0 0.0
  %315 = vmatpush1.msra.mxu0 0.0
  %316 = vmatprep.subr.mxu0 0.0
  %317 = vmatpush1.msra.mxu0 0.0
  %318 = vmatprep.subr.mxu0 0.0
  %319 = vmatpush1.msra.mxu0 0.0
  %320 = vmatprep.subr.mxu0 0.0
  %321 = vmatpush1.msra.mxu0 0.0
  %322 = vmatprep.subr.mxu0 0.0
  %323 = vmatpush1.msra.mxu0 0.0
  %324 = vmatprep.subr.mxu0 0.0
  %325 = vmatpush1.msra.mxu0 0.0
  %326 = vmatprep.subr.mxu0 0.0
  %327 = vmatpush1.msra.mxu0 0.0
  %328 = vmatprep.subr.mxu0 0.0
  %329 = vmatpush1.msra.mxu0 0.0
  %330 = vmatprep.subr.mxu0 0.0
  %331 = vmatpush1.msra.mxu0 0.0
  %332 = vmatprep.subr.mxu0 0.0
  %333 = vmatpush1.msra.mxu0 0.0
  %334 = vmatprep.subr.mxu0 0.0
  %335 = vmatpush1.msra.mxu0 0.0
  %336 = vmatprep.subr.mxu0 0.0
  %337 = vmatpush1.msra.mxu0 0.0
  %338 = vmatprep.subr.mxu0 0.0
  %339 = vmatpush1.msra.mxu0 0.0
  %340 = vmatprep.mubr.f32.mxu0 0.0
  %341 = vmatmul.mubr.f32.gmra.mrb[0].mxu0 %v259
  %v342 = vpop.f32.mrb[0].mxu0
  %v343 = vadd.f32 %v229, %v342
  %v344 = vpop.f32.mrb[0].mxu0
  %345 = vmatprep.mubr.f32.mxu0 0.0
  %346 = vmatmul.mubr.f32.gmra.mrb[0].mxu0 %v262
  %v347 = vpop.f32.mrb[0].mxu0
  %v348 = vadd.f32 %v234, %v347
  %v349 = vpop.f32.mrb[0].mxu0
  %350 = vmatprep.mubr.f32.mxu0 0.0
  %351 = vmatmul.mubr.f32.gmra.mrb[0].mxu0 %v265
  %v352 = vpop.f32.mrb[0].mxu0
  %v353 = vadd.f32 %v239, %v352
  %v354 = vpop.f32.mrb[0].mxu0
  %355 = vmatprep.mubr.f32.mxu0 0.0
  %356 = vmatmul.mubr.f32.gmra.mrb[0].mxu0 %v268
  %v357 = vpop.f32.mrb[0].mxu0
  %v358 = vadd.f32 %v244, %v357
  %v359 = vpop.f32.mrb[0].mxu0
  %360 = vmatprep.mubr.f32.mxu0 0.0
  %361 = vmatmul.mubr.f32.gmra.mrb[0].mxu0 %v271
  %v362 = vpop.f32.mrb[0].mxu0
  %v363 = vadd.f32 %v249, %v362
  %v364 = vpop.f32.mrb[0].mxu0
  %365 = vmatprep.mubr.f32.mxu0 0.0
  %366 = vmatmul.mubr.f32.gmra.mrb[0].mxu0 %v274
  %v367 = vpop.f32.mrb[0].mxu0
  %v368 = vadd.f32 %v254, %v367
  %v369 = vpop.f32.mrb[0].mxu0
  %370 = vdwg.mxu0
  %v371 = vld [vmem:[%s5] sm:$0x1]
  %v373 = vlaneseq
  %v374 = vshrl.u32 %v373, 7
  %v375 = vsub.s32 0, %v374
  %v376 = vrot.slane %v371, %v375
  %v378 = vadd.f32 %v343, %v376
  %v379 = vadd.f32 %v348, %v376
  %v380 = vadd.f32 %v353, %v376
  %v381 = vadd.f32 %v358, %v376
  %v382 = vadd.f32 %v363, %v376
  %v383 = vadd.f32 %v368, %v376
  %v384 = vtanh.pop %v378
  %v385 = vtanh.pop %v379
  %v386 = vtanh.pop %v380
  %v387 = vtanh.pop %v381
  %v388 = vtanh.pop %v382
  %v389 = vtanh.pop %v383
  %v390 = vld [vmem:[%s6] sm:$0xff]
  %v391 = vld [vmem:[%s6 + $0x8] sm:$0xff]
  %v392 = vld [vmem:[%s6 + $0x10] sm:$0xff]
  %v393 = vld [vmem:[%s6 + $0x18] sm:$0xff]
  %v394 = vld [vmem:[%s7] sm:$0x1]
  %v396 = vlaneseq
  %v397 = vshrl.u32 %v396, 7
  %v398 = vsub.s32 0, %v397
  %v399 = vrot.slane %v394, %v398
  %v402 = vsel %vm143, %v384, 0
  %v405 = vsel %vm143, %v385, 0
  %v408 = vsel %vm143, %v386, 0
  %v411 = vsel %vm143, %v387, 0
  %v414 = vsel %vm143, %v388, 0
  %v417 = vsel %vm143, %v389, 0
  %419 = vmatprep.subr.mxu0 0.0
  %420 = vmatpush1.msra.mxu0 %v390
  %421 = vmatprep.subr.mxu0 0.0
  %422 = vmatpush1.msra.mxu0 %v391
  %423 = vmatprep.subr.mxu0 0.0
  %424 = vmatpush1.msra.mxu0 %v392
  %425 = vmatprep.subr.mxu0 0.0
  %426 = vmatpush1.msra.mxu0 %v393
  %427 = vmatprep.subr.mxu0 0.0
  %428 = vmatpush1.msra.mxu0 0.0
  %429 = vmatprep.subr.mxu0 0.0
  %430 = vmatpush1.msra.mxu0 0.0
  %431 = vmatprep.subr.mxu0 0.0
  %432 = vmatpush1.msra.mxu0 0.0
  %433 = vmatprep.subr.mxu0 0.0
  %434 = vmatpush1.msra.mxu0 0.0
  %435 = vmatprep.subr.mxu0 0.0
  %436 = vmatpush1.msra.mxu0 0.0
  %437 = vmatprep.subr.mxu0 0.0
  %438 = vmatpush1.msra.mxu0 0.0
  %439 = vmatprep.subr.mxu0 0.0
  %440 = vmatpush1.msra.mxu0 0.0
  %441 = vmatprep.subr.mxu0 0.0
  %442 = vmatpush1.msra.mxu0 0.0
  %443 = vmatprep.subr.mxu0 0.0
  %444 = vmatpush1.msra.mxu0 0.0
  %445 = vmatprep.subr.mxu0 0.0
  %446 = vmatpush1.msra.mxu0 0.0
  %447 = vmatprep.subr.mxu0 0.0
  %448 = vmatpush1.msra.mxu0 0.0
  %449 = vmatprep.subr.mxu0 0.0
  %450 = vmatpush1.msra.mxu0 0.0
  %451 = vmatprep.subr.mxu0 0.0
  %452 = vmatpush1.msra.mxu0 0.0
  %453 = vmatprep.subr.mxu0 0.0
  %454 = vmatpush1.msra.mxu0 0.0
  %455 = vmatprep.subr.mxu0 0.0
  %456 = vmatpush1.msra.mxu0 0.0
  %457 = vmatprep.subr.mxu0 0.0
  %458 = vmatpush1.msra.mxu0 0.0
  %459 = vmatprep.subr.mxu0 0.0
  %460 = vmatpush1.msra.mxu0 0.0
  %461 = vmatprep.subr.mxu0 0.0
  %462 = vmatpush1.msra.mxu0 0.0
  %463 = vmatprep.subr.mxu0 0.0
  %464 = vmatpush1.msra.mxu0 0.0
  %465 = vmatprep.subr.mxu0 0.0
  %466 = vmatpush1.msra.mxu0 0.0
  %467 = vmatprep.subr.mxu0 0.0
  %468 = vmatpush1.msra.mxu0 0.0
  %469 = vmatprep.subr.mxu0 0.0
  %470 = vmatpush1.msra.mxu0 0.0
  %471 = vmatprep.subr.mxu0 0.0
  %472 = vmatpush1.msra.mxu0 0.0
  %473 = vmatprep.subr.mxu0 0.0
  %474 = vmatpush1.msra.mxu0 0.0
  %475 = vmatprep.subr.mxu0 0.0
  %476 = vmatpush1.msra.mxu0 0.0
  %477 = vmatprep.subr.mxu0 0.0
  %478 = vmatpush1.msra.mxu0 0.0
  %479 = vmatprep.subr.mxu0 0.0
  %480 = vmatpush1.msra.mxu0 0.0
  %481 = vmatprep.subr.mxu0 0.0
  %482 = vmatpush1.msra.mxu0 0.0
  %483 = vmatprep.mubr.f32.mxu0 0.0
  %484 = vmatmul.mubr.f32.gmra.mrb[0].mxu0 %v402
  %v485 = vpop.f32.mrb[0].mxu0
  %v486 = vadd.f32 %v399, %v485
  %v487 = vpop.f32.mrb[0].mxu0
  %488 = vmatprep.mubr.f32.mxu0 0.0
  %489 = vmatmul.mubr.f32.gmra.mrb[0].mxu0 %v405
  %v490 = vpop.f32.mrb[0].mxu0
  %v491 = vadd.f32 %v399, %v490
  %v492 = vpop.f32.mrb[0].mxu0
  %493 = vmatprep.mubr.f32.mxu0 0.0
  %494 = vmatmul.mubr.f32.gmra.mrb[0].mxu0 %v408
  %v495 = vpop.f32.mrb[0].mxu0
  %v496 = vadd.f32 %v399, %v495
  %v497 = vpop.f32.mrb[0].mxu0
  %498 = vmatprep.mubr.f32.mxu0 0.0
  %499 = vmatmul.mubr.f32.gmra.mrb[0].mxu0 %v411
  %v500 = vpop.f32.mrb[0].mxu0
  %v501 = vadd.f32 %v399, %v500
  %v502 = vpop.f32.mrb[0].mxu0
  %503 = vmatprep.mubr.f32.mxu0 0.0
  %504 = vmatmul.mubr.f32.gmra.mrb[0].mxu0 %v414
  %v505 = vpop.f32.mrb[0].mxu0
  %v506 = vadd.f32 %v399, %v505
  %v507 = vpop.f32.mrb[0].mxu0
  %508 = vmatprep.mubr.f32.mxu0 0.0
  %509 = vmatmul.mubr.f32.gmra.mrb[0].mxu0 %v417
  %v510 = vpop.f32.mrb[0].mxu0
  %v511 = vadd.f32 %v399, %v510
  %v512 = vpop.f32.mrb[0].mxu0
  %513 = vdwg.mxu0
  %v514 = vld [vmem:[%s8] sm:$0x1]
  %v515 = vld [vmem:[%s9] sm:$0x1]
  %v516 = vsel %vm257, %v486, 0.0
  %517 = vadd.xlane.f32.xlu0 %v516
  %v518 = vpop.xlane.xlu0 %517
  %v519 = vsel %vm257, %v491, 0.0
  %520 = vadd.xlane.f32.xlu0 %v519
  %v521 = vpop.xlane.xlu0 %520
  %v522 = vsel %vm257, %v496, 0.0
  %523 = vadd.xlane.f32.xlu0 %v522
  %v524 = vpop.xlane.xlu0 %523
  %v525 = vsel %vm257, %v501, 0.0
  %526 = vadd.xlane.f32.xlu0 %v525
  %v527 = vpop.xlane.xlu0 %526
  %v528 = vsel %vm257, %v506, 0.0
  %529 = vadd.xlane.f32.xlu0 %v528
  %v530 = vpop.xlane.xlu0 %529
  %v531 = vsel %vm257, %v511, 0.0
  %532 = vadd.xlane.f32.xlu0 %v531
  %v533 = vpop.xlane.xlu0 %532
  %v534 = vrcp.pop 16.0
  %v535 = vmul.f32 %v518, %v534
  %v536 = vmul.f32 %v521, %v534
  %v537 = vmul.f32 %v524, %v534
  %v538 = vmul.f32 %v527, %v534
  %v539 = vmul.f32 %v530, %v534
  %v540 = vmul.f32 %v533, %v534
  %v541 = vsub.f32 %v486, %v535
  %v542 = vsub.f32 %v491, %v536
  %v543 = vsub.f32 %v496, %v537
  %v544 = vsub.f32 %v501, %v538
  %v545 = vsub.f32 %v506, %v539
  %v546 = vsub.f32 %v511, %v540
  %v547 = vmul.f32 %v541, %v541
  %v548 = vmul.f32 %v542, %v542
  %v549 = vmul.f32 %v543, %v543
  %v550 = vmul.f32 %v544, %v544
  %v551 = vmul.f32 %v545, %v545
  %v552 = vmul.f32 %v546, %v546
  %v553 = vsel %vm257, %v547, 0.0
  %554 = vadd.xlane.f32.xlu0 %v553
  %v555 = vpop.xlane.xlu0 %554
  %v556 = vsel %vm257, %v548, 0.0
  %557 = vadd.xlane.f32.xlu0 %v556
  %v558 = vpop.xlane.xlu0 %557
  %v559 = vsel %vm257, %v549, 0.0
  %560 = vadd.xlane.f32.xlu0 %v559
  %v561 = vpop.xlane.xlu0 %560
  %v562 = vsel %vm257, %v550, 0.0
  %563 = vadd.xlane.f32.xlu0 %v562
  %v564 = vpop.xlane.xlu0 %563
  %v565 = vsel %vm257, %v551, 0.0
  %566 = vadd.xlane.f32.xlu0 %v565
  %v567 = vpop.xlane.xlu0 %566
  %v568 = vsel %vm257, %v552, 0.0
  %569 = vadd.xlane.f32.xlu0 %v568
  %v570 = vpop.xlane.xlu0 %569
  %v571 = vmul.f32 %v555, %v534
  %v572 = vmul.f32 %v558, %v534
  %v573 = vmul.f32 %v561, %v534
  %v574 = vmul.f32 %v564, %v534
  %v575 = vmul.f32 %v567, %v534
  %v576 = vmul.f32 %v570, %v534
  %v577 = vadd.f32 %v571, 1e-05
  %v578 = vadd.f32 %v572, 1e-05
  %v579 = vadd.f32 %v573, 1e-05
  %v580 = vadd.f32 %v574, 1e-05
  %v581 = vadd.f32 %v575, 1e-05
  %v582 = vadd.f32 %v576, 1e-05
  %v583 = vrsqrt.pop %v577
  %v584 = vrsqrt.pop %v578
  %v585 = vrsqrt.pop %v579
  %v586 = vrsqrt.pop %v580
  %v587 = vrsqrt.pop %v581
  %v588 = vrsqrt.pop %v582
  %v589 = vmul.f32 %v541, %v583
  %v590 = vmul.f32 %v542, %v584
  %v591 = vmul.f32 %v543, %v585
  %v592 = vmul.f32 %v544, %v586
  %v593 = vmul.f32 %v545, %v587
  %v594 = vmul.f32 %v546, %v588
  %v596 = vlaneseq
  %v597 = vshrl.u32 %v596, 7
  %v598 = vsub.s32 0, %v597
  %v599 = vrot.slane %v514, %v598
  %v601 = vmul.f32 %v589, %v599
  %v602 = vmul.f32 %v590, %v599
  %v603 = vmul.f32 %v591, %v599
  %v604 = vmul.f32 %v592, %v599
  %v605 = vmul.f32 %v593, %v599
  %v606 = vmul.f32 %v594, %v599
  %v608 = vlaneseq
  %v609 = vshrl.u32 %v608, 7
  %v610 = vsub.s32 0, %v609
  %v611 = vrot.slane %v515, %v610
  %v613 = vadd.f32 %v601, %v611
  %v614 = vadd.f32 %v602, %v611
  %v615 = vadd.f32 %v603, %v611
  %v616 = vadd.f32 %v604, %v611
  %v617 = vadd.f32 %v605, %v611
  %v618 = vadd.f32 %v606, %v611
  %v619 = vmul.f32 %v35, 0.8944272
  %v620 = vmul.f32 %v36, 0.8944272
  %v621 = vmul.f32 %v37, 0.8944272
  %v622 = vmul.f32 %v38, 0.8944272
  %v623 = vmul.f32 %v39, 0.8944272
  %v624 = vmul.f32 %v40, 0.8944272
  %v625 = vmul.f32 %v125, 0.4472
  %v626 = vmul.f32 %v126, 0.4472
  %v627 = vmul.f32 %v127, 0.4472
  %v628 = vmul.f32 %v128, 0.4472
  %v629 = vmul.f32 %v129, 0.4472
  %v630 = vmul.f32 %v130, 0.4472
  %632 = vset.pattern.permute.xlu0 0
  %633 = vperm.xlu0 %632, %v625
  %v634 = vpop.permute.xlu0 %633
  %637 = vset.pattern.permute.xlu0 0
  %638 = vperm.xlu0 %637, %v626
  %v639 = vpop.permute.xlu0 %638
  %642 = vset.pattern.permute.xlu0 0
  %643 = vperm.xlu0 %642, %v627
  %v644 = vpop.permute.xlu0 %643
  %647 = vset.pattern.permute.xlu0 0
  %648 = vperm.xlu0 %647, %v628
  %v649 = vpop.permute.xlu0 %648
  %652 = vset.pattern.permute.xlu0 0
  %653 = vperm.xlu0 %652, %v629
  %v654 = vpop.permute.xlu0 %653
  %657 = vset.pattern.permute.xlu0 0
  %658 = vperm.xlu0 %657, %v630
  %v659 = vpop.permute.xlu0 %658
  %v661 = vmul.f32 %v634, %v613
  %v662 = vmul.f32 %v639, %v614
  %v663 = vmul.f32 %v644, %v615
  %v664 = vmul.f32 %v649, %v616
  %v665 = vmul.f32 %v654, %v617
  %v666 = vmul.f32 %v659, %v618
  %v667 = vadd.f32 %v619, %v661
  %v668 = vadd.f32 %v620, %v662
  %v669 = vadd.f32 %v621, %v663
  %v670 = vadd.f32 %v622, %v664
  %v671 = vadd.f32 %v623, %v665
  %v672 = vadd.f32 %v624, %v666
  %673 = vst.msk [vmem:[%s10] sm:$0xff] %vm257, %v667
  %674 = vst.msk [vmem:[%s10 + $0x8] sm:$0xff] %vm257, %v668
  %675 = vst.msk [vmem:[%s10 + $0x10] sm:$0xff] %vm257, %v669
  %676 = vst.msk [vmem:[%s10 + $0x18] sm:$0xff] %vm257, %v670
  %677 = vst.msk [vmem:[%s10 + $0x20] sm:$0xff] %vm257, %v671
  %678 = vst.msk [vmem:[%s10 + $0x28] sm:$0xff] %vm257, %v672
  // Predicated region
  $region42: #{baseline_forward.14} parent=0 // pred_check
    _
  $region43: #{baseline_forward.14} parent=0 // pred_check_branch
    %680 = sbr.rel (0) target = $region45
  $region44: #{baseline_forward.14} parent=0 // pred_region
    _
  $region45: #{baseline_forward.14} parent=0 // pred_fallthru
    _
  // Predicated region
  $region46: #{baseline_forward.14} parent=0 // pred_check
    _
  $region47: #{baseline_forward.14} parent=0 // pred_check_branch
    %682 = sbr.rel (0) target = $region49
  $region48: #{baseline_forward.14} parent=0 // pred_region
    _
  $region49: #{baseline_forward.14} parent=0 // pred_fallthru
    _

</llo_original>
